<compile_context>
chip_gen: v6e
topology: v6e:2x2x1
jax: 0.10.0
libtpu: 0.0.40
codegen_flags: <defaults>
</compile_context>

<pallas_src>
import functools

import numpy as np
import jax
import jax.numpy as jnp
from jax.experimental import pallas as pl
from jax.experimental.pallas import tpu as pltpu


def _round_up(v, m):
    return (v + m - 1) // m * m


# ----------------------------------------------------------------------------
# Pallas kernel 1: tiled matmul + bias (+ ReLU)
# ----------------------------------------------------------------------------
def _mm_bias_kernel(x_ref, w_ref, b_ref, o_ref, *, relu):
    # x: (TM, K) bf16/f32, w: (K, N), b: (1, N) f32 -> o: (TM, N) f32
    y = jnp.dot(x_ref[...], w_ref[...], preferred_element_type=jnp.float32)
    y = y + b_ref[...]
    if relu:
        y = jnp.maximum(y, 0.0)
    o_ref[...] = y.astype(o_ref.dtype)


def matmul_bias(x2d, w, b, relu, tm=256):
    """Fused (M,K)@(K,N) + bias (+ReLU), tiled over M with a 'parallel' grid.

    tm=256 is sized for v7x's 64 MiB VMEM (32 MiB scoped default); it also
    keeps v5e/v6e well within budget while amortizing per-step overhead.
    """
    M, K = x2d.shape
    N = w.shape[1]
    tm = min(tm, _round_up(M, 16))          # 16-row granularity is bf16-safe
    m_pad = _round_up(M, tm)
    if m_pad != M:
        x2d = jnp.pad(x2d, ((0, m_pad - M), (0, 0)))
    grid_m = m_pad // tm

    kern = functools.partial(_mm_bias_kernel, relu=relu)
    out = pl.pallas_call(
        kern,
        out_shape=jax.ShapeDtypeStruct((m_pad, N), jnp.float32),
        grid=(grid_m,),
        in_specs=[
            pl.BlockSpec((tm, K), lambda i: (i, 0)),
            pl.BlockSpec((K, N), lambda i: (0, 0)),
            pl.BlockSpec((1, N), lambda i: (0, 0)),
        ],
        out_specs=pl.BlockSpec((tm, N), lambda i: (i, 0)),
        compiler_params=pltpu.CompilerParams(
            dimension_semantics=("parallel",),
            vmem_limit_bytes=32 * 1024 * 1024),
    )(x2d, w, b.reshape(1, N).astype(jnp.float32))
    return out[:M]


# ----------------------------------------------------------------------------
# Pallas kernel 2: fully fused NonLocalBlock (per batch element)
# ----------------------------------------------------------------------------
def _nonlocal_kernel(u_ref, up_ref,
                     wth_ref, bth_ref, wg_ref, bg_ref, wph_ref, bph_ref,
                     wW_ref, bW_ref, o_ref):
    u = u_ref[0]                      # (N, C)
    up = up_ref[0]                    # (M, C)  (max-pooled u)

    th = jnp.dot(u, wth_ref[...], preferred_element_type=jnp.float32) + bth_ref[...]
    g = jnp.dot(up, wg_ref[...], preferred_element_type=jnp.float32) + bg_ref[...]
    ph = jnp.dot(up, wph_ref[...], preferred_element_type=jnp.float32) + bph_ref[...]

    # f = theta @ phi^T  -> (N, M)
    f = jax.lax.dot_general(
        th, ph, dimension_numbers=(((1,), (1,)), ((), ())),
        preferred_element_type=jnp.float32)
    f = f - jnp.max(f, axis=-1, keepdims=True)
    e = jnp.exp(f)
    s = jnp.sum(e, axis=-1, keepdims=True)
    # softmax normalization folded into a per-row scale after the second matmul;
    # reciprocal goes to the EUP slot (free relative to a VPU divide chain).
    y = jnp.dot(e, g, preferred_element_type=jnp.float32)        # (N, Ci)
    y = y * pl.reciprocal(s, approx=True)

    # W 1x1 projection (BN folded into weights/bias) + residual add.
    z = jnp.dot(y, wW_ref[...], preferred_element_type=jnp.float32) + bW_ref[...] + u
    o_ref[0] = z.astype(o_ref.dtype)


def nonlocal_block(u, p):
    """NonLocalBlock(sub_sample=True, bn_layer=True) on NHWC input u."""
    B, H, W, C = u.shape
    Ci = p['nl_th_w'].shape[1]

    up = maxpool2(u)                                  # (B, H//2, W//2, C)
    N = H * W
    M = up.shape[1] * up.shape[2]

    z = pl.pallas_call(
        _nonlocal_kernel,
        out_shape=jax.ShapeDtypeStruct((B, N, C), jnp.float32),
        grid=(B,),
        in_specs=[
            pl.BlockSpec((1, N, C), lambda b: (b, 0, 0)),
            pl.BlockSpec((1, M, C), lambda b: (b, 0, 0)),
            pl.BlockSpec((C, Ci), lambda b: (0, 0)),
            pl.BlockSpec((1, Ci), lambda b: (0, 0)),
            pl.BlockSpec((C, Ci), lambda b: (0, 0)),
            pl.BlockSpec((1, Ci), lambda b: (0, 0)),
            pl.BlockSpec((C, Ci), lambda b: (0, 0)),
            pl.BlockSpec((1, Ci), lambda b: (0, 0)),
            pl.BlockSpec((Ci, C), lambda b: (0, 0)),
            pl.BlockSpec((1, C), lambda b: (0, 0)),
        ],
        out_specs=pl.BlockSpec((1, N, C), lambda b: (b, 0, 0)),
        compiler_params=pltpu.CompilerParams(
            dimension_semantics=("parallel",),
            vmem_limit_bytes=32 * 1024 * 1024),
    )(u.reshape(B, N, C), up.reshape(B, M, C),
      p['nl_th_w'], p['nl_th_b'].reshape(1, Ci),
      p['nl_g_w'], p['nl_g_b'].reshape(1, Ci),
      p['nl_ph_w'], p['nl_ph_b'].reshape(1, Ci),
      p['nl_W_w_eff'], p['nl_W_b_eff'].reshape(1, C))
    return z.reshape(B, H, W, C)


# ----------------------------------------------------------------------------
# Plain-JAX glue (tiny matmuls / resampling — intentionally not Pallas)
# ----------------------------------------------------------------------------
def conv1x1_jax(x, w, b, relu):
    """Tiny 1x1 conv on NHWC; left to XLA (M <= B*25 rows, K=N << 128)."""
    y = jnp.einsum('bhwc,cn->bhwn', x, w) + b
    return jnp.maximum(y, 0.0) if relu else y


def maxpool2(x):
    """PyTorch MaxPool2d(kernel=(2,2)) on NHWC (floor-truncates odd dims)."""
    B, H, W, C = x.shape
    H2, W2 = H // 2, W // 2
    x = x[:, :H2 * 2, :W2 * 2, :]
    return x.reshape(B, H2, 2, W2, 2, C).max(axis=(2, 4))


def adaptive_pool_matrix(in_size, out_size):
    P = np.zeros((out_size, in_size), np.float32)
    for o in range(out_size):
        s = (o * in_size) // out_size
        e = -(-((o + 1) * in_size) // out_size)  # ceil
        P[o, s:e] = 1.0 / (e - s)
    return jnp.asarray(P)


def bilinear_matrix(in_size, out_size, align_corners):
    A = np.zeros((out_size, in_size), np.float32)
    for o in range(out_size):
        if align_corners:
            src = 0.0 if out_size == 1 else o * (in_size - 1) / (out_size - 1)
        else:
            src = (o + 0.5) * (in_size / out_size) - 0.5
            if src < 0.0:
                src = 0.0
        i0 = min(int(np.floor(src)), in_size - 1)
        i1 = min(i0 + 1, in_size - 1)
        w1 = src - i0
        A[o, i0] += 1.0 - w1
        A[o, i1] += w1
    return jnp.asarray(A)


def resample(x, Ah, Aw):
    """Separable resample as two sequential einsums (smaller intermediate first)."""
    B, H, W, C = x.shape
    Ho, Wo = Ah.shape[0], Aw.shape[0]
    if Ho * W <= H * Wo:
        y = jnp.einsum('oh,bhwc->bowc', Ah, x)
        return jnp.einsum('pw,bowc->bopc', Aw, y)
    y = jnp.einsum('pw,bhwc->bhpc', Aw, x)
    return jnp.einsum('oh,bhpc->bopc', Ah, y)


def im2col3x3(x):
    """(B,H,W,C) -> (B*H*W, 9*C) patches for a 3x3/pad=1/stride=1 conv."""
    B, H, W, C = x.shape
    xp = jnp.pad(x, ((0, 0), (1, 1), (1, 1), (0, 0)))
    cols = [xp[:, di:di + H, dj:dj + W, :] for di in range(3) for dj in range(3)]
    return jnp.concatenate(cols, axis=-1).reshape(B * H * W, 9 * C)


# ----------------------------------------------------------------------------
# GCM forward
# ----------------------------------------------------------------------------
POOL_SIZES = (1, 3, 5)
OUT_CHANNEL_LIST = (256, 128, 64, 64)
UPSAMPLE_SCALE = (2, 4, 8, 16)


def gcm_forward(x_nchw, params):
    x = jnp.transpose(x_nchw, (0, 2, 3, 1)).astype(jnp.float32)  # NHWC
    B, H, W, Cin = x.shape
    Cout = params['gc0_w'].shape[1]

    contexts = []
    # Branches 0..2: AdaptiveAvgPool -> Conv1x1 -> ReLU -> bilinear up (align_corners=True).
    # These matmuls are <= B*25 rows: left to XLA so it fuses them with the resamples.
    for i, ps in enumerate(POOL_SIZES):
        pooled = resample(x, adaptive_pool_matrix(H, ps), adaptive_pool_matrix(W, ps))
        conv = conv1x1_jax(pooled, params[f'gc{i}_w'], params[f'gc{i}_b'], relu=True)
        up = resample(conv, bilinear_matrix(ps, H, True), bilinear_matrix(ps, W, True))
        contexts.append(up)

    # Branch 3: Conv1x1 -> ReLU (plain JAX) -> fully fused NonLocalBlock (Pallas).
    u = conv1x1_jax(x, params['gc3_w'], params['gc3_b'], relu=True)
    contexts.append(nonlocal_block(u, params))

    gc = jnp.concatenate(contexts, axis=-1)            # (B, H, W, 4*Cout)
    Cgc = 4 * Cout

    # Output heads: the four Conv3x3+ReLU heads fused into ONE bf16 matmul
    # (im2col built once, N = 256+128+64+64 = 512 lane-dense), then per-head
    # bilinear upsample (align_corners=False).
    patches = im2col3x3(gc.astype(jnp.bfloat16))        # (B*H*W, 9*Cgc) bf16
    w_heads = jnp.concatenate(
        [params[f'out{i}_w'].reshape(9 * Cgc, co)
         for i, co in enumerate(OUT_CHANNEL_LIST)], axis=1).astype(jnp.bfloat16)
    b_heads = jnp.concatenate([params[f'out{i}_b'] for i in range(4)], axis=0)

    heads = matmul_bias(patches, w_heads, b_heads, relu=True)   # (B*H*W, 512) f32
    heads = heads.reshape(B, H, W, sum(OUT_CHANNEL_LIST))

    offs = np.cumsum([0] + list(OUT_CHANNEL_LIST))
    outputs = []
    for i, (co, s) in enumerate(zip(OUT_CHANNEL_LIST, UPSAMPLE_SCALE)):
        y = heads[..., offs[i]:offs[i + 1]]
        up = resample(y, bilinear_matrix(H, H * s, False), bilinear_matrix(W, W * s, False))
        outputs.append(jnp.transpose(up, (0, 3, 1, 2)))  # back to NCHW
    return outputs


# ----------------------------------------------------------------------------
# Deterministic parameter init (shapes from the module __init__)
# ----------------------------------------------------------------------------
def init_params(key, in_channels, out_channels):
    p = {}
    keys = iter(jax.random.split(key, 64))

    def rnd(shape, scale=0.05):
        return jax.random.normal(next(keys), shape, jnp.float32) * scale

    # GC branches (1x1 convs, stored as (Cin, Cout))
    for i in range(4):
        p[f'gc{i}_w'] = rnd((in_channels, out_channels))
        p[f'gc{i}_b'] = rnd((out_channels,), 0.01)

    # NonLocalBlock(out_channels): inter = out_channels // 2
    ci = max(out_channels // 2, 1)
    p['nl_g_w'] = rnd((out_channels, ci));  p['nl_g_b'] = rnd((ci,), 0.01)
    p['nl_th_w'] = rnd((out_channels, ci)); p['nl_th_b'] = rnd((ci,), 0.01)
    p['nl_ph_w'] = rnd((out_channels, ci)); p['nl_ph_b'] = rnd((ci,), 0.01)
    W_w = rnd((ci, out_channels))
    W_b = rnd((out_channels,), 0.01)
    # BatchNorm2d with weight=0, bias=0 (as in the module), running mean=0, var=1
    gamma = jnp.zeros((out_channels,), jnp.float32)
    beta = jnp.zeros((out_channels,), jnp.float32)
    mean = jnp.zeros((out_channels,), jnp.float32)
    var = jnp.ones((out_channels,), jnp.float32)
    scale = gamma / jnp.sqrt(var + 1e-5)
    p['nl_W_w_eff'] = W_w * scale[None, :]
    p['nl_W_b_eff'] = (W_b - mean) * scale + beta

    # Output heads: Conv3x3(out_channels*4 -> OUT_CHANNEL_LIST[i])
    for i, co in enumerate(OUT_CHANNEL_LIST):
        p[f'out{i}_w'] = rnd((3, 3, out_channels * 4, co), 0.02)
        p[f'out{i}_b'] = rnd((co,), 0.01)
    return p


# ----------------------------------------------------------------------------
if __name__ == "__main__":
    B, Cin, H, W = 2, 16, 16, 16
    Cout = 16

    key = jax.random.PRNGKey(0)
    kx, kp = jax.random.split(key)
    x = jax.random.normal(kx, (B, Cin, H, W), jnp.float32)
    params = init_params(kp, Cin, Cout)

    fwd = jax.jit(gcm_forward)
    outs = jax.block_until_ready(fwd(x, params))

    expected = [(B, 256, H * 2, W * 2), (B, 128, H * 4, W * 4),
                (B, 64, H * 8, W * 8), (B, 64, H * 16, W * 16)]
    got = [tuple(o.shape) for o in outs]
    assert got == expected, (got, expected)
    assert all(bool(jnp.isfinite(o).all()) for o in outs)
    print("KERNEL_OK")
</pallas_src>

<mosaic_0001>
module attributes {stable_mosaic.version = 11 : i64} {
  func.func @_nonlocal_kernel(%arg0: i32, %arg1: memref<1x256x16xf32, #tpu.memory_space<vmem>>, %arg2: memref<1x64x16xf32, #tpu.memory_space<vmem>>, %arg3: memref<16x8xf32, #tpu.memory_space<vmem>>, %arg4: memref<1x8xf32, #tpu.memory_space<vmem>>, %arg5: memref<16x8xf32, #tpu.memory_space<vmem>>, %arg6: memref<1x8xf32, #tpu.memory_space<vmem>>, %arg7: memref<16x8xf32, #tpu.memory_space<vmem>>, %arg8: memref<1x8xf32, #tpu.memory_space<vmem>>, %arg9: memref<8x16xf32, #tpu.memory_space<vmem>>, %arg10: memref<1x16xf32, #tpu.memory_space<vmem>>, %arg11: memref<1x256x16xf32, #tpu.memory_space<vmem>>) attributes {dimension_semantics = [#tpu.dimension_semantics<parallel>], iteration_bounds = array<i64: 2>, scalar_prefetch = 0 : i64, scratch_operands = 0 : i64, tpu.core_type = #tpu.core_type<tc>, window_params = [{transform_indices = @transform_0, window_bounds = array<i64: 1, 256, 16>}, {transform_indices = @transform_1, window_bounds = array<i64: 1, 64, 16>}, {pipeline_mode = #tpu.pipeline_mode<synchronous>, transform_indices = @transform_2, window_bounds = array<i64: 16, 8>}, {pipeline_mode = #tpu.pipeline_mode<synchronous>, transform_indices = @transform_3, window_bounds = array<i64: 1, 8>}, {pipeline_mode = #tpu.pipeline_mode<synchronous>, transform_indices = @transform_4, window_bounds = array<i64: 16, 8>}, {pipeline_mode = #tpu.pipeline_mode<synchronous>, transform_indices = @transform_5, window_bounds = array<i64: 1, 8>}, {pipeline_mode = #tpu.pipeline_mode<synchronous>, transform_indices = @transform_6, window_bounds = array<i64: 16, 8>}, {pipeline_mode = #tpu.pipeline_mode<synchronous>, transform_indices = @transform_7, window_bounds = array<i64: 1, 8>}, {pipeline_mode = #tpu.pipeline_mode<synchronous>, transform_indices = @transform_8, window_bounds = array<i64: 8, 16>}, {pipeline_mode = #tpu.pipeline_mode<synchronous>, transform_indices = @transform_9, window_bounds = array<i64: 1, 16>}, {transform_indices = @transform_10, window_bounds = array<i64: 1, 256, 16>}]} {
    %c0 = arith.constant 0 : index
    %c0_0 = arith.constant 0 : index
    %c0_1 = arith.constant 0 : index
    %0 = vector.load %arg1[%c0, %c0_0, %c0_1] : memref<1x256x16xf32, #tpu.memory_space<vmem>>, vector<1x256x16xf32>
    %1 = vector.shape_cast %0 : vector<1x256x16xf32> to vector<256x16xf32>
    %c0_2 = arith.constant 0 : index
    %c0_3 = arith.constant 0 : index
    %c0_4 = arith.constant 0 : index
    %2 = vector.load %arg2[%c0_2, %c0_3, %c0_4] : memref<1x64x16xf32, #tpu.memory_space<vmem>>, vector<1x64x16xf32>
    %3 = vector.shape_cast %2 : vector<1x64x16xf32> to vector<64x16xf32>
    %c0_5 = arith.constant 0 : index
    %c0_6 = arith.constant 0 : index
    %4 = vector.load %arg3[%c0_5, %c0_6] : memref<16x8xf32, #tpu.memory_space<vmem>>, vector<16x8xf32>
    %cst = arith.constant dense<0.000000e+00> : vector<256x8xf32>
    %5 = tpu.matmul %1, %4, %cst {dimension_numbers = #tpu.dot_dimension_numbers<[1], [0], [0], [1], [0, 0, 1, 1], [], []>} : vector<256x16xf32>, vector<16x8xf32>, vector<256x8xf32> -> vector<256x8xf32>
    %c0_7 = arith.constant 0 : index
    %c0_8 = arith.constant 0 : index
    %6 = vector.load %arg4[%c0_7, %c0_8] : memref<1x8xf32, #tpu.memory_space<vmem>>, vector<1x8xf32>
    %7 = vector.broadcast %6 : vector<1x8xf32> to vector<256x8xf32>
    %8 = arith.addf %5, %7 : vector<256x8xf32>
    %c0_9 = arith.constant 0 : index
    %c0_10 = arith.constant 0 : index
    %9 = vector.load %arg5[%c0_9, %c0_10] : memref<16x8xf32, #tpu.memory_space<vmem>>, vector<16x8xf32>
    %cst_11 = arith.constant dense<0.000000e+00> : vector<64x8xf32>
    %10 = tpu.matmul %3, %9, %cst_11 {dimension_numbers = #tpu.dot_dimension_numbers<[1], [0], [0], [1], [0, 0, 1, 1], [], []>} : vector<64x16xf32>, vector<16x8xf32>, vector<64x8xf32> -> vector<64x8xf32>
    %c0_12 = arith.constant 0 : index
    %c0_13 = arith.constant 0 : index
    %11 = vector.load %arg6[%c0_12, %c0_13] : memref<1x8xf32, #tpu.memory_space<vmem>>, vector<1x8xf32>
    %12 = vector.broadcast %11 : vector<1x8xf32> to vector<64x8xf32>
    %13 = arith.addf %10, %12 : vector<64x8xf32>
    %c0_14 = arith.constant 0 : index
    %c0_15 = arith.constant 0 : index
    %14 = vector.load %arg7[%c0_14, %c0_15] : memref<16x8xf32, #tpu.memory_space<vmem>>, vector<16x8xf32>
    %cst_16 = arith.constant dense<0.000000e+00> : vector<64x8xf32>
    %15 = tpu.matmul %3, %14, %cst_16 {dimension_numbers = #tpu.dot_dimension_numbers<[1], [0], [0], [1], [0, 0, 1, 1], [], []>} : vector<64x16xf32>, vector<16x8xf32>, vector<64x8xf32> -> vector<64x8xf32>
    %c0_17 = arith.constant 0 : index
    %c0_18 = arith.constant 0 : index
    %16 = vector.load %arg8[%c0_17, %c0_18] : memref<1x8xf32, #tpu.memory_space<vmem>>, vector<1x8xf32>
    %17 = vector.broadcast %16 : vector<1x8xf32> to vector<64x8xf32>
    %18 = arith.addf %15, %17 : vector<64x8xf32>
    %cst_19 = arith.constant dense<0.000000e+00> : vector<256x64xf32>
    %19 = tpu.matmul %8, %18, %cst_19 {dimension_numbers = #tpu.dot_dimension_numbers<[1], [1], [0], [0], [0, 0, 1, 0], [], []>} : vector<256x8xf32>, vector<64x8xf32>, vector<256x64xf32> -> vector<256x64xf32>
    %cst_20 = arith.constant dense<0xFF800000> : vector<256xf32>
    %20 = vector.multi_reduction <maximumf>, %19, %cst_20 [1] : vector<256x64xf32> to vector<256xf32>
    %21 = vector.shape_cast %20 : vector<256xf32> to vector<256x1xf32>
    %22 = vector.broadcast %21 : vector<256x1xf32> to vector<256x64xf32>
    %23 = arith.subf %19, %22 : vector<256x64xf32>
    %24 = math.exp %23 : vector<256x64xf32>
    %cst_21 = arith.constant dense<0.000000e+00> : vector<256xf32>
    %25 = vector.multi_reduction <add>, %24, %cst_21 [1] : vector<256x64xf32> to vector<256xf32>
    %26 = vector.shape_cast %25 : vector<256xf32> to vector<256x1xf32>
    %cst_22 = arith.constant dense<0.000000e+00> : vector<256x8xf32>
    %27 = tpu.matmul %24, %13, %cst_22 {dimension_numbers = #tpu.dot_dimension_numbers<[1], [0], [0], [1], [0, 0, 1, 1], [], []>} : vector<256x64xf32>, vector<64x8xf32>, vector<256x8xf32> -> vector<256x8xf32>
    %28 = tpu.reciprocal %26 {approx = true} : vector<256x1xf32> -> vector<256x1xf32>
    %29 = vector.broadcast %28 : vector<256x1xf32> to vector<256x8xf32>
    %30 = arith.mulf %27, %29 : vector<256x8xf32>
    %c0_23 = arith.constant 0 : index
    %c0_24 = arith.constant 0 : index
    %31 = vector.load %arg9[%c0_23, %c0_24] : memref<8x16xf32, #tpu.memory_space<vmem>>, vector<8x16xf32>
    %cst_25 = arith.constant dense<0.000000e+00> : vector<256x16xf32>
    %32 = tpu.matmul %30, %31, %cst_25 {dimension_numbers = #tpu.dot_dimension_numbers<[1], [0], [0], [1], [0, 0, 1, 1], [], []>} : vector<256x8xf32>, vector<8x16xf32>, vector<256x16xf32> -> vector<256x16xf32>
    %c0_26 = arith.constant 0 : index
    %c0_27 = arith.constant 0 : index
    %33 = vector.load %arg10[%c0_26, %c0_27] : memref<1x16xf32, #tpu.memory_space<vmem>>, vector<1x16xf32>
    %34 = vector.broadcast %33 : vector<1x16xf32> to vector<256x16xf32>
    %35 = arith.addf %32, %34 : vector<256x16xf32>
    %36 = arith.addf %35, %1 : vector<256x16xf32>
    %c0_28 = arith.constant 0 : index
    %c0_29 = arith.constant 0 : index
    %c0_30 = arith.constant 0 : index
    %37 = vector.load %arg11[%c0_28, %c0_29, %c0_30] : memref<1x256x16xf32, #tpu.memory_space<vmem>>, vector<1x256x16xf32>
    %38 = vector.shape_cast %37 : vector<1x256x16xf32> to vector<256x16xf32>
    %39 = vector.shape_cast %36 : vector<256x16xf32> to vector<1x256x16xf32>
    tpu.vector_store %arg11[%c0_28, %c0_29, %c0_30], %39 {strides = array<i32>} : memref<1x256x16xf32, #tpu.memory_space<vmem>>, vector<1x256x16xf32>,
    return
  }
  func.func @transform_0(%arg0: i32) -> (i32, i32, i32) {
    %c0_i32 = arith.constant 0 : i32
    %c0_i32_0 = arith.constant 0 : i32
    %c0_i32_1 = arith.constant 0 : i32
    return %arg0, %c0_i32, %c0_i32_0 : i32, i32, i32
  }
  func.func @transform_1(%arg0: i32) -> (i32, i32, i32) {
    %c0_i32 = arith.constant 0 : i32
    %c0_i32_0 = arith.constant 0 : i32
    %c0_i32_1 = arith.constant 0 : i32
    return %arg0, %c0_i32, %c0_i32_0 : i32, i32, i32
  }
  func.func @transform_2(%arg0: i32) -> (i32, i32) {
    %c0_i32 = arith.constant 0 : i32
    %c0_i32_0 = arith.constant 0 : i32
    %c0_i32_1 = arith.constant 0 : i32
    return %c0_i32, %c0_i32_0 : i32, i32
  }
  func.func @transform_3(%arg0: i32) -> (i32, i32) {
    %c0_i32 = arith.constant 0 : i32
    %c0_i32_0 = arith.constant 0 : i32
    %c0_i32_1 = arith.constant 0 : i32
    return %c0_i32, %c0_i32_0 : i32, i32
  }
  func.func @transform_4(%arg0: i32) -> (i32, i32) {
    %c0_i32 = arith.constant 0 : i32
    %c0_i32_0 = arith.constant 0 : i32
    %c0_i32_1 = arith.constant 0 : i32
    return %c0_i32, %c0_i32_0 : i32, i32
  }
  func.func @transform_5(%arg0: i32) -> (i32, i32) {
    %c0_i32 = arith.constant 0 : i32
    %c0_i32_0 = arith.constant 0 : i32
    %c0_i32_1 = arith.constant 0 : i32
    return %c0_i32, %c0_i32_0 : i32, i32
  }
  func.func @transform_6(%arg0: i32) -> (i32, i32) {
    %c0_i32 = arith.constant 0 : i32
    %c0_i32_0 = arith.constant 0 : i32
    %c0_i32_1 = arith.constant 0 : i32
    return %c0_i32, %c0_i32_0 : i32, i32
  }
  func.func @transform_7(%arg0: i32) -> (i32, i32) {
    %c0_i32 = arith.constant 0 : i32
    %c0_i32_0 = arith.constant 0 : i32
    %c0_i32_1 = arith.constant 0 : i32
    return %c0_i32, %c0_i32_0 : i32, i32
  }
  func.func @transform_8(%arg0: i32) -> (i32, i32) {
    %c0_i32 = arith.constant 0 : i32
    %c0_i32_0 = arith.constant 0 : i32
    %c0_i32_1 = arith.constant 0 : i32
    return %c0_i32, %c0_i32_0 : i32, i32
  }
  func.func @transform_9(%arg0: i32) -> (i32, i32) {
    %c0_i32 = arith.constant 0 : i32
    %c0_i32_0 = arith.constant 0 : i32
    %c0_i32_1 = arith.constant 0 : i32
    return %c0_i32, %c0_i32_0 : i32, i32
  }
  func.func @transform_10(%arg0: i32) -> (i32, i32, i32) {
    %c0_i32 = arith.constant 0 : i32
    %c0_i32_0 = arith.constant 0 : i32
    %c0_i32_1 = arith.constant 0 : i32
    return %arg0, %c0_i32, %c0_i32_0 : i32, i32, i32
  }
}

module attributes {stable_mosaic.version = 11 : i64} {
  func.func @_mm_bias_kernel(%arg0: i32, %arg1: memref<256x576xbf16, #tpu.memory_space<vmem>>, %arg2: memref<576x512xbf16, #tpu.memory_space<vmem>>, %arg3: memref<1x512xf32, #tpu.memory_space<vmem>>, %arg4: memref<256x512xf32, #tpu.memory_space<vmem>>) attributes {dimension_semantics = [#tpu.dimension_semantics<parallel>], iteration_bounds = array<i64: 2>, scalar_prefetch = 0 : i64, scratch_operands = 0 : i64, tpu.core_type = #tpu.core_type<tc>, window_params = [{transform_indices = @transform_0, window_bounds = array<i64: 256, 576>}, {pipeline_mode = #tpu.pipeline_mode<synchronous>, transform_indices = @transform_1, window_bounds = array<i64: 576, 512>}, {pipeline_mode = #tpu.pipeline_mode<synchronous>, transform_indices = @transform_2, window_bounds = array<i64: 1, 512>}, {transform_indices = @transform_3, window_bounds = array<i64: 256, 512>}]} {
    %c0 = arith.constant 0 : index
    %c0_0 = arith.constant 0 : index
    %0 = vector.load %arg1[%c0, %c0_0] : memref<256x576xbf16, #tpu.memory_space<vmem>>, vector<256x576xbf16>
    %c0_1 = arith.constant 0 : index
    %c0_2 = arith.constant 0 : index
    %1 = vector.load %arg2[%c0_1, %c0_2] : memref<576x512xbf16, #tpu.memory_space<vmem>>, vector<576x512xbf16>
    %cst = arith.constant dense<0.000000e+00> : vector<256x512xf32>
    %2 = tpu.matmul %0, %1, %cst {dimension_numbers = #tpu.dot_dimension_numbers<[1], [0], [0], [1], [0, 0, 1, 1], [], []>} : vector<256x576xbf16>, vector<576x512xbf16>, vector<256x512xf32> -> vector<256x512xf32>
    %c0_3 = arith.constant 0 : index
    %c0_4 = arith.constant 0 : index
    %3 = vector.load %arg3[%c0_3, %c0_4] : memref<1x512xf32, #tpu.memory_space<vmem>>, vector<1x512xf32>
    %4 = vector.broadcast %3 : vector<1x512xf32> to vector<256x512xf32>
    %5 = arith.addf %2, %4 : vector<256x512xf32>
    %cst_5 = arith.constant 0.000000e+00 : f32
    %6 = vector.broadcast %cst_5 : f32 to vector<256x512xf32>
    %7 = arith.maximumf %5, %6 : vector<256x512xf32>
    %c0_6 = arith.constant 0 : index
    %c0_7 = arith.constant 0 : index
    %8 = vector.load %arg4[%c0_6, %c0_7] : memref<256x512xf32, #tpu.memory_space<vmem>>, vector<256x512xf32>
    tpu.vector_store %arg4[%c0_6, %c0_7], %7 {strides = array<i32>} : memref<256x512xf32, #tpu.memory_space<vmem>>, vector<256x512xf32>,
    return
  }
  func.func @transform_0(%arg0: i32) -> (i32, i32) {
    %c0_i32 = arith.constant 0 : i32
    %c0_i32_0 = arith.constant 0 : i32
    return %arg0, %c0_i32 : i32, i32
  }
  func.func @transform_1(%arg0: i32) -> (i32, i32) {
    %c0_i32 = arith.constant 0 : i32
    %c0_i32_0 = arith.constant 0 : i32
    %c0_i32_1 = arith.constant 0 : i32
    return %c0_i32, %c0_i32_0 : i32, i32
  }
  func.func @transform_2(%arg0: i32) -> (i32, i32) {
    %c0_i32 = arith.constant 0 : i32
    %c0_i32_0 = arith.constant 0 : i32
    %c0_i32_1 = arith.constant 0 : i32
    return %c0_i32, %c0_i32_0 : i32, i32
  }
  func.func @transform_3(%arg0: i32) -> (i32, i32) {
    %c0_i32 = arith.constant 0 : i32
    %c0_i32_0 = arith.constant 0 : i32
    return %arg0, %c0_i32 : i32, i32
  }
}

</mosaic_0001>

<llo_original>
// kernel: gcm_forward.2
$region0: #{gcm_forward.2}
  #allocation0 [shape = 'u32[]', space=smem, size = 0x4, offset = 0x4, fixed_abs, tag = 'smem constant byte address 0x4 - core index']
  #allocation1 [shape = 'u32[144,128]{1,0:T(1,128)}', space=vmem, size = 0x12000, scoped, tag = 'internal scratch']
  %s0 = inlined_call_operand.vmem [shape: f32[2,256,16], index: 0, kind: input, shape index: {}]
  %s1 = inlined_call_operand.vmem [shape: f32[2,64,16], index: 1, kind: input, shape index: {}]
  %s2 = inlined_call_operand.vmem [shape: f32[16,8], index: 2, kind: input, shape index: {}]
  %s3 = inlined_call_operand.hbm [shape: f32[1,8], index: 3, kind: input, shape index: {}]
  %s4 = inlined_call_operand.vmem [shape: f32[16,8], index: 4, kind: input, shape index: {}]
  %s5 = inlined_call_operand.hbm [shape: f32[1,8], index: 5, kind: input, shape index: {}]
  %s6 = inlined_call_operand.vmem [shape: f32[16,8], index: 6, kind: input, shape index: {}]
  %s7 = inlined_call_operand.hbm [shape: f32[1,8], index: 7, kind: input, shape index: {}]
  %s8 = inlined_call_operand.hbm [shape: f32[8,16], index: 8, kind: input, shape index: {}]
  %s9 = inlined_call_operand.hbm [shape: f32[1,16], index: 9, kind: input, shape index: {}]
  %s10 = inlined_call_operand.vmem [shape: f32[2,256,16], index: 10, kind: output, shape index: {}]
  %s11 = sld [smem:[#allocation0]]
  $region93: #{gcm_forward.2} parent=0
    _
  %s13 = ssub.s32 1, %s11
  %s14 = scalar_select 0, %s13, %s11
  $region1: #{gcm_forward.2} parent=0
    #allocation2 [shape = 'u8[512]{0}', space=vmem, size = 0x400, scoped, tag = 'input window, operand 3, single buffered']
    #allocation3 [shape = 's32[2]{0}', space=sflag, size = 0x8, scoped, tag = 'scoped memory for gcm_forward.2']
    #allocation4 [shape = 'u8[512]{0}', space=vmem, size = 0x400, scoped, tag = 'input window, operand 5, single buffered']
    #allocation5 [shape = 's32[1]{0}', space=sflag, size = 0x4, scoped, tag = 'scoped memory for gcm_forward.2']
    #allocation6 [shape = 'u8[512]{0}', space=vmem, size = 0x400, scoped, tag = 'input window, operand 7, single buffered']
    #allocation7 [shape = 'u8[4096]{0}', space=vmem, size = 0x1000, scoped, tag = 'input window, operand 8, single buffered']
    #allocation8 [shape = 's32[1]{0}', space=sflag, size = 0x4, scoped, tag = 'scoped memory for gcm_forward.2']
    #allocation9 [shape = 'u8[512]{0}', space=vmem, size = 0x400, scoped, tag = 'input window, operand 9, single buffered']
    %15 = vsyncpa [#allocation3], 0
    %16 = vsyncpa [#allocation5], 0
    %17 = vsyncpa [#allocation8], 0
    loop: start=0, step=1, limit=4
    $region2: #{gcm_forward.2} parent=1 // loop_pre_header
      _
    $region3: #{gcm_forward.2} parent=1 // loop_header
      %s19 = sphi 0, %s23
      %p20 = scmp.ge.s32.totalorder %s19, 4
      %s29 = sphi 0, %s31
      %s32 = sphi 0, %s29
      %s33 = sphi 0, %s32
      %s49 = sphi 0, %s33
      %s55 = sphi 0, %s57
      %s58 = sphi 0, %s55
      %s59 = sphi 0, %s58
      %s75 = sphi 0, %s59
      %s79 = sphi 0, %s79
      %s81 = sphi 0, %s79
      %s82 = sphi 0, %s81
      %s96 = sphi 0, %s82
      %s100 = sphi 0, %s100
      %s102 = sphi 0, %s100
      %s103 = sphi 0, %s102
      %s117 = sphi 0, %s103
      %s121 = sphi 0, %s121
      %s123 = sphi 0, %s121
      %s124 = sphi 0, %s123
      %s138 = sphi 0, %s124
      %s142 = sphi 0, %s142
      %s144 = sphi 0, %s142
      %s145 = sphi 0, %s144
      %s159 = sphi 0, %s145
      %s163 = sphi 0, %s163
      %s165 = sphi 0, %s163
      %s166 = sphi 0, %s165
      %s180 = sphi 0, %s166
      %s184 = sphi 0, %s184
      %s186 = sphi 0, %s184
      %s187 = sphi 0, %s186
      %s201 = sphi 0, %s187
      %s205 = sphi 0, %s205
      %s207 = sphi 0, %s205
      %s208 = sphi 0, %s207
      %s222 = sphi 0, %s208
      %s226 = sphi 0, %s226
      %s228 = sphi 0, %s226
      %s229 = sphi 0, %s228
      %s243 = sphi 0, %s229
      %s249 = sphi 0, %s251
      %s252 = sphi 0, %s249
      %s253 = sphi 0, %s252
      %s269 = sphi 0, %s253
    $region4: #{gcm_forward.2} parent=1 // loop_header_branch
      %22 = sbr.rel (%p20) target = $region8
    $region5: #{gcm_forward.2} parent=1 // loop_body
      %s24 = ssub.s32 %s19, 1
      %s25 = ssub.s32 %s19, 2
      %s26 = sadd.s32 %s19, 1
      %s27 = ssub.s32 %s19, %s26
      %p28 = scmp.eq.s32.totalorder %s27, 0
      %s30 = sadd.s32 %s29, 1
      %s31 = scalar_select %p28, %s29, %s30
      %p34 = pneg %p28
      %p35 = scmp.eq.s32.totalorder %s19, 1
      %p36 = por %p34, %p35
      %p37 = scmp.ne.s32.totalorder %s29, %s32
      %p38 = scmp.eq.s32.totalorder %s19, 0
      %p39 = por %p37, %p38
      %p40 = scmp.ne.s32.totalorder %s29, %s32
      %p41 = scmp.eq.s32.totalorder %s24, 1
      %p42 = por %p40, %p41
      %p43 = scmp.ne.s32.totalorder %s32, %s33
      %p44 = scmp.eq.s32.totalorder %s24, 0
      %p45 = por %p43, %p44
      %p46 = scmp.ne.s32.totalorder %s32, %s33
      %p47 = scmp.eq.s32.totalorder %s25, 1
      %p48 = por %p46, %p47
      %p50 = scmp.ne.s32.totalorder %s33, %s49
      %p51 = scmp.eq.s32.totalorder %s25, 0
      %p52 = por %p50, %p51
      %s53 = ssub.s32 %s19, %s26
      %p54 = scmp.eq.s32.totalorder %s53, 0
      %s56 = sadd.s32 %s55, 1
      %s57 = scalar_select %p54, %s55, %s56
      %p60 = pneg %p54
      %p61 = scmp.eq.s32.totalorder %s19, 1
      %p62 = por %p60, %p61
      %p63 = scmp.ne.s32.totalorder %s55, %s58
      %p64 = scmp.eq.s32.totalorder %s19, 0
      %p65 = por %p63, %p64
      %p66 = scmp.ne.s32.totalorder %s55, %s58
      %p67 = scmp.eq.s32.totalorder %s24, 1
      %p68 = por %p66, %p67
      %p69 = scmp.ne.s32.totalorder %s58, %s59
      %p70 = scmp.eq.s32.totalorder %s24, 0
      %p71 = por %p69, %p70
      %p72 = scmp.ne.s32.totalorder %s58, %s59
      %p73 = scmp.eq.s32.totalorder %s25, 1
      %p74 = por %p72, %p73
      %p76 = scmp.ne.s32.totalorder %s59, %s75
      %p77 = scmp.eq.s32.totalorder %s25, 0
      %p78 = por %p76, %p77
      %s80 = sadd.s32 %s79, 1
      %p83 = scmp.eq.s32.totalorder %s19, 1
      %p84 = scmp.ne.s32.totalorder %s79, %s81
      %p85 = scmp.eq.s32.totalorder %s19, 0
      %p86 = por %p84, %p85
      %p87 = scmp.ne.s32.totalorder %s79, %s81
      %p88 = scmp.eq.s32.totalorder %s24, 1
      %p89 = por %p87, %p88
      %p90 = scmp.ne.s32.totalorder %s81, %s82
      %p91 = scmp.eq.s32.totalorder %s24, 0
      %p92 = por %p90, %p91
      %p93 = scmp.ne.s32.totalorder %s81, %s82
      %p94 = scmp.eq.s32.totalorder %s25, 1
      %p95 = por %p93, %p94
      %p97 = scmp.ne.s32.totalorder %s82, %s96
      %p98 = scmp.eq.s32.totalorder %s25, 0
      %p99 = por %p97, %p98
      %s101 = sadd.s32 %s100, 1
      %p104 = scmp.eq.s32.totalorder %s19, 1
      %p105 = scmp.ne.s32.totalorder %s100, %s102
      %p106 = scmp.eq.s32.totalorder %s19, 0
      %p107 = por %p105, %p106
      %p108 = scmp.ne.s32.totalorder %s100, %s102
      %p109 = scmp.eq.s32.totalorder %s24, 1
      %p110 = por %p108, %p109
      %p111 = scmp.ne.s32.totalorder %s102, %s103
      %p112 = scmp.eq.s32.totalorder %s24, 0
      %p113 = por %p111, %p112
      %p114 = scmp.ne.s32.totalorder %s102, %s103
      %p115 = scmp.eq.s32.totalorder %s25, 1
      %p116 = por %p114, %p115
      %p118 = scmp.ne.s32.totalorder %s103, %s117
      %p119 = scmp.eq.s32.totalorder %s25, 0
      %p120 = por %p118, %p119
      %s122 = sadd.s32 %s121, 1
      %p125 = scmp.eq.s32.totalorder %s19, 1
      %p126 = scmp.ne.s32.totalorder %s121, %s123
      %p127 = scmp.eq.s32.totalorder %s19, 0
      %p128 = por %p126, %p127
      %p129 = scmp.ne.s32.totalorder %s121, %s123
      %p130 = scmp.eq.s32.totalorder %s24, 1
      %p131 = por %p129, %p130
      %p132 = scmp.ne.s32.totalorder %s123, %s124
      %p133 = scmp.eq.s32.totalorder %s24, 0
      %p134 = por %p132, %p133
      %p135 = scmp.ne.s32.totalorder %s123, %s124
      %p136 = scmp.eq.s32.totalorder %s25, 1
      %p137 = por %p135, %p136
      %p139 = scmp.ne.s32.totalorder %s124, %s138
      %p140 = scmp.eq.s32.totalorder %s25, 0
      %p141 = por %p139, %p140
      %s143 = sadd.s32 %s142, 1
      %p146 = scmp.eq.s32.totalorder %s19, 1
      %p147 = scmp.ne.s32.totalorder %s142, %s144
      %p148 = scmp.eq.s32.totalorder %s19, 0
      %p149 = por %p147, %p148
      %p150 = scmp.ne.s32.totalorder %s142, %s144
      %p151 = scmp.eq.s32.totalorder %s24, 1
      %p152 = por %p150, %p151
      %p153 = scmp.ne.s32.totalorder %s144, %s145
      %p154 = scmp.eq.s32.totalorder %s24, 0
      %p155 = por %p153, %p154
      %p156 = scmp.ne.s32.totalorder %s144, %s145
      %p157 = scmp.eq.s32.totalorder %s25, 1
      %p158 = por %p156, %p157
      %p160 = scmp.ne.s32.totalorder %s145, %s159
      %p161 = scmp.eq.s32.totalorder %s25, 0
      %p162 = por %p160, %p161
      %s164 = sadd.s32 %s163, 1
      %p167 = scmp.eq.s32.totalorder %s19, 1
      %p168 = scmp.ne.s32.totalorder %s163, %s165
      %p169 = scmp.eq.s32.totalorder %s19, 0
      %p170 = por %p168, %p169
      %p171 = scmp.ne.s32.totalorder %s163, %s165
      %p172 = scmp.eq.s32.totalorder %s24, 1
      %p173 = por %p171, %p172
      %p174 = scmp.ne.s32.totalorder %s165, %s166
      %p175 = scmp.eq.s32.totalorder %s24, 0
      %p176 = por %p174, %p175
      %p177 = scmp.ne.s32.totalorder %s165, %s166
      %p178 = scmp.eq.s32.totalorder %s25, 1
      %p179 = por %p177, %p178
      %p181 = scmp.ne.s32.totalorder %s166, %s180
      %p182 = scmp.eq.s32.totalorder %s25, 0
      %p183 = por %p181, %p182
      %s185 = sadd.s32 %s184, 1
      %p188 = scmp.eq.s32.totalorder %s19, 1
      %p189 = scmp.ne.s32.totalorder %s184, %s186
      %p190 = scmp.eq.s32.totalorder %s19, 0
      %p191 = por %p189, %p190
      %p192 = scmp.ne.s32.totalorder %s184, %s186
      %p193 = scmp.eq.s32.totalorder %s24, 1
      %p194 = por %p192, %p193
      %p195 = scmp.ne.s32.totalorder %s186, %s187
      %p196 = scmp.eq.s32.totalorder %s24, 0
      %p197 = por %p195, %p196
      %p198 = scmp.ne.s32.totalorder %s186, %s187
      %p199 = scmp.eq.s32.totalorder %s25, 1
      %p200 = por %p198, %p199
      %p202 = scmp.ne.s32.totalorder %s187, %s201
      %p203 = scmp.eq.s32.totalorder %s25, 0
      %p204 = por %p202, %p203
      %s206 = sadd.s32 %s205, 1
      %p209 = scmp.eq.s32.totalorder %s19, 1
      %p210 = scmp.ne.s32.totalorder %s205, %s207
      %p211 = scmp.eq.s32.totalorder %s19, 0
      %p212 = por %p210, %p211
      %p213 = scmp.ne.s32.totalorder %s205, %s207
      %p214 = scmp.eq.s32.totalorder %s24, 1
      %p215 = por %p213, %p214
      %p216 = scmp.ne.s32.totalorder %s207, %s208
      %p217 = scmp.eq.s32.totalorder %s24, 0
      %p218 = por %p216, %p217
      %p219 = scmp.ne.s32.totalorder %s207, %s208
      %p220 = scmp.eq.s32.totalorder %s25, 1
      %p221 = por %p219, %p220
      %p223 = scmp.ne.s32.totalorder %s208, %s222
      %p224 = scmp.eq.s32.totalorder %s25, 0
      %p225 = por %p223, %p224
      %s227 = sadd.s32 %s226, 1
      %p230 = scmp.eq.s32.totalorder %s19, 1
      %p231 = scmp.ne.s32.totalorder %s226, %s228
      %p232 = scmp.eq.s32.totalorder %s19, 0
      %p233 = por %p231, %p232
      %p234 = scmp.ne.s32.totalorder %s226, %s228
      %p235 = scmp.eq.s32.totalorder %s24, 1
      %p236 = por %p234, %p235
      %p237 = scmp.ne.s32.totalorder %s228, %s229
      %p238 = scmp.eq.s32.totalorder %s24, 0
      %p239 = por %p237, %p238
      %p240 = scmp.ne.s32.totalorder %s228, %s229
      %p241 = scmp.eq.s32.totalorder %s25, 1
      %p242 = por %p240, %p241
      %p244 = scmp.ne.s32.totalorder %s229, %s243
      %p245 = scmp.eq.s32.totalorder %s25, 0
      %p246 = por %p244, %p245
      %s247 = ssub.s32 %s19, %s26
      %p248 = scmp.eq.s32.totalorder %s247, 0
      %s250 = sadd.s32 %s249, 1
      %s251 = scalar_select %p248, %s249, %s250
      %p254 = pneg %p248
      %p255 = scmp.eq.s32.totalorder %s19, 1
      %p256 = por %p254, %p255
      %p257 = scmp.ne.s32.totalorder %s249, %s252
      %p258 = scmp.eq.s32.totalorder %s19, 0
      %p259 = por %p257, %p258
      %p260 = scmp.ne.s32.totalorder %s249, %s252
      %p261 = scmp.eq.s32.totalorder %s24, 1
      %p262 = por %p260, %p261
      %p263 = scmp.ne.s32.totalorder %s252, %s253
      %p264 = scmp.eq.s32.totalorder %s24, 0
      %p265 = por %p263, %p264
      %p266 = scmp.ne.s32.totalorder %s252, %s253
      %p267 = scmp.eq.s32.totalorder %s25, 1
      %p268 = por %p266, %p267
      %p270 = scmp.ne.s32.totalorder %s253, %s269
      %p271 = scmp.eq.s32.totalorder %s25, 0
      %p272 = por %p270, %p271
      %p273 = scmp.le.s32.totalorder 1, %s19
      %p274 = scmp.lt.s32.totalorder %s19, 3
      %p275 = pnand %p273, %p274
      %p276 = pneg %p275
      // Predicated region
      $region9: #{gcm_forward.2} parent=5 // pred_check
        _
      $region10: #{gcm_forward.2} parent=5 // pred_check_branch
        %278 = sbr.rel (%p275) target = $region12
      $region11: #{gcm_forward.2} parent=5 // pred_region
        %s279 = ssub.s32 %s19, 1
        // Predicated region
        $region13: #{gcm_forward.2} parent=11 // pred_check
          %p280 = pneg %p92
        $region14: #{gcm_forward.2} parent=11 // pred_check_branch
          %282 = sbr.rel (%p280) target = $region16
        $region15: #{gcm_forward.2} parent=11 // pred_region
          _
        $region16: #{gcm_forward.2} parent=11 // pred_fallthru
          _
        // Predicated region
        $region17: #{gcm_forward.2} parent=11 // pred_check
          %p283 = pneg %p113
        $region18: #{gcm_forward.2} parent=11 // pred_check_branch
          %285 = sbr.rel (%p283) target = $region20
        $region19: #{gcm_forward.2} parent=11 // pred_region
          %s287 = ssub.s32 16, 16
          %288 = vsyncadd [#allocation3], %s287
          %s290 = sshll.u32 [#allocation2], 4
          %s291 = int_to_ptr.vmem [resolvable:$true] %s290
          %293 = dma.hbm_to_vmem [thread:$0]  %s3, 16, %s291, [#allocation3]
        $region20: #{gcm_forward.2} parent=11 // pred_fallthru
          _
        // Predicated region
        $region21: #{gcm_forward.2} parent=11 // pred_check
          %p294 = pneg %p134
        $region22: #{gcm_forward.2} parent=11 // pred_check_branch
          %296 = sbr.rel (%p294) target = $region24
        $region23: #{gcm_forward.2} parent=11 // pred_region
          _
        $region24: #{gcm_forward.2} parent=11 // pred_fallthru
          _
        // Predicated region
        $region25: #{gcm_forward.2} parent=11 // pred_check
          %p297 = pneg %p155
        $region26: #{gcm_forward.2} parent=11 // pred_check_branch
          %299 = sbr.rel (%p297) target = $region28
        $region27: #{gcm_forward.2} parent=11 // pred_region
          %s301 = ssub.s32 16, 16
          %302 = vsyncadd [#allocation5], %s301
          %s304 = sshll.u32 [#allocation4], 4
          %s305 = int_to_ptr.vmem [resolvable:$true] %s304
          %307 = dma.hbm_to_vmem [thread:$0]  %s5, 16, %s305, [#allocation5]
        $region28: #{gcm_forward.2} parent=11 // pred_fallthru
          _
        // Predicated region
        $region29: #{gcm_forward.2} parent=11 // pred_check
          %p308 = pneg %p176
        $region30: #{gcm_forward.2} parent=11 // pred_check_branch
          %310 = sbr.rel (%p308) target = $region32
        $region31: #{gcm_forward.2} parent=11 // pred_region
          _
        $region32: #{gcm_forward.2} parent=11 // pred_fallthru
          _
        // Predicated region
        $region33: #{gcm_forward.2} parent=11 // pred_check
          %p311 = pneg %p197
        $region34: #{gcm_forward.2} parent=11 // pred_check_branch
          %313 = sbr.rel (%p311) target = $region36
        $region35: #{gcm_forward.2} parent=11 // pred_region
          %s315 = ssub.s32 16, 16
          %316 = vsyncadd [#allocation5], %s315
          %s318 = sshll.u32 [#allocation6], 4
          %s319 = int_to_ptr.vmem [resolvable:$true] %s318
          %321 = dma.hbm_to_vmem [thread:$0]  %s7, 16, %s319, [#allocation5]
        $region36: #{gcm_forward.2} parent=11 // pred_fallthru
          _
        // Predicated region
        $region37: #{gcm_forward.2} parent=11 // pred_check
          %p322 = pneg %p218
        $region38: #{gcm_forward.2} parent=11 // pred_check_branch
          %324 = sbr.rel (%p322) target = $region40
        $region39: #{gcm_forward.2} parent=11 // pred_region
          %s326 = ssub.s32 128, 128
          %327 = vsyncadd [#allocation8], %s326
          %s329 = sshll.u32 [#allocation7], 4
          %s330 = int_to_ptr.vmem [resolvable:$true] %s329
          %332 = dma.hbm_to_vmem [thread:$0]  %s8, 128, %s330, [#allocation8]
        $region40: #{gcm_forward.2} parent=11 // pred_fallthru
          _
        // Predicated region
        $region41: #{gcm_forward.2} parent=11 // pred_check
          %p333 = pneg %p239
        $region42: #{gcm_forward.2} parent=11 // pred_check_branch
          %335 = sbr.rel (%p333) target = $region44
        $region43: #{gcm_forward.2} parent=11 // pred_region
          %s337 = ssub.s32 16, 16
          %338 = vsyncadd [#allocation8], %s337
          %s340 = sshll.u32 [#allocation9], 4
          %s341 = int_to_ptr.vmem [resolvable:$true] %s340
          %343 = dma.hbm_to_vmem [thread:$0]  %s9, 16, %s341, [#allocation8]
        $region44: #{gcm_forward.2} parent=11 // pred_fallthru
          _
      $region12: #{gcm_forward.2} parent=5 // pred_fallthru
        _
      %p344 = scmp.lt.s32.totalorder %s19, 2
      // Predicated region
      $region45: #{gcm_forward.2} parent=5 // pred_check
        %p345 = pneg %p344
      $region46: #{gcm_forward.2} parent=5 // pred_check_branch
        %347 = sbr.rel (%p345) target = $region48
      $region47: #{gcm_forward.2} parent=5 // pred_region
        // Predicated region
        $region49: #{gcm_forward.2} parent=47 // pred_check
          %p348 = pneg %p39
        $region50: #{gcm_forward.2} parent=47 // pred_check_branch
          %350 = sbr.rel (%p348) target = $region52
        $region51: #{gcm_forward.2} parent=47 // pred_region
          %p351 = scmp.lt.s32.totalorder %s19, 1
          %s352 = scalar_select %p351, %s19, 1
          %s353 = smul.addr %s352, 32
          %s354 = smul.addr %s353, 8
          %s355 = scalar_lea.vmem %s0, %s354
        $region52: #{gcm_forward.2} parent=47 // pred_fallthru
          _
        // Predicated region
        $region53: #{gcm_forward.2} parent=47 // pred_check
          %p356 = pneg %p65
        $region54: #{gcm_forward.2} parent=47 // pred_check_branch
          %358 = sbr.rel (%p356) target = $region56
        $region55: #{gcm_forward.2} parent=47 // pred_region
          %p359 = scmp.lt.s32.totalorder %s19, 1
          %s360 = scalar_select %p359, %s19, 1
          %s361 = smul.addr %s360, 8
          %s362 = smul.addr %s361, 8
          %s363 = scalar_lea.vmem %s1, %s362
        $region56: #{gcm_forward.2} parent=47 // pred_fallthru
          _
      $region48: #{gcm_forward.2} parent=5 // pred_fallthru
        _
      %p364 = scmp.le.s32.totalorder 1, %s19
      %p365 = scmp.lt.s32.totalorder %s19, 3
      %p366 = pnand %p364, %p365
      %p367 = pneg %p366
      // Predicated region
      $region57: #{gcm_forward.2} parent=5 // pred_check
        _
      $region58: #{gcm_forward.2} parent=5 // pred_check_branch
        %369 = sbr.rel (%p366) target = $region60
      $region59: #{gcm_forward.2} parent=5 // pred_region
        %s370 = ssub.s32 %s19, 1
        // Predicated region
        $region61: #{gcm_forward.2} parent=59 // pred_check
          %p371 = pneg %p113
        $region62: #{gcm_forward.2} parent=59 // pred_check_branch
          %373 = sbr.rel (%p371) target = $region64
        $region63: #{gcm_forward.2} parent=59 // pred_region
          %374 = dma.done [#allocation3], 16
        $region64: #{gcm_forward.2} parent=59 // pred_fallthru
          _
        // Predicated region
        $region65: #{gcm_forward.2} parent=59 // pred_check
          %p375 = pneg %p155
        $region66: #{gcm_forward.2} parent=59 // pred_check_branch
          %377 = sbr.rel (%p375) target = $region68
        $region67: #{gcm_forward.2} parent=59 // pred_region
          %378 = dma.done [#allocation5], 16
        $region68: #{gcm_forward.2} parent=59 // pred_fallthru
          _
        // Predicated region
        $region69: #{gcm_forward.2} parent=59 // pred_check
          %p379 = pneg %p197
        $region70: #{gcm_forward.2} parent=59 // pred_check_branch
          %381 = sbr.rel (%p379) target = $region72
        $region71: #{gcm_forward.2} parent=59 // pred_region
          %382 = dma.done [#allocation5], 16
        $region72: #{gcm_forward.2} parent=59 // pred_fallthru
          _
        // Predicated region
        $region73: #{gcm_forward.2} parent=59 // pred_check
          %p383 = pneg %p218
        $region74: #{gcm_forward.2} parent=59 // pred_check_branch
          %385 = sbr.rel (%p383) target = $region76
        $region75: #{gcm_forward.2} parent=59 // pred_region
          %386 = dma.done [#allocation8], 128
        $region76: #{gcm_forward.2} parent=59 // pred_fallthru
          _
        // Predicated region
        $region77: #{gcm_forward.2} parent=59 // pred_check
          %p387 = pneg %p239
        $region78: #{gcm_forward.2} parent=59 // pred_check_branch
          %389 = sbr.rel (%p387) target = $region80
        $region79: #{gcm_forward.2} parent=59 // pred_region
          %390 = dma.done [#allocation8], 16
        $region80: #{gcm_forward.2} parent=59 // pred_fallthru
          _
        %p391 = scmp.lt.s32.totalorder %s24, 1
        %s392 = scalar_select %p391, %s24, 1
        %s393 = smul.addr %s392, 32
        %s394 = smul.addr %s393, 8
        %s395 = scalar_lea.vmem %s0, %s394
        %p396 = pneg %p45
        %p397 = pneg %p42
        %p398 = scmp.lt.s32.totalorder %s24, 1
        %s399 = scalar_select %p398, %s24, 1
        %s400 = smul.addr %s399, 8
        %s401 = smul.addr %s400, 8
        %s402 = scalar_lea.vmem %s1, %s401
        %p403 = pneg %p71
        %p404 = pneg %p68
        %p405 = pneg %p92
        %p406 = pneg %p89
        %p407 = pneg %p113
        %p408 = pneg %p110
        %p409 = pneg %p134
        %p410 = pneg %p131
        %p411 = pneg %p155
        %p412 = pneg %p152
        %p413 = pneg %p176
        %p414 = pneg %p173
        %p415 = pneg %p197
        %p416 = pneg %p194
        %p417 = pneg %p218
        %p418 = pneg %p215
        %p419 = pneg %p239
        %p420 = pneg %p236
        %p421 = pneg %p265
        %p422 = pneg %p262
        %p423 = scmp.lt.s32.totalorder %s24, 1
        %s424 = scalar_select %p423, %s24, 1
        %s425 = smul.addr %s424, 32
        %s426 = smul.addr %s425, 8
        %s427 = scalar_lea.vmem %s10, %s426
        %p428 = scmp.lt.s32.totalorder %s24, 1
        %s429 = scalar_select %p428, %s24, 1
        %s430 = smul.addr %s429, 32
        %s431 = smul.addr %s430, 8
        %s432 = scalar_lea.vmem %s0, %s431
        %p433 = scmp.lt.s32.totalorder %s24, 1
        %s434 = scalar_select %p433, %s24, 1
        %s435 = smul.addr %s434, 8
        %s436 = smul.addr %s435, 8
        %s437 = scalar_lea.vmem %s1, %s436
        %p438 = scmp.lt.s32.totalorder %s24, 1
        %s439 = scalar_select %p438, %s24, 1
        %s440 = smul.addr %s439, 32
        %s441 = smul.addr %s440, 8
        %s442 = scalar_lea.vmem %s10, %s441
        %v443 = vld [vmem:[%s432] sm:$0xff]
        %v444 = vld [vmem:[%s432 + $0x8] sm:$0xff]
        %v445 = vld [vmem:[%s432 + $0x10] sm:$0xff]
        %v446 = vld [vmem:[%s432 + $0x18] sm:$0xff]
        %v447 = vld [vmem:[%s432 + $0x20] sm:$0xff]
        %v448 = vld [vmem:[%s432 + $0x28] sm:$0xff]
        %v449 = vld [vmem:[%s432 + $0x30] sm:$0xff]
        %v450 = vld [vmem:[%s432 + $0x38] sm:$0xff]
        %v451 = vld [vmem:[%s432 + $0x40] sm:$0xff]
        %v452 = vld [vmem:[%s432 + $0x48] sm:$0xff]
        %v453 = vld [vmem:[%s432 + $0x50] sm:$0xff]
        %v454 = vld [vmem:[%s432 + $0x58] sm:$0xff]
        %v455 = vld [vmem:[%s432 + $0x60] sm:$0xff]
        %v456 = vld [vmem:[%s432 + $0x68] sm:$0xff]
        %v457 = vld [vmem:[%s432 + $0x70] sm:$0xff]
        %v458 = vld [vmem:[%s432 + $0x78] sm:$0xff]
        %v459 = vld [vmem:[%s432 + $0x80] sm:$0xff]
        %v460 = vld [vmem:[%s432 + $0x88] sm:$0xff]
        %v461 = vld [vmem:[%s432 + $0x90] sm:$0xff]
        %v462 = vld [vmem:[%s432 + $0x98] sm:$0xff]
        %v463 = vld [vmem:[%s432 + $0xa0] sm:$0xff]
        %v464 = vld [vmem:[%s432 + $0xa8] sm:$0xff]
        %v465 = vld [vmem:[%s432 + $0xb0] sm:$0xff]
        %v466 = vld [vmem:[%s432 + $0xb8] sm:$0xff]
        %v467 = vld [vmem:[%s432 + $0xc0] sm:$0xff]
        %v468 = vld [vmem:[%s432 + $0xc8] sm:$0xff]
        %v469 = vld [vmem:[%s432 + $0xd0] sm:$0xff]
        %v470 = vld [vmem:[%s432 + $0xd8] sm:$0xff]
        %v471 = vld [vmem:[%s432 + $0xe0] sm:$0xff]
        %v472 = vld [vmem:[%s432 + $0xe8] sm:$0xff]
        %v473 = vld [vmem:[%s432 + $0xf0] sm:$0xff]
        %v474 = vld [vmem:[%s432 + $0xf8] sm:$0xff]
        %v475 = vld [vmem:[%s437] sm:$0xff]
        %v476 = vld [vmem:[%s437 + $0x8] sm:$0xff]
        %v477 = vld [vmem:[%s437 + $0x10] sm:$0xff]
        %v478 = vld [vmem:[%s437 + $0x18] sm:$0xff]
        %v479 = vld [vmem:[%s437 + $0x20] sm:$0xff]
        %v480 = vld [vmem:[%s437 + $0x28] sm:$0xff]
        %v481 = vld [vmem:[%s437 + $0x30] sm:$0xff]
        %v482 = vld [vmem:[%s437 + $0x38] sm:$0xff]
        %v483 = vld [vmem:[%s2] sm:$0xff]
        %v484 = vld [vmem:[%s2 + $0x8] sm:$0xff]
        %v485 = vld [vmem:[#allocation2] sm:$0x1]
        %v487 = vlaneseq
        %v488 = vshrl.u32 %v487, 7
        %v489 = vsub.s32 0, %v488
        %v490 = vrot.slane %v485, %v489
        %vm492 = vcmask 130048
        %v494 = vsel %vm492, %v443, 0
        %v497 = vsel %vm492, %v444, 0
        %v500 = vsel %vm492, %v445, 0
        %v503 = vsel %vm492, %v446, 0
        %v506 = vsel %vm492, %v447, 0
        %v509 = vsel %vm492, %v448, 0
        %v512 = vsel %vm492, %v449, 0
        %v515 = vsel %vm492, %v450, 0
        %v518 = vsel %vm492, %v451, 0
        %v521 = vsel %vm492, %v452, 0
        %v524 = vsel %vm492, %v453, 0
        %v527 = vsel %vm492, %v454, 0
        %v530 = vsel %vm492, %v455, 0
        %v533 = vsel %vm492, %v456, 0
        %v536 = vsel %vm492, %v457, 0
        %v539 = vsel %vm492, %v458, 0
        %v542 = vsel %vm492, %v459, 0
        %v545 = vsel %vm492, %v460, 0
        %v548 = vsel %vm492, %v461, 0
        %v551 = vsel %vm492, %v462, 0
        %v554 = vsel %vm492, %v463, 0
        %v557 = vsel %vm492, %v464, 0
        %v560 = vsel %vm492, %v465, 0
        %v563 = vsel %vm492, %v466, 0
        %v566 = vsel %vm492, %v467, 0
        %v569 = vsel %vm492, %v468, 0
        %v572 = vsel %vm492, %v469, 0
        %v575 = vsel %vm492, %v470, 0
        %v578 = vsel %vm492, %v471, 0
        %v581 = vsel %vm492, %v472, 0
        %v584 = vsel %vm492, %v473, 0
        %v587 = vsel %vm492, %v474, 0
        %589 = vmatprep.subr.mxu0 0.0
        %590 = vmatpush1.msra.mxu0 0.0
        %591 = vmatprep.subr.mxu0 0.0
        %592 = vmatpush1.msra.mxu0 0.0
        %593 = vmatprep.subr.mxu0 0.0
        %594 = vmatpush1.msra.mxu0 0.0
        %595 = vmatprep.subr.mxu0 0.0
        %596 = vmatpush1.msra.mxu0 0.0
        %597 = vmatprep.subr.mxu0 0.0
        %598 = vmatpush1.msra.mxu0 0.0
        %599 = vmatprep.subr.mxu0 0.0
        %600 = vmatpush1.msra.mxu0 0.0
        %601 = vmatprep.subr.mxu0 0.0
        %602 = vmatpush1.msra.mxu0 0.0
        %603 = vmatprep.subr.mxu0 0.0
        %604 = vmatpush1.msra.mxu0 0.0
        %605 = vmatprep.subr.mxu0 0.0
        %606 = vmatpush1.msra.mxu0 0.0
        %607 = vmatprep.subr.mxu0 0.0
        %608 = vmatpush1.msra.mxu0 0.0
        %609 = vmatprep.subr.mxu0 0.0
        %610 = vmatpush1.msra.mxu0 0.0
        %611 = vmatprep.subr.mxu0 0.0
        %612 = vmatpush1.msra.mxu0 0.0
        %613 = vmatprep.subr.mxu0 0.0
        %614 = vmatpush1.msra.mxu0 0.0
        %615 = vmatprep.subr.mxu0 0.0
        %616 = vmatpush1.msra.mxu0 0.0
        %617 = vmatprep.subr.mxu0 0.0
        %618 = vmatpush1.msra.mxu0 %v484
        %619 = vmatprep.subr.mxu0 0.0
        %620 = vmatpush1.msra.mxu0 %v483
        %621 = vmatprep.subr.mxu0 0.0
        %622 = vmatpush2.msra.mxu0 0.0
        %623 = vmatprep.subr.mxu0 0.0
        %624 = vmatpush2.msra.mxu0 0.0
        %625 = vmatprep.subr.mxu0 0.0
        %626 = vmatpush2.msra.mxu0 0.0
        %627 = vmatprep.subr.mxu0 0.0
        %628 = vmatpush2.msra.mxu0 0.0
        %629 = vmatprep.subr.mxu0 0.0
        %630 = vmatpush2.msra.mxu0 0.0
        %631 = vmatprep.subr.mxu0 0.0
        %632 = vmatpush2.msra.mxu0 0.0
        %633 = vmatprep.subr.mxu0 0.0
        %634 = vmatpush2.msra.mxu0 0.0
        %635 = vmatprep.subr.mxu0 0.0
        %636 = vmatpush2.msra.mxu0 0.0
        %637 = vmatprep.subr.mxu0 0.0
        %638 = vmatpush2.msra.mxu0 0.0
        %639 = vmatprep.subr.mxu0 0.0
        %640 = vmatpush2.msra.mxu0 0.0
        %641 = vmatprep.subr.mxu0 0.0
        %642 = vmatpush2.msra.mxu0 0.0
        %643 = vmatprep.subr.mxu0 0.0
        %644 = vmatpush2.msra.mxu0 0.0
        %645 = vmatprep.subr.mxu0 0.0
        %646 = vmatpush2.msra.mxu0 0.0
        %647 = vmatprep.subr.mxu0 0.0
        %648 = vmatpush2.msra.mxu0 0.0
        %649 = vmatprep.subr.mxu0 0.0
        %650 = vmatpush2.msra.mxu0 0.0
        %651 = vmatprep.subr.mxu0 0.0
        %652 = vmatpush2.msra.mxu0 0.0
        %653 = vmatprep.mubr.f32.mxu0 0.0
        %654 = vmatmul.mubr.f32.gmra.mxu0 %v494
        %v655 = vpop.f32.mrf.mxu0
        %v656 = vadd.f32 %v490, %v655
        %v657 = vpop.f32.mrf.mxu0
        %658 = vmatprep.mubr.f32.mxu0 0.0
        %659 = vmatmul.mubr.f32.gmra.mxu0 %v497
        %v660 = vpop.f32.mrf.mxu0
        %v661 = vadd.f32 %v490, %v660
        %v662 = vpop.f32.mrf.mxu0
        %663 = vmatprep.mubr.f32.mxu0 0.0
        %664 = vmatmul.mubr.f32.gmra.mxu0 %v500
        %v665 = vpop.f32.mrf.mxu0
        %v666 = vadd.f32 %v490, %v665
        %v667 = vpop.f32.mrf.mxu0
        %668 = vmatprep.mubr.f32.mxu0 0.0
        %669 = vmatmul.mubr.f32.gmra.mxu0 %v503
        %v670 = vpop.f32.mrf.mxu0
        %v671 = vadd.f32 %v490, %v670
        %v672 = vpop.f32.mrf.mxu0
        %673 = vmatprep.mubr.f32.mxu0 0.0
        %674 = vmatmul.mubr.f32.gmra.mxu0 %v506
        %v675 = vpop.f32.mrf.mxu0
        %v676 = vadd.f32 %v490, %v675
        %v677 = vpop.f32.mrf.mxu0
        %678 = vmatprep.mubr.f32.mxu0 0.0
        %679 = vmatmul.mubr.f32.gmra.mxu0 %v509
        %v680 = vpop.f32.mrf.mxu0
        %v681 = vadd.f32 %v490, %v680
        %v682 = vpop.f32.mrf.mxu0
        %683 = vmatprep.mubr.f32.mxu0 0.0
        %684 = vmatmul.mubr.f32.gmra.mxu0 %v512
        %v685 = vpop.f32.mrf.mxu0
        %v686 = vadd.f32 %v490, %v685
        %v687 = vpop.f32.mrf.mxu0
        %688 = vmatprep.mubr.f32.mxu0 0.0
        %689 = vmatmul.mubr.f32.gmra.mxu0 %v515
        %v690 = vpop.f32.mrf.mxu0
        %v691 = vadd.f32 %v490, %v690
        %v692 = vpop.f32.mrf.mxu0
        %693 = vmatprep.mubr.f32.mxu0 0.0
        %694 = vmatmul.mubr.f32.gmra.mxu0 %v518
        %v695 = vpop.f32.mrf.mxu0
        %v696 = vadd.f32 %v490, %v695
        %v697 = vpop.f32.mrf.mxu0
        %698 = vmatprep.mubr.f32.mxu0 0.0
        %699 = vmatmul.mubr.f32.gmra.mxu0 %v521
        %v700 = vpop.f32.mrf.mxu0
        %v701 = vadd.f32 %v490, %v700
        %v702 = vpop.f32.mrf.mxu0
        %703 = vmatprep.mubr.f32.mxu0 0.0
        %704 = vmatmul.mubr.f32.gmra.mxu0 %v524
        %v705 = vpop.f32.mrf.mxu0
        %v706 = vadd.f32 %v490, %v705
        %v707 = vpop.f32.mrf.mxu0
        %708 = vmatprep.mubr.f32.mxu0 0.0
        %709 = vmatmul.mubr.f32.gmra.mxu0 %v527
        %v710 = vpop.f32.mrf.mxu0
        %v711 = vadd.f32 %v490, %v710
        %v712 = vpop.f32.mrf.mxu0
        %713 = vmatprep.mubr.f32.mxu0 0.0
        %714 = vmatmul.mubr.f32.gmra.mxu0 %v530
        %v715 = vpop.f32.mrf.mxu0
        %v716 = vadd.f32 %v490, %v715
        %v717 = vpop.f32.mrf.mxu0
        %718 = vmatprep.mubr.f32.mxu0 0.0
        %719 = vmatmul.mubr.f32.gmra.mxu0 %v533
        %v720 = vpop.f32.mrf.mxu0
        %v721 = vadd.f32 %v490, %v720
        %v722 = vpop.f32.mrf.mxu0
        %723 = vmatprep.mubr.f32.mxu0 0.0
        %724 = vmatmul.mubr.f32.gmra.mxu0 %v536
        %v725 = vpop.f32.mrf.mxu0
        %v726 = vadd.f32 %v490, %v725
        %v727 = vpop.f32.mrf.mxu0
        %728 = vmatprep.mubr.f32.mxu0 0.0
        %729 = vmatmul.mubr.f32.gmra.mxu0 %v539
        %v730 = vpop.f32.mrf.mxu0
        %v731 = vadd.f32 %v490, %v730
        %v732 = vpop.f32.mrf.mxu0
        %733 = vmatprep.mubr.f32.mxu0 0.0
        %734 = vmatmul.mubr.f32.gmra.mxu0 %v542
        %v735 = vpop.f32.mrf.mxu0
        %v736 = vadd.f32 %v490, %v735
        %v737 = vpop.f32.mrf.mxu0
        %738 = vmatprep.mubr.f32.mxu0 0.0
        %739 = vmatmul.mubr.f32.gmra.mxu0 %v545
        %v740 = vpop.f32.mrf.mxu0
        %v741 = vadd.f32 %v490, %v740
        %v742 = vpop.f32.mrf.mxu0
        %743 = vmatprep.mubr.f32.mxu0 0.0
        %744 = vmatmul.mubr.f32.gmra.mxu0 %v548
        %v745 = vpop.f32.mrf.mxu0
        %v746 = vadd.f32 %v490, %v745
        %v747 = vpop.f32.mrf.mxu0
        %748 = vmatprep.mubr.f32.mxu0 0.0
        %749 = vmatmul.mubr.f32.gmra.mxu0 %v551
        %v750 = vpop.f32.mrf.mxu0
        %v751 = vadd.f32 %v490, %v750
        %v752 = vpop.f32.mrf.mxu0
        %753 = vmatprep.mubr.f32.mxu0 0.0
        %754 = vmatmul.mubr.f32.gmra.mxu0 %v554
        %v755 = vpop.f32.mrf.mxu0
        %v756 = vadd.f32 %v490, %v755
        %v757 = vpop.f32.mrf.mxu0
        %758 = vmatprep.mubr.f32.mxu0 0.0
        %759 = vmatmul.mubr.f32.gmra.mxu0 %v557
        %v760 = vpop.f32.mrf.mxu0
        %v761 = vadd.f32 %v490, %v760
        %v762 = vpop.f32.mrf.mxu0
        %763 = vmatprep.mubr.f32.mxu0 0.0
        %764 = vmatmul.mubr.f32.gmra.mxu0 %v560
        %v765 = vpop.f32.mrf.mxu0
        %v766 = vadd.f32 %v490, %v765
        %v767 = vpop.f32.mrf.mxu0
        %768 = vmatprep.mubr.f32.mxu0 0.0
        %769 = vmatmul.mubr.f32.gmra.mxu0 %v563
        %v770 = vpop.f32.mrf.mxu0
        %v771 = vadd.f32 %v490, %v770
        %v772 = vpop.f32.mrf.mxu0
        %773 = vmatprep.mubr.f32.mxu0 0.0
        %774 = vmatmul.mubr.f32.gmra.mxu0 %v566
        %v775 = vpop.f32.mrf.mxu0
        %v776 = vadd.f32 %v490, %v775
        %v777 = vpop.f32.mrf.mxu0
        %778 = vmatprep.mubr.f32.mxu0 0.0
        %779 = vmatmul.mubr.f32.gmra.mxu0 %v569
        %v780 = vpop.f32.mrf.mxu0
        %v781 = vadd.f32 %v490, %v780
        %v782 = vpop.f32.mrf.mxu0
        %783 = vmatprep.mubr.f32.mxu0 0.0
        %784 = vmatmul.mubr.f32.gmra.mxu0 %v572
        %v785 = vpop.f32.mrf.mxu0
        %v786 = vadd.f32 %v490, %v785
        %v787 = vpop.f32.mrf.mxu0
        %788 = vmatprep.mubr.f32.mxu0 0.0
        %789 = vmatmul.mubr.f32.gmra.mxu0 %v575
        %v790 = vpop.f32.mrf.mxu0
        %v791 = vadd.f32 %v490, %v790
        %v792 = vpop.f32.mrf.mxu0
        %793 = vmatprep.mubr.f32.mxu0 0.0
        %794 = vmatmul.mubr.f32.gmra.mxu0 %v578
        %v795 = vpop.f32.mrf.mxu0
        %v796 = vadd.f32 %v490, %v795
        %v797 = vpop.f32.mrf.mxu0
        %798 = vmatprep.mubr.f32.mxu0 0.0
        %799 = vmatmul.mubr.f32.gmra.mxu0 %v581
        %v800 = vpop.f32.mrf.mxu0
        %v801 = vadd.f32 %v490, %v800
        %v802 = vpop.f32.mrf.mxu0
        %803 = vmatprep.mubr.f32.mxu0 0.0
        %804 = vmatmul.mubr.f32.gmra.mxu0 %v584
        %v805 = vpop.f32.mrf.mxu0
        %v806 = vadd.f32 %v490, %v805
        %v807 = vpop.f32.mrf.mxu0
        %808 = vmatprep.mubr.f32.mxu0 0.0
        %809 = vmatmul.mubr.f32.gmra.mxu0 %v587
        %v810 = vpop.f32.mrf.mxu0
        %v811 = vadd.f32 %v490, %v810
        %v812 = vpop.f32.mrf.mxu0
        %813 = vdwg.mxu0
        %v814 = vld [vmem:[%s4] sm:$0xff]
        %v815 = vld [vmem:[%s4 + $0x8] sm:$0xff]
        %v816 = vld [vmem:[#allocation4] sm:$0x1]
        %v818 = vlaneseq
        %v819 = vshrl.u32 %v818, 7
        %v820 = vsub.s32 0, %v819
        %v821 = vrot.slane %v816, %v820
        %v824 = vsel %vm492, %v475, 0
        %v827 = vsel %vm492, %v476, 0
        %v830 = vsel %vm492, %v477, 0
        %v833 = vsel %vm492, %v478, 0
        %v836 = vsel %vm492, %v479, 0
        %v839 = vsel %vm492, %v480, 0
        %v842 = vsel %vm492, %v481, 0
        %v845 = vsel %vm492, %v482, 0
        %847 = vmatprep.subr.mxu0 0.0
        %848 = vmatpush1.msra.mxu0 0.0
        %849 = vmatprep.subr.mxu0 0.0
        %850 = vmatpush1.msra.mxu0 0.0
        %851 = vmatprep.subr.mxu0 0.0
        %852 = vmatpush1.msra.mxu0 0.0
        %853 = vmatprep.subr.mxu0 0.0
        %854 = vmatpush1.msra.mxu0 0.0
        %855 = vmatprep.subr.mxu0 0.0
        %856 = vmatpush1.msra.mxu0 0.0
        %857 = vmatprep.subr.mxu0 0.0
        %858 = vmatpush1.msra.mxu0 0.0
        %859 = vmatprep.subr.mxu0 0.0
        %860 = vmatpush1.msra.mxu0 0.0
        %861 = vmatprep.subr.mxu0 0.0
        %862 = vmatpush1.msra.mxu0 0.0
        %863 = vmatprep.subr.mxu0 0.0
        %864 = vmatpush1.msra.mxu0 0.0
        %865 = vmatprep.subr.mxu0 0.0
        %866 = vmatpush1.msra.mxu0 0.0
        %867 = vmatprep.subr.mxu0 0.0
        %868 = vmatpush1.msra.mxu0 0.0
        %869 = vmatprep.subr.mxu0 0.0
        %870 = vmatpush1.msra.mxu0 0.0
        %871 = vmatprep.subr.mxu0 0.0
        %872 = vmatpush1.msra.mxu0 0.0
        %873 = vmatprep.subr.mxu0 0.0
        %874 = vmatpush1.msra.mxu0 0.0
        %875 = vmatprep.subr.mxu0 0.0
        %876 = vmatpush1.msra.mxu0 %v815
        %877 = vmatprep.subr.mxu0 0.0
        %878 = vmatpush1.msra.mxu0 %v814
        %879 = vmatprep.subr.mxu0 0.0
        %880 = vmatpush2.msra.mxu0 0.0
        %881 = vmatprep.subr.mxu0 0.0
        %882 = vmatpush2.msra.mxu0 0.0
        %883 = vmatprep.subr.mxu0 0.0
        %884 = vmatpush2.msra.mxu0 0.0
        %885 = vmatprep.subr.mxu0 0.0
        %886 = vmatpush2.msra.mxu0 0.0
        %887 = vmatprep.subr.mxu0 0.0
        %888 = vmatpush2.msra.mxu0 0.0
        %889 = vmatprep.subr.mxu0 0.0
        %890 = vmatpush2.msra.mxu0 0.0
        %891 = vmatprep.subr.mxu0 0.0
        %892 = vmatpush2.msra.mxu0 0.0
        %893 = vmatprep.subr.mxu0 0.0
        %894 = vmatpush2.msra.mxu0 0.0
        %895 = vmatprep.subr.mxu0 0.0
        %896 = vmatpush2.msra.mxu0 0.0
        %897 = vmatprep.subr.mxu0 0.0
        %898 = vmatpush2.msra.mxu0 0.0
        %899 = vmatprep.subr.mxu0 0.0
        %900 = vmatpush2.msra.mxu0 0.0
        %901 = vmatprep.subr.mxu0 0.0
        %902 = vmatpush2.msra.mxu0 0.0
        %903 = vmatprep.subr.mxu0 0.0
        %904 = vmatpush2.msra.mxu0 0.0
        %905 = vmatprep.subr.mxu0 0.0
        %906 = vmatpush2.msra.mxu0 0.0
        %907 = vmatprep.subr.mxu0 0.0
        %908 = vmatpush2.msra.mxu0 0.0
        %909 = vmatprep.subr.mxu0 0.0
        %910 = vmatpush2.msra.mxu0 0.0
        %911 = vmatprep.mubr.f32.mxu0 0.0
        %912 = vmatmul.mubr.f32.gmra.mxu0 %v824
        %v913 = vpop.f32.mrf.mxu0
        %v914 = vadd.f32 %v821, %v913
        %v915 = vpop.f32.mrf.mxu0
        %916 = vmatprep.mubr.f32.mxu0 0.0
        %917 = vmatmul.mubr.f32.gmra.mxu0 %v827
        %v918 = vpop.f32.mrf.mxu0
        %v919 = vadd.f32 %v821, %v918
        %v920 = vpop.f32.mrf.mxu0
        %921 = vmatprep.mubr.f32.mxu0 0.0
        %922 = vmatmul.mubr.f32.gmra.mxu0 %v830
        %v923 = vpop.f32.mrf.mxu0
        %v924 = vadd.f32 %v821, %v923
        %v925 = vpop.f32.mrf.mxu0
        %926 = vmatprep.mubr.f32.mxu0 0.0
        %927 = vmatmul.mubr.f32.gmra.mxu0 %v833
        %v928 = vpop.f32.mrf.mxu0
        %v929 = vadd.f32 %v821, %v928
        %v930 = vpop.f32.mrf.mxu0
        %931 = vmatprep.mubr.f32.mxu0 0.0
        %932 = vmatmul.mubr.f32.gmra.mxu0 %v836
        %v933 = vpop.f32.mrf.mxu0
        %v934 = vadd.f32 %v821, %v933
        %v935 = vpop.f32.mrf.mxu0
        %936 = vmatprep.mubr.f32.mxu0 0.0
        %937 = vmatmul.mubr.f32.gmra.mxu0 %v839
        %v938 = vpop.f32.mrf.mxu0
        %v939 = vadd.f32 %v821, %v938
        %v940 = vpop.f32.mrf.mxu0
        %941 = vmatprep.mubr.f32.mxu0 0.0
        %942 = vmatmul.mubr.f32.gmra.mxu0 %v842
        %v943 = vpop.f32.mrf.mxu0
        %v944 = vadd.f32 %v821, %v943
        %v945 = vpop.f32.mrf.mxu0
        %946 = vmatprep.mubr.f32.mxu0 0.0
        %947 = vmatmul.mubr.f32.gmra.mxu0 %v845
        %v948 = vpop.f32.mrf.mxu0
        %v949 = vadd.f32 %v821, %v948
        %v950 = vpop.f32.mrf.mxu0
        %951 = vdwg.mxu0
        %v952 = vld [vmem:[%s6] sm:$0xff]
        %v953 = vld [vmem:[%s6 + $0x8] sm:$0xff]
        %v954 = vld [vmem:[#allocation6] sm:$0x1]
        %v956 = vlaneseq
        %v957 = vshrl.u32 %v956, 7
        %v958 = vsub.s32 0, %v957
        %v959 = vrot.slane %v954, %v958
        %961 = vmatprep.subr.mxu0 0.0
        %962 = vmatpush1.msra.mxu0 0.0
        %963 = vmatprep.subr.mxu0 0.0
        %964 = vmatpush1.msra.mxu0 0.0
        %965 = vmatprep.subr.mxu0 0.0
        %966 = vmatpush1.msra.mxu0 0.0
        %967 = vmatprep.subr.mxu0 0.0
        %968 = vmatpush1.msra.mxu0 0.0
        %969 = vmatprep.subr.mxu0 0.0
        %970 = vmatpush1.msra.mxu0 0.0
        %971 = vmatprep.subr.mxu0 0.0
        %972 = vmatpush1.msra.mxu0 0.0
        %973 = vmatprep.subr.mxu0 0.0
        %974 = vmatpush1.msra.mxu0 0.0
        %975 = vmatprep.subr.mxu0 0.0
        %976 = vmatpush1.msra.mxu0 0.0
        %977 = vmatprep.subr.mxu0 0.0
        %978 = vmatpush1.msra.mxu0 0.0
        %979 = vmatprep.subr.mxu0 0.0
        %980 = vmatpush1.msra.mxu0 0.0
        %981 = vmatprep.subr.mxu0 0.0
        %982 = vmatpush1.msra.mxu0 0.0
        %983 = vmatprep.subr.mxu0 0.0
        %984 = vmatpush1.msra.mxu0 0.0
        %985 = vmatprep.subr.mxu0 0.0
        %986 = vmatpush1.msra.mxu0 0.0
        %987 = vmatprep.subr.mxu0 0.0
        %988 = vmatpush1.msra.mxu0 0.0
        %989 = vmatprep.subr.mxu0 0.0
        %990 = vmatpush1.msra.mxu0 %v953
        %991 = vmatprep.subr.mxu0 0.0
        %992 = vmatpush1.msra.mxu0 %v952
        %993 = vmatprep.subr.mxu0 0.0
        %994 = vmatpush2.msra.mxu0 0.0
        %995 = vmatprep.subr.mxu0 0.0
        %996 = vmatpush2.msra.mxu0 0.0
        %997 = vmatprep.subr.mxu0 0.0
        %998 = vmatpush2.msra.mxu0 0.0
        %999 = vmatprep.subr.mxu0 0.0
        %1000 = vmatpush2.msra.mxu0 0.0
        %1001 = vmatprep.subr.mxu0 0.0
        %1002 = vmatpush2.msra.mxu0 0.0
        %1003 = vmatprep.subr.mxu0 0.0
        %1004 = vmatpush2.msra.mxu0 0.0
        %1005 = vmatprep.subr.mxu0 0.0
        %1006 = vmatpush2.msra.mxu0 0.0
        %1007 = vmatprep.subr.mxu0 0.0
        %1008 = vmatpush2.msra.mxu0 0.0
        %1009 = vmatprep.subr.mxu0 0.0
        %1010 = vmatpush2.msra.mxu0 0.0
        %1011 = vmatprep.subr.mxu0 0.0
        %1012 = vmatpush2.msra.mxu0 0.0
        %1013 = vmatprep.subr.mxu0 0.0
        %1014 = vmatpush2.msra.mxu0 0.0
        %1015 = vmatprep.subr.mxu0 0.0
        %1016 = vmatpush2.msra.mxu0 0.0
        %1017 = vmatprep.subr.mxu0 0.0
        %1018 = vmatpush2.msra.mxu0 0.0
        %1019 = vmatprep.subr.mxu0 0.0
        %1020 = vmatpush2.msra.mxu0 0.0
        %1021 = vmatprep.subr.mxu0 0.0
        %1022 = vmatpush2.msra.mxu0 0.0
        %1023 = vmatprep.subr.mxu0 0.0
        %1024 = vmatpush2.msra.mxu0 0.0
        %1025 = vmatprep.mubr.f32.mxu0 0.0
        %1026 = vmatmul.mubr.f32.gmra.mxu0 %v824
        %v1027 = vpop.f32.mrf.mxu0
        %v1028 = vadd.f32 %v959, %v1027
        %v1029 = vpop.f32.mrf.mxu0
        %1030 = vmatprep.mubr.f32.mxu0 0.0
        %1031 = vmatmul.mubr.f32.gmra.mxu0 %v827
        %v1032 = vpop.f32.mrf.mxu0
        %v1033 = vadd.f32 %v959, %v1032
        %v1034 = vpop.f32.mrf.mxu0
        %1035 = vmatprep.mubr.f32.mxu0 0.0
        %1036 = vmatmul.mubr.f32.gmra.mxu0 %v830
        %v1037 = vpop.f32.mrf.mxu0
        %v1038 = vadd.f32 %v959, %v1037
        %v1039 = vpop.f32.mrf.mxu0
        %1040 = vmatprep.mubr.f32.mxu0 0.0
        %1041 = vmatmul.mubr.f32.gmra.mxu0 %v833
        %v1042 = vpop.f32.mrf.mxu0
        %v1043 = vadd.f32 %v959, %v1042
        %v1044 = vpop.f32.mrf.mxu0
        %1045 = vmatprep.mubr.f32.mxu0 0.0
        %1046 = vmatmul.mubr.f32.gmra.mxu0 %v836
        %v1047 = vpop.f32.mrf.mxu0
        %v1048 = vadd.f32 %v959, %v1047
        %v1049 = vpop.f32.mrf.mxu0
        %1050 = vmatprep.mubr.f32.mxu0 0.0
        %1051 = vmatmul.mubr.f32.gmra.mxu0 %v839
        %v1052 = vpop.f32.mrf.mxu0
        %v1053 = vadd.f32 %v959, %v1052
        %v1054 = vpop.f32.mrf.mxu0
        %1055 = vmatprep.mubr.f32.mxu0 0.0
        %1056 = vmatmul.mubr.f32.gmra.mxu0 %v842
        %v1057 = vpop.f32.mrf.mxu0
        %v1058 = vadd.f32 %v959, %v1057
        %v1059 = vpop.f32.mrf.mxu0
        %1060 = vmatprep.mubr.f32.mxu0 0.0
        %1061 = vmatmul.mubr.f32.gmra.mxu0 %v845
        %v1062 = vpop.f32.mrf.mxu0
        %v1063 = vadd.f32 %v959, %v1062
        %v1064 = vpop.f32.mrf.mxu0
        %1065 = vdwg.mxu0
        %vm1066 = vcmask 64512
        %v1068 = vsel %vm1066, %v656, 0
        %v1071 = vsel %vm1066, %v661, 0
        %v1074 = vsel %vm1066, %v666, 0
        %v1077 = vsel %vm1066, %v671, 0
        %v1080 = vsel %vm1066, %v676, 0
        %v1083 = vsel %vm1066, %v681, 0
        %v1086 = vsel %vm1066, %v686, 0
        %v1089 = vsel %vm1066, %v691, 0
        %v1092 = vsel %vm1066, %v696, 0
        %v1095 = vsel %vm1066, %v701, 0
        %v1098 = vsel %vm1066, %v706, 0
        %v1101 = vsel %vm1066, %v711, 0
        %v1104 = vsel %vm1066, %v716, 0
        %v1107 = vsel %vm1066, %v721, 0
        %v1110 = vsel %vm1066, %v726, 0
        %v1113 = vsel %vm1066, %v731, 0
        %v1116 = vsel %vm1066, %v736, 0
        %v1119 = vsel %vm1066, %v741, 0
        %v1122 = vsel %vm1066, %v746, 0
        %v1125 = vsel %vm1066, %v751, 0
        %v1128 = vsel %vm1066, %v756, 0
        %v1131 = vsel %vm1066, %v761, 0
        %v1134 = vsel %vm1066, %v766, 0
        %v1137 = vsel %vm1066, %v771, 0
        %v1140 = vsel %vm1066, %v776, 0
        %v1143 = vsel %vm1066, %v781, 0
        %v1146 = vsel %vm1066, %v786, 0
        %v1149 = vsel %vm1066, %v791, 0
        %v1152 = vsel %vm1066, %v796, 0
        %v1155 = vsel %vm1066, %v801, 0
        %v1158 = vsel %vm1066, %v806, 0
        %v1161 = vsel %vm1066, %v811, 0
        %v1164 = vsel %vm1066, %v1028, 0
        %v1167 = vsel %vm1066, %v1033, 0
        %v1170 = vsel %vm1066, %v1038, 0
        %v1173 = vsel %vm1066, %v1043, 0
        %v1176 = vsel %vm1066, %v1048, 0
        %v1179 = vsel %vm1066, %v1053, 0
        %v1182 = vsel %vm1066, %v1058, 0
        %v1185 = vsel %vm1066, %v1063, 0
        %1187 = vmatprep.subr.mxu0 0.0
        %1188 = vmatpush1.xpose.msra.mxu0 0.0
        %1189 = vmatprep.subr.mxu0 0.0
        %1190 = vmatpush1.xpose.msra.mxu0 0.0
        %1191 = vmatprep.subr.mxu0 0.0
        %1192 = vmatpush1.xpose.msra.mxu0 0.0
        %1193 = vmatprep.subr.mxu0 0.0
        %1194 = vmatpush1.xpose.msra.mxu0 0.0
        %1195 = vmatprep.subr.mxu0 0.0
        %1196 = vmatpush1.xpose.msra.mxu0 0.0
        %1197 = vmatprep.subr.mxu0 0.0
        %1198 = vmatpush1.xpose.msra.mxu0 0.0
        %1199 = vmatprep.subr.mxu0 0.0
        %1200 = vmatpush1.xpose.msra.mxu0 0.0
        %1201 = vmatprep.subr.mxu0 0.0
        %1202 = vmatpush1.xpose.msra.mxu0 0.0
        %1203 = vmatprep.subr.mxu0 0.0
        %1204 = vmatpush1.xpose.msra.mxu0 %v1185
        %1205 = vmatprep.subr.mxu0 0.0
        %1206 = vmatpush1.xpose.msra.mxu0 %v1182
        %1207 = vmatprep.subr.mxu0 0.0
        %1208 = vmatpush1.xpose.msra.mxu0 %v1179
        %1209 = vmatprep.subr.mxu0 0.0
        %1210 = vmatpush1.xpose.msra.mxu0 %v1176
        %1211 = vmatprep.subr.mxu0 0.0
        %1212 = vmatpush1.xpose.msra.mxu0 %v1173
        %1213 = vmatprep.subr.mxu0 0.0
        %1214 = vmatpush1.xpose.msra.mxu0 %v1170
        %1215 = vmatprep.subr.mxu0 0.0
        %1216 = vmatpush1.xpose.msra.mxu0 %v1167
        %1217 = vmatprep.subr.mxu0 0.0
        %1218 = vmatpush1.xpose.msra.mxu0 %v1164
        %1219 = vmatprep.subr.mxu0 0.0
        %1220 = vmatpush2.xpose.msra.mxu0 0.0
        %1221 = vmatprep.subr.mxu0 0.0
        %1222 = vmatpush2.xpose.msra.mxu0 0.0
        %1223 = vmatprep.subr.mxu0 0.0
        %1224 = vmatpush2.xpose.msra.mxu0 0.0
        %1225 = vmatprep.subr.mxu0 0.0
        %1226 = vmatpush2.xpose.msra.mxu0 0.0
        %1227 = vmatprep.subr.mxu0 0.0
        %1228 = vmatpush2.xpose.msra.mxu0 0.0
        %1229 = vmatprep.subr.mxu0 0.0
        %1230 = vmatpush2.xpose.msra.mxu0 0.0
        %1231 = vmatprep.subr.mxu0 0.0
        %1232 = vmatpush2.xpose.msra.mxu0 0.0
        %1233 = vmatprep.subr.mxu0 0.0
        %1234 = vmatpush2.xpose.msra.mxu0 0.0
        %1235 = vmatprep.subr.mxu0 0.0
        %1236 = vmatpush2.xpose.msra.mxu0 0.0
        %1237 = vmatprep.subr.mxu0 0.0
        %1238 = vmatpush2.xpose.msra.mxu0 0.0
        %1239 = vmatprep.subr.mxu0 0.0
        %1240 = vmatpush2.xpose.msra.mxu0 0.0
        %1241 = vmatprep.subr.mxu0 0.0
        %1242 = vmatpush2.xpose.msra.mxu0 0.0
        %1243 = vmatprep.subr.mxu0 0.0
        %1244 = vmatpush2.xpose.msra.mxu0 0.0
        %1245 = vmatprep.subr.mxu0 0.0
        %1246 = vmatpush2.xpose.msra.mxu0 0.0
        %1247 = vmatprep.subr.mxu0 0.0
        %1248 = vmatpush2.xpose.msra.mxu0 0.0
        %1249 = vmatprep.subr.mxu0 0.0
        %1250 = vmatpush2.xpose.msra.mxu0 0.0
        %1251 = vmatprep.mubr.f32.mxu0 0.0
        %1252 = vmatmul.mubr.f32.gmra.mxu0 %v1068
        %v1253 = vpop.f32.mrf.mxu0
        %v1254 = vadd.f32 0.0, %v1253
        %v1255 = vpop.f32.mrf.mxu0
        %1256 = vmatprep.mubr.f32.mxu0 0.0
        %1257 = vmatmul.mubr.f32.gmra.mxu0 %v1071
        %v1258 = vpop.f32.mrf.mxu0
        %v1259 = vadd.f32 0.0, %v1258
        %v1260 = vpop.f32.mrf.mxu0
        %1261 = vmatprep.mubr.f32.mxu0 0.0
        %1262 = vmatmul.mubr.f32.gmra.mxu0 %v1074
        %v1263 = vpop.f32.mrf.mxu0
        %v1264 = vadd.f32 0.0, %v1263
        %v1265 = vpop.f32.mrf.mxu0
        %1266 = vmatprep.mubr.f32.mxu0 0.0
        %1267 = vmatmul.mubr.f32.gmra.mxu0 %v1077
        %v1268 = vpop.f32.mrf.mxu0
        %v1269 = vadd.f32 0.0, %v1268
        %v1270 = vpop.f32.mrf.mxu0
        %1271 = vmatprep.mubr.f32.mxu0 0.0
        %1272 = vmatmul.mubr.f32.gmra.mxu0 %v1080
        %v1273 = vpop.f32.mrf.mxu0
        %v1274 = vadd.f32 0.0, %v1273
        %v1275 = vpop.f32.mrf.mxu0
        %1276 = vmatprep.mubr.f32.mxu0 0.0
        %1277 = vmatmul.mubr.f32.gmra.mxu0 %v1083
        %v1278 = vpop.f32.mrf.mxu0
        %v1279 = vadd.f32 0.0, %v1278
        %v1280 = vpop.f32.mrf.mxu0
        %1281 = vmatprep.mubr.f32.mxu0 0.0
        %1282 = vmatmul.mubr.f32.gmra.mxu0 %v1086
        %v1283 = vpop.f32.mrf.mxu0
        %v1284 = vadd.f32 0.0, %v1283
        %v1285 = vpop.f32.mrf.mxu0
        %1286 = vmatprep.mubr.f32.mxu0 0.0
        %1287 = vmatmul.mubr.f32.gmra.mxu0 %v1089
        %v1288 = vpop.f32.mrf.mxu0
        %v1289 = vadd.f32 0.0, %v1288
        %v1290 = vpop.f32.mrf.mxu0
        %1291 = vmatprep.mubr.f32.mxu0 0.0
        %1292 = vmatmul.mubr.f32.gmra.mxu0 %v1092
        %v1293 = vpop.f32.mrf.mxu0
        %v1294 = vadd.f32 0.0, %v1293
        %v1295 = vpop.f32.mrf.mxu0
        %1296 = vmatprep.mubr.f32.mxu0 0.0
        %1297 = vmatmul.mubr.f32.gmra.mxu0 %v1095
        %v1298 = vpop.f32.mrf.mxu0
        %v1299 = vadd.f32 0.0, %v1298
        %v1300 = vpop.f32.mrf.mxu0
        %1301 = vmatprep.mubr.f32.mxu0 0.0
        %1302 = vmatmul.mubr.f32.gmra.mxu0 %v1098
        %v1303 = vpop.f32.mrf.mxu0
        %v1304 = vadd.f32 0.0, %v1303
        %v1305 = vpop.f32.mrf.mxu0
        %1306 = vmatprep.mubr.f32.mxu0 0.0
        %1307 = vmatmul.mubr.f32.gmra.mxu0 %v1101
        %v1308 = vpop.f32.mrf.mxu0
        %v1309 = vadd.f32 0.0, %v1308
        %v1310 = vpop.f32.mrf.mxu0
        %1311 = vmatprep.mubr.f32.mxu0 0.0
        %1312 = vmatmul.mubr.f32.gmra.mxu0 %v1104
        %v1313 = vpop.f32.mrf.mxu0
        %v1314 = vadd.f32 0.0, %v1313
        %v1315 = vpop.f32.mrf.mxu0
        %1316 = vmatprep.mubr.f32.mxu0 0.0
        %1317 = vmatmul.mubr.f32.gmra.mxu0 %v1107
        %v1318 = vpop.f32.mrf.mxu0
        %v1319 = vadd.f32 0.0, %v1318
        %v1320 = vpop.f32.mrf.mxu0
        %1321 = vmatprep.mubr.f32.mxu0 0.0
        %1322 = vmatmul.mubr.f32.gmra.mxu0 %v1110
        %v1323 = vpop.f32.mrf.mxu0
        %v1324 = vadd.f32 0.0, %v1323
        %v1325 = vpop.f32.mrf.mxu0
        %1326 = vmatprep.mubr.f32.mxu0 0.0
        %1327 = vmatmul.mubr.f32.gmra.mxu0 %v1113
        %v1328 = vpop.f32.mrf.mxu0
        %v1329 = vadd.f32 0.0, %v1328
        %v1330 = vpop.f32.mrf.mxu0
        %1331 = vmatprep.mubr.f32.mxu0 0.0
        %1332 = vmatmul.mubr.f32.gmra.mxu0 %v1116
        %v1333 = vpop.f32.mrf.mxu0
        %v1334 = vadd.f32 0.0, %v1333
        %v1335 = vpop.f32.mrf.mxu0
        %1336 = vmatprep.mubr.f32.mxu0 0.0
        %1337 = vmatmul.mubr.f32.gmra.mxu0 %v1119
        %v1338 = vpop.f32.mrf.mxu0
        %v1339 = vadd.f32 0.0, %v1338
        %v1340 = vpop.f32.mrf.mxu0
        %1341 = vmatprep.mubr.f32.mxu0 0.0
        %1342 = vmatmul.mubr.f32.gmra.mxu0 %v1122
        %v1343 = vpop.f32.mrf.mxu0
        %v1344 = vadd.f32 0.0, %v1343
        %v1345 = vpop.f32.mrf.mxu0
        %1346 = vmatprep.mubr.f32.mxu0 0.0
        %1347 = vmatmul.mubr.f32.gmra.mxu0 %v1125
        %v1348 = vpop.f32.mrf.mxu0
        %v1349 = vadd.f32 0.0, %v1348
        %v1350 = vpop.f32.mrf.mxu0
        %1351 = vmatprep.mubr.f32.mxu0 0.0
        %1352 = vmatmul.mubr.f32.gmra.mxu0 %v1128
        %v1353 = vpop.f32.mrf.mxu0
        %v1354 = vadd.f32 0.0, %v1353
        %v1355 = vpop.f32.mrf.mxu0
        %1356 = vmatprep.mubr.f32.mxu0 0.0
        %1357 = vmatmul.mubr.f32.gmra.mxu0 %v1131
        %v1358 = vpop.f32.mrf.mxu0
        %v1359 = vadd.f32 0.0, %v1358
        %v1360 = vpop.f32.mrf.mxu0
        %1361 = vmatprep.mubr.f32.mxu0 0.0
        %1362 = vmatmul.mubr.f32.gmra.mxu0 %v1134
        %v1363 = vpop.f32.mrf.mxu0
        %v1364 = vadd.f32 0.0, %v1363
        %v1365 = vpop.f32.mrf.mxu0
        %1366 = vmatprep.mubr.f32.mxu0 0.0
        %1367 = vmatmul.mubr.f32.gmra.mxu0 %v1137
        %v1368 = vpop.f32.mrf.mxu0
        %v1369 = vadd.f32 0.0, %v1368
        %v1370 = vpop.f32.mrf.mxu0
        %1371 = vmatprep.mubr.f32.mxu0 0.0
        %1372 = vmatmul.mubr.f32.gmra.mxu0 %v1140
        %v1373 = vpop.f32.mrf.mxu0
        %v1374 = vadd.f32 0.0, %v1373
        %v1375 = vpop.f32.mrf.mxu0
        %1376 = vmatprep.mubr.f32.mxu0 0.0
        %1377 = vmatmul.mubr.f32.gmra.mxu0 %v1143
        %v1378 = vpop.f32.mrf.mxu0
        %v1379 = vadd.f32 0.0, %v1378
        %v1380 = vpop.f32.mrf.mxu0
        %1381 = vmatprep.mubr.f32.mxu0 0.0
        %1382 = vmatmul.mubr.f32.gmra.mxu0 %v1146
        %v1383 = vpop.f32.mrf.mxu0
        %v1384 = vadd.f32 0.0, %v1383
        %v1385 = vpop.f32.mrf.mxu0
        %1386 = vmatprep.mubr.f32.mxu0 0.0
        %1387 = vmatmul.mubr.f32.gmra.mxu0 %v1149
        %v1388 = vpop.f32.mrf.mxu0
        %v1389 = vadd.f32 0.0, %v1388
        %v1390 = vpop.f32.mrf.mxu0
        %1391 = vmatprep.mubr.f32.mxu0 0.0
        %1392 = vmatmul.mubr.f32.gmra.mxu0 %v1152
        %v1393 = vpop.f32.mrf.mxu0
        %v1394 = vadd.f32 0.0, %v1393
        %v1395 = vpop.f32.mrf.mxu0
        %1396 = vmatprep.mubr.f32.mxu0 0.0
        %1397 = vmatmul.mubr.f32.gmra.mxu0 %v1155
        %v1398 = vpop.f32.mrf.mxu0
        %v1399 = vadd.f32 0.0, %v1398
        %v1400 = vpop.f32.mrf.mxu0
        %1401 = vmatprep.mubr.f32.mxu0 0.0
        %1402 = vmatmul.mubr.f32.gmra.mxu0 %v1158
        %v1403 = vpop.f32.mrf.mxu0
        %v1404 = vadd.f32 0.0, %v1403
        %v1405 = vpop.f32.mrf.mxu0
        %1406 = vmatprep.mubr.f32.mxu0 0.0
        %1407 = vmatmul.mubr.f32.gmra.mxu0 %v1161
        %v1408 = vpop.f32.mrf.mxu0
        %v1409 = vadd.f32 0.0, %v1408
        %v1410 = vpop.f32.mrf.mxu0
        %1411 = vdwg.mxu0
        %vm1412 = vcmask 523264
        %v1413 = vsel %vm1412, %v1254, -inf
        %1414 = vmax.xlane.f32.xlu0 %v1413
        %v1415 = vpop.xlane.xlu0 %1414
        %v1416 = vsel %vm1412, %v1259, -inf
        %1417 = vmax.xlane.f32.xlu0 %v1416
        %v1418 = vpop.xlane.xlu0 %1417
        %v1419 = vsel %vm1412, %v1264, -inf
        %1420 = vmax.xlane.f32.xlu0 %v1419
        %v1421 = vpop.xlane.xlu0 %1420
        %v1422 = vsel %vm1412, %v1269, -inf
        %1423 = vmax.xlane.f32.xlu0 %v1422
        %v1424 = vpop.xlane.xlu0 %1423
        %v1425 = vsel %vm1412, %v1274, -inf
        %1426 = vmax.xlane.f32.xlu0 %v1425
        %v1427 = vpop.xlane.xlu0 %1426
        %v1428 = vsel %vm1412, %v1279, -inf
        %1429 = vmax.xlane.f32.xlu0 %v1428
        %v1430 = vpop.xlane.xlu0 %1429
        %v1431 = vsel %vm1412, %v1284, -inf
        %1432 = vmax.xlane.f32.xlu0 %v1431
        %v1433 = vpop.xlane.xlu0 %1432
        %v1434 = vsel %vm1412, %v1289, -inf
        %1435 = vmax.xlane.f32.xlu0 %v1434
        %v1436 = vpop.xlane.xlu0 %1435
        %v1437 = vsel %vm1412, %v1294, -inf
        %1438 = vmax.xlane.f32.xlu0 %v1437
        %v1439 = vpop.xlane.xlu0 %1438
        %v1440 = vsel %vm1412, %v1299, -inf
        %1441 = vmax.xlane.f32.xlu0 %v1440
        %v1442 = vpop.xlane.xlu0 %1441
        %v1443 = vsel %vm1412, %v1304, -inf
        %1444 = vmax.xlane.f32.xlu0 %v1443
        %v1445 = vpop.xlane.xlu0 %1444
        %v1446 = vsel %vm1412, %v1309, -inf
        %1447 = vmax.xlane.f32.xlu0 %v1446
        %v1448 = vpop.xlane.xlu0 %1447
        %v1449 = vsel %vm1412, %v1314, -inf
        %1450 = vmax.xlane.f32.xlu0 %v1449
        %v1451 = vpop.xlane.xlu0 %1450
        %v1452 = vsel %vm1412, %v1319, -inf
        %1453 = vmax.xlane.f32.xlu0 %v1452
        %v1454 = vpop.xlane.xlu0 %1453
        %v1455 = vsel %vm1412, %v1324, -inf
        %1456 = vmax.xlane.f32.xlu0 %v1455
        %v1457 = vpop.xlane.xlu0 %1456
        %v1458 = vsel %vm1412, %v1329, -inf
        %1459 = vmax.xlane.f32.xlu0 %v1458
        %v1460 = vpop.xlane.xlu0 %1459
        %v1461 = vsel %vm1412, %v1334, -inf
        %1462 = vmax.xlane.f32.xlu0 %v1461
        %v1463 = vpop.xlane.xlu0 %1462
        %v1464 = vsel %vm1412, %v1339, -inf
        %1465 = vmax.xlane.f32.xlu0 %v1464
        %v1466 = vpop.xlane.xlu0 %1465
        %v1467 = vsel %vm1412, %v1344, -inf
        %1468 = vmax.xlane.f32.xlu0 %v1467
        %v1469 = vpop.xlane.xlu0 %1468
        %v1470 = vsel %vm1412, %v1349, -inf
        %1471 = vmax.xlane.f32.xlu0 %v1470
        %v1472 = vpop.xlane.xlu0 %1471
        %v1473 = vsel %vm1412, %v1354, -inf
        %1474 = vmax.xlane.f32.xlu0 %v1473
        %v1475 = vpop.xlane.xlu0 %1474
        %v1476 = vsel %vm1412, %v1359, -inf
        %1477 = vmax.xlane.f32.xlu0 %v1476
        %v1478 = vpop.xlane.xlu0 %1477
        %v1479 = vsel %vm1412, %v1364, -inf
        %1480 = vmax.xlane.f32.xlu0 %v1479
        %v1481 = vpop.xlane.xlu0 %1480
        %v1482 = vsel %vm1412, %v1369, -inf
        %1483 = vmax.xlane.f32.xlu0 %v1482
        %v1484 = vpop.xlane.xlu0 %1483
        %v1485 = vsel %vm1412, %v1374, -inf
        %1486 = vmax.xlane.f32.xlu0 %v1485
        %v1487 = vpop.xlane.xlu0 %1486
        %v1488 = vsel %vm1412, %v1379, -inf
        %1489 = vmax.xlane.f32.xlu0 %v1488
        %v1490 = vpop.xlane.xlu0 %1489
        %v1491 = vsel %vm1412, %v1384, -inf
        %1492 = vmax.xlane.f32.xlu0 %v1491
        %v1493 = vpop.xlane.xlu0 %1492
        %v1494 = vsel %vm1412, %v1389, -inf
        %1495 = vmax.xlane.f32.xlu0 %v1494
        %v1496 = vpop.xlane.xlu0 %1495
        %v1497 = vsel %vm1412, %v1394, -inf
        %1498 = vmax.xlane.f32.xlu0 %v1497
        %v1499 = vpop.xlane.xlu0 %1498
        %v1500 = vsel %vm1412, %v1399, -inf
        %1501 = vmax.xlane.f32.xlu0 %v1500
        %v1502 = vpop.xlane.xlu0 %1501
        %v1503 = vsel %vm1412, %v1404, -inf
        %1504 = vmax.xlane.f32.xlu0 %v1503
        %v1505 = vpop.xlane.xlu0 %1504
        %v1506 = vsel %vm1412, %v1409, -inf
        %1507 = vmax.xlane.f32.xlu0 %v1506
        %v1508 = vpop.xlane.xlu0 %1507
        %v1509 = vsub.f32 %v1254, %v1415
        %v1510 = vsub.f32 %v1259, %v1418
        %v1511 = vsub.f32 %v1264, %v1421
        %v1512 = vsub.f32 %v1269, %v1424
        %v1513 = vsub.f32 %v1274, %v1427
        %v1514 = vsub.f32 %v1279, %v1430
        %v1515 = vsub.f32 %v1284, %v1433
        %v1516 = vsub.f32 %v1289, %v1436
        %v1517 = vsub.f32 %v1294, %v1439
        %v1518 = vsub.f32 %v1299, %v1442
        %v1519 = vsub.f32 %v1304, %v1445
        %v1520 = vsub.f32 %v1309, %v1448
        %v1521 = vsub.f32 %v1314, %v1451
        %v1522 = vsub.f32 %v1319, %v1454
        %v1523 = vsub.f32 %v1324, %v1457
        %v1524 = vsub.f32 %v1329, %v1460
        %v1525 = vsub.f32 %v1334, %v1463
        %v1526 = vsub.f32 %v1339, %v1466
        %v1527 = vsub.f32 %v1344, %v1469
        %v1528 = vsub.f32 %v1349, %v1472
        %v1529 = vsub.f32 %v1354, %v1475
        %v1530 = vsub.f32 %v1359, %v1478
        %v1531 = vsub.f32 %v1364, %v1481
        %v1532 = vsub.f32 %v1369, %v1484
        %v1533 = vsub.f32 %v1374, %v1487
        %v1534 = vsub.f32 %v1379, %v1490
        %v1535 = vsub.f32 %v1384, %v1493
        %v1536 = vsub.f32 %v1389, %v1496
        %v1537 = vsub.f32 %v1394, %v1499
        %v1538 = vsub.f32 %v1399, %v1502
        %v1539 = vsub.f32 %v1404, %v1505
        %v1540 = vsub.f32 %v1409, %v1508
        %v1541 = vmul.f32 %v1509, 1.442695
        %v1542 = vpow.pop %v1541
        %v1543 = vmul.f32 %v1510, 1.442695
        %v1544 = vpow.pop %v1543
        %v1545 = vmul.f32 %v1511, 1.442695
        %v1546 = vpow.pop %v1545
        %v1547 = vmul.f32 %v1512, 1.442695
        %v1548 = vpow.pop %v1547
        %v1549 = vmul.f32 %v1513, 1.442695
        %v1550 = vpow.pop %v1549
        %v1551 = vmul.f32 %v1514, 1.442695
        %v1552 = vpow.pop %v1551
        %v1553 = vmul.f32 %v1515, 1.442695
        %v1554 = vpow.pop %v1553
        %v1555 = vmul.f32 %v1516, 1.442695
        %v1556 = vpow.pop %v1555
        %v1557 = vmul.f32 %v1517, 1.442695
        %v1558 = vpow.pop %v1557
        %v1559 = vmul.f32 %v1518, 1.442695
        %v1560 = vpow.pop %v1559
        %v1561 = vmul.f32 %v1519, 1.442695
        %v1562 = vpow.pop %v1561
        %v1563 = vmul.f32 %v1520, 1.442695
        %v1564 = vpow.pop %v1563
        %v1565 = vmul.f32 %v1521, 1.442695
        %v1566 = vpow.pop %v1565
        %v1567 = vmul.f32 %v1522, 1.442695
        %v1568 = vpow.pop %v1567
        %v1569 = vmul.f32 %v1523, 1.442695
        %v1570 = vpow.pop %v1569
        %v1571 = vmul.f32 %v1524, 1.442695
        %v1572 = vpow.pop %v1571
        %v1573 = vmul.f32 %v1525, 1.442695
        %v1574 = vpow.pop %v1573
        %v1575 = vmul.f32 %v1526, 1.442695
        %v1576 = vpow.pop %v1575
        %v1577 = vmul.f32 %v1527, 1.442695
        %v1578 = vpow.pop %v1577
        %v1579 = vmul.f32 %v1528, 1.442695
        %v1580 = vpow.pop %v1579
        %v1581 = vmul.f32 %v1529, 1.442695
        %v1582 = vpow.pop %v1581
        %v1583 = vmul.f32 %v1530, 1.442695
        %v1584 = vpow.pop %v1583
        %v1585 = vmul.f32 %v1531, 1.442695
        %v1586 = vpow.pop %v1585
        %v1587 = vmul.f32 %v1532, 1.442695
        %v1588 = vpow.pop %v1587
        %v1589 = vmul.f32 %v1533, 1.442695
        %v1590 = vpow.pop %v1589
        %v1591 = vmul.f32 %v1534, 1.442695
        %v1592 = vpow.pop %v1591
        %v1593 = vmul.f32 %v1535, 1.442695
        %v1594 = vpow.pop %v1593
        %v1595 = vmul.f32 %v1536, 1.442695
        %v1596 = vpow.pop %v1595
        %v1597 = vmul.f32 %v1537, 1.442695
        %v1598 = vpow.pop %v1597
        %v1599 = vmul.f32 %v1538, 1.442695
        %v1600 = vpow.pop %v1599
        %v1601 = vmul.f32 %v1539, 1.442695
        %v1602 = vpow.pop %v1601
        %v1603 = vmul.f32 %v1540, 1.442695
        %v1604 = vpow.pop %v1603
        %v1605 = vsel %vm1412, %v1542, 0.0
        %1606 = vadd.xlane.f32.xlu0 %v1605
        %v1607 = vpop.xlane.xlu0 %1606
        %v1608 = vsel %vm1412, %v1544, 0.0
        %1609 = vadd.xlane.f32.xlu0 %v1608
        %v1610 = vpop.xlane.xlu0 %1609
        %v1611 = vsel %vm1412, %v1546, 0.0
        %1612 = vadd.xlane.f32.xlu0 %v1611
        %v1613 = vpop.xlane.xlu0 %1612
        %v1614 = vsel %vm1412, %v1548, 0.0
        %1615 = vadd.xlane.f32.xlu0 %v1614
        %v1616 = vpop.xlane.xlu0 %1615
        %v1617 = vsel %vm1412, %v1550, 0.0
        %1618 = vadd.xlane.f32.xlu0 %v1617
        %v1619 = vpop.xlane.xlu0 %1618
        %v1620 = vsel %vm1412, %v1552, 0.0
        %1621 = vadd.xlane.f32.xlu0 %v1620
        %v1622 = vpop.xlane.xlu0 %1621
        %v1623 = vsel %vm1412, %v1554, 0.0
        %1624 = vadd.xlane.f32.xlu0 %v1623
        %v1625 = vpop.xlane.xlu0 %1624
        %v1626 = vsel %vm1412, %v1556, 0.0
        %1627 = vadd.xlane.f32.xlu0 %v1626
        %v1628 = vpop.xlane.xlu0 %1627
        %v1629 = vsel %vm1412, %v1558, 0.0
        %1630 = vadd.xlane.f32.xlu0 %v1629
        %v1631 = vpop.xlane.xlu0 %1630
        %v1632 = vsel %vm1412, %v1560, 0.0
        %1633 = vadd.xlane.f32.xlu0 %v1632
        %v1634 = vpop.xlane.xlu0 %1633
        %v1635 = vsel %vm1412, %v1562, 0.0
        %1636 = vadd.xlane.f32.xlu0 %v1635
        %v1637 = vpop.xlane.xlu0 %1636
        %v1638 = vsel %vm1412, %v1564, 0.0
        %1639 = vadd.xlane.f32.xlu0 %v1638
        %v1640 = vpop.xlane.xlu0 %1639
        %v1641 = vsel %vm1412, %v1566, 0.0
        %1642 = vadd.xlane.f32.xlu0 %v1641
        %v1643 = vpop.xlane.xlu0 %1642
        %v1644 = vsel %vm1412, %v1568, 0.0
        %1645 = vadd.xlane.f32.xlu0 %v1644
        %v1646 = vpop.xlane.xlu0 %1645
        %v1647 = vsel %vm1412, %v1570, 0.0
        %1648 = vadd.xlane.f32.xlu0 %v1647
        %v1649 = vpop.xlane.xlu0 %1648
        %v1650 = vsel %vm1412, %v1572, 0.0
        %1651 = vadd.xlane.f32.xlu0 %v1650
        %v1652 = vpop.xlane.xlu0 %1651
        %v1653 = vsel %vm1412, %v1574, 0.0
        %1654 = vadd.xlane.f32.xlu0 %v1653
        %v1655 = vpop.xlane.xlu0 %1654
        %v1656 = vsel %vm1412, %v1576, 0.0
        %1657 = vadd.xlane.f32.xlu0 %v1656
        %v1658 = vpop.xlane.xlu0 %1657
        %v1659 = vsel %vm1412, %v1578, 0.0
        %1660 = vadd.xlane.f32.xlu0 %v1659
        %v1661 = vpop.xlane.xlu0 %1660
        %v1662 = vsel %vm1412, %v1580, 0.0
        %1663 = vadd.xlane.f32.xlu0 %v1662
        %v1664 = vpop.xlane.xlu0 %1663
        %v1665 = vsel %vm1412, %v1582, 0.0
        %1666 = vadd.xlane.f32.xlu0 %v1665
        %v1667 = vpop.xlane.xlu0 %1666
        %v1668 = vsel %vm1412, %v1584, 0.0
        %1669 = vadd.xlane.f32.xlu0 %v1668
        %v1670 = vpop.xlane.xlu0 %1669
        %v1671 = vsel %vm1412, %v1586, 0.0
        %1672 = vadd.xlane.f32.xlu0 %v1671
        %v1673 = vpop.xlane.xlu0 %1672
        %v1674 = vsel %vm1412, %v1588, 0.0
        %1675 = vadd.xlane.f32.xlu0 %v1674
        %v1676 = vpop.xlane.xlu0 %1675
        %v1677 = vsel %vm1412, %v1590, 0.0
        %1678 = vadd.xlane.f32.xlu0 %v1677
        %v1679 = vpop.xlane.xlu0 %1678
        %v1680 = vsel %vm1412, %v1592, 0.0
        %1681 = vadd.xlane.f32.xlu0 %v1680
        %v1682 = vpop.xlane.xlu0 %1681
        %v1683 = vsel %vm1412, %v1594, 0.0
        %1684 = vadd.xlane.f32.xlu0 %v1683
        %v1685 = vpop.xlane.xlu0 %1684
        %v1686 = vsel %vm1412, %v1596, 0.0
        %1687 = vadd.xlane.f32.xlu0 %v1686
        %v1688 = vpop.xlane.xlu0 %1687
        %v1689 = vsel %vm1412, %v1598, 0.0
        %1690 = vadd.xlane.f32.xlu0 %v1689
        %v1691 = vpop.xlane.xlu0 %1690
        %v1692 = vsel %vm1412, %v1600, 0.0
        %1693 = vadd.xlane.f32.xlu0 %v1692
        %v1694 = vpop.xlane.xlu0 %1693
        %v1695 = vsel %vm1412, %v1602, 0.0
        %1696 = vadd.xlane.f32.xlu0 %v1695
        %v1697 = vpop.xlane.xlu0 %1696
        %v1698 = vsel %vm1412, %v1604, 0.0
        %1699 = vadd.xlane.f32.xlu0 %v1698
        %v1700 = vpop.xlane.xlu0 %1699
        %v1702 = vsel %vm1412, %v1542, 0
        %v1705 = vsel %vm1412, %v1544, 0
        %v1708 = vsel %vm1412, %v1546, 0
        %v1711 = vsel %vm1412, %v1548, 0
        %v1714 = vsel %vm1412, %v1550, 0
        %v1717 = vsel %vm1412, %v1552, 0
        %v1720 = vsel %vm1412, %v1554, 0
        %v1723 = vsel %vm1412, %v1556, 0
        %v1726 = vsel %vm1412, %v1558, 0
        %v1729 = vsel %vm1412, %v1560, 0
        %v1732 = vsel %vm1412, %v1562, 0
        %v1735 = vsel %vm1412, %v1564, 0
        %v1738 = vsel %vm1412, %v1566, 0
        %v1741 = vsel %vm1412, %v1568, 0
        %v1744 = vsel %vm1412, %v1570, 0
        %v1747 = vsel %vm1412, %v1572, 0
        %v1750 = vsel %vm1412, %v1574, 0
        %v1753 = vsel %vm1412, %v1576, 0
        %v1756 = vsel %vm1412, %v1578, 0
        %v1759 = vsel %vm1412, %v1580, 0
        %v1762 = vsel %vm1412, %v1582, 0
        %v1765 = vsel %vm1412, %v1584, 0
        %v1768 = vsel %vm1412, %v1586, 0
        %v1771 = vsel %vm1412, %v1588, 0
        %v1774 = vsel %vm1412, %v1590, 0
        %v1777 = vsel %vm1412, %v1592, 0
        %v1780 = vsel %vm1412, %v1594, 0
        %v1783 = vsel %vm1412, %v1596, 0
        %v1786 = vsel %vm1412, %v1598, 0
        %v1789 = vsel %vm1412, %v1600, 0
        %v1792 = vsel %vm1412, %v1602, 0
        %v1795 = vsel %vm1412, %v1604, 0
        %1797 = vmatprep.subr.mxu0 0.0
        %1798 = vmatpush1.msra.mxu0 0.0
        %1799 = vmatprep.subr.mxu0 0.0
        %1800 = vmatpush1.msra.mxu0 0.0
        %1801 = vmatprep.subr.mxu0 0.0
        %1802 = vmatpush1.msra.mxu0 0.0
        %1803 = vmatprep.subr.mxu0 0.0
        %1804 = vmatpush1.msra.mxu0 0.0
        %1805 = vmatprep.subr.mxu0 0.0
        %1806 = vmatpush1.msra.mxu0 0.0
        %1807 = vmatprep.subr.mxu0 0.0
        %1808 = vmatpush1.msra.mxu0 0.0
        %1809 = vmatprep.subr.mxu0 0.0
        %1810 = vmatpush1.msra.mxu0 0.0
        %1811 = vmatprep.subr.mxu0 0.0
        %1812 = vmatpush1.msra.mxu0 0.0
        %1813 = vmatprep.subr.mxu0 0.0
        %1814 = vmatpush1.msra.mxu0 %v949
        %1815 = vmatprep.subr.mxu0 0.0
        %1816 = vmatpush1.msra.mxu0 %v944
        %1817 = vmatprep.subr.mxu0 0.0
        %1818 = vmatpush1.msra.mxu0 %v939
        %1819 = vmatprep.subr.mxu0 0.0
        %1820 = vmatpush1.msra.mxu0 %v934
        %1821 = vmatprep.subr.mxu0 0.0
        %1822 = vmatpush1.msra.mxu0 %v929
        %1823 = vmatprep.subr.mxu0 0.0
        %1824 = vmatpush1.msra.mxu0 %v924
        %1825 = vmatprep.subr.mxu0 0.0
        %1826 = vmatpush1.msra.mxu0 %v919
        %1827 = vmatprep.subr.mxu0 0.0
        %1828 = vmatpush1.msra.mxu0 %v914
        %1829 = vmatprep.subr.mxu0 0.0
        %1830 = vmatpush2.msra.mxu0 0.0
        %1831 = vmatprep.subr.mxu0 0.0
        %1832 = vmatpush2.msra.mxu0 0.0
        %1833 = vmatprep.subr.mxu0 0.0
        %1834 = vmatpush2.msra.mxu0 0.0
        %1835 = vmatprep.subr.mxu0 0.0
        %1836 = vmatpush2.msra.mxu0 0.0
        %1837 = vmatprep.subr.mxu0 0.0
        %1838 = vmatpush2.msra.mxu0 0.0
        %1839 = vmatprep.subr.mxu0 0.0
        %1840 = vmatpush2.msra.mxu0 0.0
        %1841 = vmatprep.subr.mxu0 0.0
        %1842 = vmatpush2.msra.mxu0 0.0
        %1843 = vmatprep.subr.mxu0 0.0
        %1844 = vmatpush2.msra.mxu0 0.0
        %1845 = vmatprep.subr.mxu0 0.0
        %1846 = vmatpush2.msra.mxu0 0.0
        %1847 = vmatprep.subr.mxu0 0.0
        %1848 = vmatpush2.msra.mxu0 0.0
        %1849 = vmatprep.subr.mxu0 0.0
        %1850 = vmatpush2.msra.mxu0 0.0
        %1851 = vmatprep.subr.mxu0 0.0
        %1852 = vmatpush2.msra.mxu0 0.0
        %1853 = vmatprep.subr.mxu0 0.0
        %1854 = vmatpush2.msra.mxu0 0.0
        %1855 = vmatprep.subr.mxu0 0.0
        %1856 = vmatpush2.msra.mxu0 0.0
        %1857 = vmatprep.subr.mxu0 0.0
        %1858 = vmatpush2.msra.mxu0 0.0
        %1859 = vmatprep.subr.mxu0 0.0
        %1860 = vmatpush2.msra.mxu0 0.0
        %1861 = vmatprep.mubr.f32.mxu0 0.0
        %1862 = vmatmul.mubr.f32.gmra.mxu0 %v1702
        %v1863 = vpop.f32.mrf.mxu0
        %v1864 = vadd.f32 0.0, %v1863
        %v1865 = vpop.f32.mrf.mxu0
        %1866 = vmatprep.mubr.f32.mxu0 0.0
        %1867 = vmatmul.mubr.f32.gmra.mxu0 %v1705
        %v1868 = vpop.f32.mrf.mxu0
        %v1869 = vadd.f32 0.0, %v1868
        %v1870 = vpop.f32.mrf.mxu0
        %1871 = vmatprep.mubr.f32.mxu0 0.0
        %1872 = vmatmul.mubr.f32.gmra.mxu0 %v1708
        %v1873 = vpop.f32.mrf.mxu0
        %v1874 = vadd.f32 0.0, %v1873
        %v1875 = vpop.f32.mrf.mxu0
        %1876 = vmatprep.mubr.f32.mxu0 0.0
        %1877 = vmatmul.mubr.f32.gmra.mxu0 %v1711
        %v1878 = vpop.f32.mrf.mxu0
        %v1879 = vadd.f32 0.0, %v1878
        %v1880 = vpop.f32.mrf.mxu0
        %1881 = vmatprep.mubr.f32.mxu0 0.0
        %1882 = vmatmul.mubr.f32.gmra.mxu0 %v1714
        %v1883 = vpop.f32.mrf.mxu0
        %v1884 = vadd.f32 0.0, %v1883
        %v1885 = vpop.f32.mrf.mxu0
        %1886 = vmatprep.mubr.f32.mxu0 0.0
        %1887 = vmatmul.mubr.f32.gmra.mxu0 %v1717
        %v1888 = vpop.f32.mrf.mxu0
        %v1889 = vadd.f32 0.0, %v1888
        %v1890 = vpop.f32.mrf.mxu0
        %1891 = vmatprep.mubr.f32.mxu0 0.0
        %1892 = vmatmul.mubr.f32.gmra.mxu0 %v1720
        %v1893 = vpop.f32.mrf.mxu0
        %v1894 = vadd.f32 0.0, %v1893
        %v1895 = vpop.f32.mrf.mxu0
        %1896 = vmatprep.mubr.f32.mxu0 0.0
        %1897 = vmatmul.mubr.f32.gmra.mxu0 %v1723
        %v1898 = vpop.f32.mrf.mxu0
        %v1899 = vadd.f32 0.0, %v1898
        %v1900 = vpop.f32.mrf.mxu0
        %1901 = vmatprep.mubr.f32.mxu0 0.0
        %1902 = vmatmul.mubr.f32.gmra.mxu0 %v1726
        %v1903 = vpop.f32.mrf.mxu0
        %v1904 = vadd.f32 0.0, %v1903
        %v1905 = vpop.f32.mrf.mxu0
        %1906 = vmatprep.mubr.f32.mxu0 0.0
        %1907 = vmatmul.mubr.f32.gmra.mxu0 %v1729
        %v1908 = vpop.f32.mrf.mxu0
        %v1909 = vadd.f32 0.0, %v1908
        %v1910 = vpop.f32.mrf.mxu0
        %1911 = vmatprep.mubr.f32.mxu0 0.0
        %1912 = vmatmul.mubr.f32.gmra.mxu0 %v1732
        %v1913 = vpop.f32.mrf.mxu0
        %v1914 = vadd.f32 0.0, %v1913
        %v1915 = vpop.f32.mrf.mxu0
        %1916 = vmatprep.mubr.f32.mxu0 0.0
        %1917 = vmatmul.mubr.f32.gmra.mxu0 %v1735
        %v1918 = vpop.f32.mrf.mxu0
        %v1919 = vadd.f32 0.0, %v1918
        %v1920 = vpop.f32.mrf.mxu0
        %1921 = vmatprep.mubr.f32.mxu0 0.0
        %1922 = vmatmul.mubr.f32.gmra.mxu0 %v1738
        %v1923 = vpop.f32.mrf.mxu0
        %v1924 = vadd.f32 0.0, %v1923
        %v1925 = vpop.f32.mrf.mxu0
        %1926 = vmatprep.mubr.f32.mxu0 0.0
        %1927 = vmatmul.mubr.f32.gmra.mxu0 %v1741
        %v1928 = vpop.f32.mrf.mxu0
        %v1929 = vadd.f32 0.0, %v1928
        %v1930 = vpop.f32.mrf.mxu0
        %1931 = vmatprep.mubr.f32.mxu0 0.0
        %1932 = vmatmul.mubr.f32.gmra.mxu0 %v1744
        %v1933 = vpop.f32.mrf.mxu0
        %v1934 = vadd.f32 0.0, %v1933
        %v1935 = vpop.f32.mrf.mxu0
        %1936 = vmatprep.mubr.f32.mxu0 0.0
        %1937 = vmatmul.mubr.f32.gmra.mxu0 %v1747
        %v1938 = vpop.f32.mrf.mxu0
        %v1939 = vadd.f32 0.0, %v1938
        %v1940 = vpop.f32.mrf.mxu0
        %1941 = vmatprep.mubr.f32.mxu0 0.0
        %1942 = vmatmul.mubr.f32.gmra.mxu0 %v1750
        %v1943 = vpop.f32.mrf.mxu0
        %v1944 = vadd.f32 0.0, %v1943
        %v1945 = vpop.f32.mrf.mxu0
        %1946 = vmatprep.mubr.f32.mxu0 0.0
        %1947 = vmatmul.mubr.f32.gmra.mxu0 %v1753
        %v1948 = vpop.f32.mrf.mxu0
        %v1949 = vadd.f32 0.0, %v1948
        %v1950 = vpop.f32.mrf.mxu0
        %1951 = vmatprep.mubr.f32.mxu0 0.0
        %1952 = vmatmul.mubr.f32.gmra.mxu0 %v1756
        %v1953 = vpop.f32.mrf.mxu0
        %v1954 = vadd.f32 0.0, %v1953
        %v1955 = vpop.f32.mrf.mxu0
        %1956 = vmatprep.mubr.f32.mxu0 0.0
        %1957 = vmatmul.mubr.f32.gmra.mxu0 %v1759
        %v1958 = vpop.f32.mrf.mxu0
        %v1959 = vadd.f32 0.0, %v1958
        %v1960 = vpop.f32.mrf.mxu0
        %1961 = vmatprep.mubr.f32.mxu0 0.0
        %1962 = vmatmul.mubr.f32.gmra.mxu0 %v1762
        %v1963 = vpop.f32.mrf.mxu0
        %v1964 = vadd.f32 0.0, %v1963
        %v1965 = vpop.f32.mrf.mxu0
        %1966 = vmatprep.mubr.f32.mxu0 0.0
        %1967 = vmatmul.mubr.f32.gmra.mxu0 %v1765
        %v1968 = vpop.f32.mrf.mxu0
        %v1969 = vadd.f32 0.0, %v1968
        %v1970 = vpop.f32.mrf.mxu0
        %1971 = vmatprep.mubr.f32.mxu0 0.0
        %1972 = vmatmul.mubr.f32.gmra.mxu0 %v1768
        %v1973 = vpop.f32.mrf.mxu0
        %v1974 = vadd.f32 0.0, %v1973
        %v1975 = vpop.f32.mrf.mxu0
        %1976 = vmatprep.mubr.f32.mxu0 0.0
        %1977 = vmatmul.mubr.f32.gmra.mxu0 %v1771
        %v1978 = vpop.f32.mrf.mxu0
        %v1979 = vadd.f32 0.0, %v1978
        %v1980 = vpop.f32.mrf.mxu0
        %1981 = vmatprep.mubr.f32.mxu0 0.0
        %1982 = vmatmul.mubr.f32.gmra.mxu0 %v1774
        %v1983 = vpop.f32.mrf.mxu0
        %v1984 = vadd.f32 0.0, %v1983
        %v1985 = vpop.f32.mrf.mxu0
        %1986 = vmatprep.mubr.f32.mxu0 0.0
        %1987 = vmatmul.mubr.f32.gmra.mxu0 %v1777
        %v1988 = vpop.f32.mrf.mxu0
        %v1989 = vadd.f32 0.0, %v1988
        %v1990 = vpop.f32.mrf.mxu0
        %1991 = vmatprep.mubr.f32.mxu0 0.0
        %1992 = vmatmul.mubr.f32.gmra.mxu0 %v1780
        %v1993 = vpop.f32.mrf.mxu0
        %v1994 = vadd.f32 0.0, %v1993
        %v1995 = vpop.f32.mrf.mxu0
        %1996 = vmatprep.mubr.f32.mxu0 0.0
        %1997 = vmatmul.mubr.f32.gmra.mxu0 %v1783
        %v1998 = vpop.f32.mrf.mxu0
        %v1999 = vadd.f32 0.0, %v1998
        %v2000 = vpop.f32.mrf.mxu0
        %2001 = vmatprep.mubr.f32.mxu0 0.0
        %2002 = vmatmul.mubr.f32.gmra.mxu0 %v1786
        %v2003 = vpop.f32.mrf.mxu0
        %v2004 = vadd.f32 0.0, %v2003
        %v2005 = vpop.f32.mrf.mxu0
        %2006 = vmatprep.mubr.f32.mxu0 0.0
        %2007 = vmatmul.mubr.f32.gmra.mxu0 %v1789
        %v2008 = vpop.f32.mrf.mxu0
        %v2009 = vadd.f32 0.0, %v2008
        %v2010 = vpop.f32.mrf.mxu0
        %2011 = vmatprep.mubr.f32.mxu0 0.0
        %2012 = vmatmul.mubr.f32.gmra.mxu0 %v1792
        %v2013 = vpop.f32.mrf.mxu0
        %v2014 = vadd.f32 0.0, %v2013
        %v2015 = vpop.f32.mrf.mxu0
        %2016 = vmatprep.mubr.f32.mxu0 0.0
        %2017 = vmatmul.mubr.f32.gmra.mxu0 %v1795
        %v2018 = vpop.f32.mrf.mxu0
        %v2019 = vadd.f32 0.0, %v2018
        %v2020 = vpop.f32.mrf.mxu0
        %2021 = vdwg.mxu0
        %v2022 = vrcp.pop %v1607
        %v2023 = vrcp.pop %v1610
        %v2024 = vrcp.pop %v1613
        %v2025 = vrcp.pop %v1616
        %v2026 = vrcp.pop %v1619
        %v2027 = vrcp.pop %v1622
        %v2028 = vrcp.pop %v1625
        %v2029 = vrcp.pop %v1628
        %v2030 = vrcp.pop %v1631
        %v2031 = vrcp.pop %v1634
        %v2032 = vrcp.pop %v1637
        %v2033 = vrcp.pop %v1640
        %v2034 = vrcp.pop %v1643
        %v2035 = vrcp.pop %v1646
        %v2036 = vrcp.pop %v1649
        %v2037 = vrcp.pop %v1652
        %v2038 = vrcp.pop %v1655
        %v2039 = vrcp.pop %v1658
        %v2040 = vrcp.pop %v1661
        %v2041 = vrcp.pop %v1664
        %v2042 = vrcp.pop %v1667
        %v2043 = vrcp.pop %v1670
        %v2044 = vrcp.pop %v1673
        %v2045 = vrcp.pop %v1676
        %v2046 = vrcp.pop %v1679
        %v2047 = vrcp.pop %v1682
        %v2048 = vrcp.pop %v1685
        %v2049 = vrcp.pop %v1688
        %v2050 = vrcp.pop %v1691
        %v2051 = vrcp.pop %v1694
        %v2052 = vrcp.pop %v1697
        %v2053 = vrcp.pop %v1700
        %v2054 = vmul.f32 %v1864, %v2022
        %v2055 = vmul.f32 %v1869, %v2023
        %v2056 = vmul.f32 %v1874, %v2024
        %v2057 = vmul.f32 %v1879, %v2025
        %v2058 = vmul.f32 %v1884, %v2026
        %v2059 = vmul.f32 %v1889, %v2027
        %v2060 = vmul.f32 %v1894, %v2028
        %v2061 = vmul.f32 %v1899, %v2029
        %v2062 = vmul.f32 %v1904, %v2030
        %v2063 = vmul.f32 %v1909, %v2031
        %v2064 = vmul.f32 %v1914, %v2032
        %v2065 = vmul.f32 %v1919, %v2033
        %v2066 = vmul.f32 %v1924, %v2034
        %v2067 = vmul.f32 %v1929, %v2035
        %v2068 = vmul.f32 %v1934, %v2036
        %v2069 = vmul.f32 %v1939, %v2037
        %v2070 = vmul.f32 %v1944, %v2038
        %v2071 = vmul.f32 %v1949, %v2039
        %v2072 = vmul.f32 %v1954, %v2040
        %v2073 = vmul.f32 %v1959, %v2041
        %v2074 = vmul.f32 %v1964, %v2042
        %v2075 = vmul.f32 %v1969, %v2043
        %v2076 = vmul.f32 %v1974, %v2044
        %v2077 = vmul.f32 %v1979, %v2045
        %v2078 = vmul.f32 %v1984, %v2046
        %v2079 = vmul.f32 %v1989, %v2047
        %v2080 = vmul.f32 %v1994, %v2048
        %v2081 = vmul.f32 %v1999, %v2049
        %v2082 = vmul.f32 %v2004, %v2050
        %v2083 = vmul.f32 %v2009, %v2051
        %v2084 = vmul.f32 %v2014, %v2052
        %v2085 = vmul.f32 %v2019, %v2053
        %v2086 = vld [vmem:[#allocation7] sm:$0xff]
        %v2087 = vld [vmem:[#allocation9] sm:$0x1]
        %v2089 = vlaneseq
        %v2090 = vshrl.u32 %v2089, 7
        %v2091 = vsub.s32 0, %v2090
        %v2092 = vrot.slane %v2087, %v2091
        %v2095 = vsel %vm1066, %v2054, 0
        %v2098 = vsel %vm1066, %v2055, 0
        %v2101 = vsel %vm1066, %v2056, 0
        %v2104 = vsel %vm1066, %v2057, 0
        %v2107 = vsel %vm1066, %v2058, 0
        %v2110 = vsel %vm1066, %v2059, 0
        %v2113 = vsel %vm1066, %v2060, 0
        %v2116 = vsel %vm1066, %v2061, 0
        %v2119 = vsel %vm1066, %v2062, 0
        %v2122 = vsel %vm1066, %v2063, 0
        %v2125 = vsel %vm1066, %v2064, 0
        %v2128 = vsel %vm1066, %v2065, 0
        %v2131 = vsel %vm1066, %v2066, 0
        %v2134 = vsel %vm1066, %v2067, 0
        %v2137 = vsel %vm1066, %v2068, 0
        %v2140 = vsel %vm1066, %v2069, 0
        %v2143 = vsel %vm1066, %v2070, 0
        %v2146 = vsel %vm1066, %v2071, 0
        %v2149 = vsel %vm1066, %v2072, 0
        %v2152 = vsel %vm1066, %v2073, 0
        %v2155 = vsel %vm1066, %v2074, 0
        %v2158 = vsel %vm1066, %v2075, 0
        %v2161 = vsel %vm1066, %v2076, 0
        %v2164 = vsel %vm1066, %v2077, 0
        %v2167 = vsel %vm1066, %v2078, 0
        %v2170 = vsel %vm1066, %v2079, 0
        %v2173 = vsel %vm1066, %v2080, 0
        %v2176 = vsel %vm1066, %v2081, 0
        %v2179 = vsel %vm1066, %v2082, 0
        %v2182 = vsel %vm1066, %v2083, 0
        %v2185 = vsel %vm1066, %v2084, 0
        %v2188 = vsel %vm1066, %v2085, 0
        %2190 = vmatprep.subr.mxu0 0.0
        %2191 = vmatpush1.msra.mxu0 0.0
        %2192 = vmatprep.subr.mxu0 0.0
        %2193 = vmatpush1.msra.mxu0 0.0
        %2194 = vmatprep.subr.mxu0 0.0
        %2195 = vmatpush1.msra.mxu0 0.0
        %2196 = vmatprep.subr.mxu0 0.0
        %2197 = vmatpush1.msra.mxu0 0.0
        %2198 = vmatprep.subr.mxu0 0.0
        %2199 = vmatpush1.msra.mxu0 0.0
        %2200 = vmatprep.subr.mxu0 0.0
        %2201 = vmatpush1.msra.mxu0 0.0
        %2202 = vmatprep.subr.mxu0 0.0
        %2203 = vmatpush1.msra.mxu0 0.0
        %2204 = vmatprep.subr.mxu0 0.0
        %2205 = vmatpush1.msra.mxu0 0.0
        %2206 = vmatprep.subr.mxu0 0.0
        %2207 = vmatpush1.msra.mxu0 0.0
        %2208 = vmatprep.subr.mxu0 0.0
        %2209 = vmatpush1.msra.mxu0 0.0
        %2210 = vmatprep.subr.mxu0 0.0
        %2211 = vmatpush1.msra.mxu0 0.0
        %2212 = vmatprep.subr.mxu0 0.0
        %2213 = vmatpush1.msra.mxu0 0.0
        %2214 = vmatprep.subr.mxu0 0.0
        %2215 = vmatpush1.msra.mxu0 0.0
        %2216 = vmatprep.subr.mxu0 0.0
        %2217 = vmatpush1.msra.mxu0 0.0
        %2218 = vmatprep.subr.mxu0 0.0
        %2219 = vmatpush1.msra.mxu0 0.0
        %2220 = vmatprep.subr.mxu0 0.0
        %2221 = vmatpush1.msra.mxu0 %v2086
        %2222 = vmatprep.subr.mxu0 0.0
        %2223 = vmatpush2.msra.mxu0 0.0
        %2224 = vmatprep.subr.mxu0 0.0
        %2225 = vmatpush2.msra.mxu0 0.0
        %2226 = vmatprep.subr.mxu0 0.0
        %2227 = vmatpush2.msra.mxu0 0.0
        %2228 = vmatprep.subr.mxu0 0.0
        %2229 = vmatpush2.msra.mxu0 0.0
        %2230 = vmatprep.subr.mxu0 0.0
        %2231 = vmatpush2.msra.mxu0 0.0
        %2232 = vmatprep.subr.mxu0 0.0
        %2233 = vmatpush2.msra.mxu0 0.0
        %2234 = vmatprep.subr.mxu0 0.0
        %2235 = vmatpush2.msra.mxu0 0.0
        %2236 = vmatprep.subr.mxu0 0.0
        %2237 = vmatpush2.msra.mxu0 0.0
        %2238 = vmatprep.subr.mxu0 0.0
        %2239 = vmatpush2.msra.mxu0 0.0
        %2240 = vmatprep.subr.mxu0 0.0
        %2241 = vmatpush2.msra.mxu0 0.0
        %2242 = vmatprep.subr.mxu0 0.0
        %2243 = vmatpush2.msra.mxu0 0.0
        %2244 = vmatprep.subr.mxu0 0.0
        %2245 = vmatpush2.msra.mxu0 0.0
        %2246 = vmatprep.subr.mxu0 0.0
        %2247 = vmatpush2.msra.mxu0 0.0
        %2248 = vmatprep.subr.mxu0 0.0
        %2249 = vmatpush2.msra.mxu0 0.0
        %2250 = vmatprep.subr.mxu0 0.0
        %2251 = vmatpush2.msra.mxu0 0.0
        %2252 = vmatprep.subr.mxu0 0.0
        %2253 = vmatpush2.msra.mxu0 0.0
        %2254 = vmatprep.mubr.f32.mxu0 0.0
        %2255 = vmatmul.mubr.f32.gmra.mxu0 %v2095
        %v2256 = vpop.f32.mrf.mxu0
        %v2257 = vadd.f32 %v2092, %v2256
        %v2258 = vpop.f32.mrf.mxu0
        %2259 = vmatprep.mubr.f32.mxu0 0.0
        %2260 = vmatmul.mubr.f32.gmra.mxu0 %v2098
        %v2261 = vpop.f32.mrf.mxu0
        %v2262 = vadd.f32 %v2092, %v2261
        %v2263 = vpop.f32.mrf.mxu0
        %2264 = vmatprep.mubr.f32.mxu0 0.0
        %2265 = vmatmul.mubr.f32.gmra.mxu0 %v2101
        %v2266 = vpop.f32.mrf.mxu0
        %v2267 = vadd.f32 %v2092, %v2266
        %v2268 = vpop.f32.mrf.mxu0
        %2269 = vmatprep.mubr.f32.mxu0 0.0
        %2270 = vmatmul.mubr.f32.gmra.mxu0 %v2104
        %v2271 = vpop.f32.mrf.mxu0
        %v2272 = vadd.f32 %v2092, %v2271
        %v2273 = vpop.f32.mrf.mxu0
        %2274 = vmatprep.mubr.f32.mxu0 0.0
        %2275 = vmatmul.mubr.f32.gmra.mxu0 %v2107
        %v2276 = vpop.f32.mrf.mxu0
        %v2277 = vadd.f32 %v2092, %v2276
        %v2278 = vpop.f32.mrf.mxu0
        %2279 = vmatprep.mubr.f32.mxu0 0.0
        %2280 = vmatmul.mubr.f32.gmra.mxu0 %v2110
        %v2281 = vpop.f32.mrf.mxu0
        %v2282 = vadd.f32 %v2092, %v2281
        %v2283 = vpop.f32.mrf.mxu0
        %2284 = vmatprep.mubr.f32.mxu0 0.0
        %2285 = vmatmul.mubr.f32.gmra.mxu0 %v2113
        %v2286 = vpop.f32.mrf.mxu0
        %v2287 = vadd.f32 %v2092, %v2286
        %v2288 = vpop.f32.mrf.mxu0
        %2289 = vmatprep.mubr.f32.mxu0 0.0
        %2290 = vmatmul.mubr.f32.gmra.mxu0 %v2116
        %v2291 = vpop.f32.mrf.mxu0
        %v2292 = vadd.f32 %v2092, %v2291
        %v2293 = vpop.f32.mrf.mxu0
        %2294 = vmatprep.mubr.f32.mxu0 0.0
        %2295 = vmatmul.mubr.f32.gmra.mxu0 %v2119
        %v2296 = vpop.f32.mrf.mxu0
        %v2297 = vadd.f32 %v2092, %v2296
        %v2298 = vpop.f32.mrf.mxu0
        %2299 = vmatprep.mubr.f32.mxu0 0.0
        %2300 = vmatmul.mubr.f32.gmra.mxu0 %v2122
        %v2301 = vpop.f32.mrf.mxu0
        %v2302 = vadd.f32 %v2092, %v2301
        %v2303 = vpop.f32.mrf.mxu0
        %2304 = vmatprep.mubr.f32.mxu0 0.0
        %2305 = vmatmul.mubr.f32.gmra.mxu0 %v2125
        %v2306 = vpop.f32.mrf.mxu0
        %v2307 = vadd.f32 %v2092, %v2306
        %v2308 = vpop.f32.mrf.mxu0
        %2309 = vmatprep.mubr.f32.mxu0 0.0
        %2310 = vmatmul.mubr.f32.gmra.mxu0 %v2128
        %v2311 = vpop.f32.mrf.mxu0
        %v2312 = vadd.f32 %v2092, %v2311
        %v2313 = vpop.f32.mrf.mxu0
        %2314 = vmatprep.mubr.f32.mxu0 0.0
        %2315 = vmatmul.mubr.f32.gmra.mxu0 %v2131
        %v2316 = vpop.f32.mrf.mxu0
        %v2317 = vadd.f32 %v2092, %v2316
        %v2318 = vpop.f32.mrf.mxu0
        %2319 = vmatprep.mubr.f32.mxu0 0.0
        %2320 = vmatmul.mubr.f32.gmra.mxu0 %v2134
        %v2321 = vpop.f32.mrf.mxu0
        %v2322 = vadd.f32 %v2092, %v2321
        %v2323 = vpop.f32.mrf.mxu0
        %2324 = vmatprep.mubr.f32.mxu0 0.0
        %2325 = vmatmul.mubr.f32.gmra.mxu0 %v2137
        %v2326 = vpop.f32.mrf.mxu0
        %v2327 = vadd.f32 %v2092, %v2326
        %v2328 = vpop.f32.mrf.mxu0
        %2329 = vmatprep.mubr.f32.mxu0 0.0
        %2330 = vmatmul.mubr.f32.gmra.mxu0 %v2140
        %v2331 = vpop.f32.mrf.mxu0
        %v2332 = vadd.f32 %v2092, %v2331
        %v2333 = vpop.f32.mrf.mxu0
        %2334 = vmatprep.mubr.f32.mxu0 0.0
        %2335 = vmatmul.mubr.f32.gmra.mxu0 %v2143
        %v2336 = vpop.f32.mrf.mxu0
        %v2337 = vadd.f32 %v2092, %v2336
        %v2338 = vpop.f32.mrf.mxu0
        %2339 = vmatprep.mubr.f32.mxu0 0.0
        %2340 = vmatmul.mubr.f32.gmra.mxu0 %v2146
        %v2341 = vpop.f32.mrf.mxu0
        %v2342 = vadd.f32 %v2092, %v2341
        %v2343 = vpop.f32.mrf.mxu0
        %2344 = vmatprep.mubr.f32.mxu0 0.0
        %2345 = vmatmul.mubr.f32.gmra.mxu0 %v2149
        %v2346 = vpop.f32.mrf.mxu0
        %v2347 = vadd.f32 %v2092, %v2346
        %v2348 = vpop.f32.mrf.mxu0
        %2349 = vmatprep.mubr.f32.mxu0 0.0
        %2350 = vmatmul.mubr.f32.gmra.mxu0 %v2152
        %v2351 = vpop.f32.mrf.mxu0
        %v2352 = vadd.f32 %v2092, %v2351
        %v2353 = vpop.f32.mrf.mxu0
        %2354 = vmatprep.mubr.f32.mxu0 0.0
        %2355 = vmatmul.mubr.f32.gmra.mxu0 %v2155
        %v2356 = vpop.f32.mrf.mxu0
        %v2357 = vadd.f32 %v2092, %v2356
        %v2358 = vpop.f32.mrf.mxu0
        %2359 = vmatprep.mubr.f32.mxu0 0.0
        %2360 = vmatmul.mubr.f32.gmra.mxu0 %v2158
        %v2361 = vpop.f32.mrf.mxu0
        %v2362 = vadd.f32 %v2092, %v2361
        %v2363 = vpop.f32.mrf.mxu0
        %2364 = vmatprep.mubr.f32.mxu0 0.0
        %2365 = vmatmul.mubr.f32.gmra.mxu0 %v2161
        %v2366 = vpop.f32.mrf.mxu0
        %v2367 = vadd.f32 %v2092, %v2366
        %v2368 = vpop.f32.mrf.mxu0
        %2369 = vmatprep.mubr.f32.mxu0 0.0
        %2370 = vmatmul.mubr.f32.gmra.mxu0 %v2164
        %v2371 = vpop.f32.mrf.mxu0
        %v2372 = vadd.f32 %v2092, %v2371
        %v2373 = vpop.f32.mrf.mxu0
        %2374 = vmatprep.mubr.f32.mxu0 0.0
        %2375 = vmatmul.mubr.f32.gmra.mxu0 %v2167
        %v2376 = vpop.f32.mrf.mxu0
        %v2377 = vadd.f32 %v2092, %v2376
        %v2378 = vpop.f32.mrf.mxu0
        %2379 = vmatprep.mubr.f32.mxu0 0.0
        %2380 = vmatmul.mubr.f32.gmra.mxu0 %v2170
        %v2381 = vpop.f32.mrf.mxu0
        %v2382 = vadd.f32 %v2092, %v2381
        %v2383 = vpop.f32.mrf.mxu0
        %2384 = vmatprep.mubr.f32.mxu0 0.0
        %2385 = vmatmul.mubr.f32.gmra.mxu0 %v2173
        %v2386 = vpop.f32.mrf.mxu0
        %v2387 = vadd.f32 %v2092, %v2386
        %v2388 = vpop.f32.mrf.mxu0
        %2389 = vmatprep.mubr.f32.mxu0 0.0
        %2390 = vmatmul.mubr.f32.gmra.mxu0 %v2176
        %v2391 = vpop.f32.mrf.mxu0
        %v2392 = vadd.f32 %v2092, %v2391
        %v2393 = vpop.f32.mrf.mxu0
        %2394 = vmatprep.mubr.f32.mxu0 0.0
        %2395 = vmatmul.mubr.f32.gmra.mxu0 %v2179
        %v2396 = vpop.f32.mrf.mxu0
        %v2397 = vadd.f32 %v2092, %v2396
        %v2398 = vpop.f32.mrf.mxu0
        %2399 = vmatprep.mubr.f32.mxu0 0.0
        %2400 = vmatmul.mubr.f32.gmra.mxu0 %v2182
        %v2401 = vpop.f32.mrf.mxu0
        %v2402 = vadd.f32 %v2092, %v2401
        %v2403 = vpop.f32.mrf.mxu0
        %2404 = vmatprep.mubr.f32.mxu0 0.0
        %2405 = vmatmul.mubr.f32.gmra.mxu0 %v2185
        %v2406 = vpop.f32.mrf.mxu0
        %v2407 = vadd.f32 %v2092, %v2406
        %v2408 = vpop.f32.mrf.mxu0
        %2409 = vmatprep.mubr.f32.mxu0 0.0
        %2410 = vmatmul.mubr.f32.gmra.mxu0 %v2188
        %v2411 = vpop.f32.mrf.mxu0
        %v2412 = vadd.f32 %v2092, %v2411
        %v2413 = vpop.f32.mrf.mxu0
        %2414 = vdwg.mxu0
        %v2415 = vadd.f32 %v2257, %v443
        %v2416 = vadd.f32 %v2262, %v444
        %v2417 = vadd.f32 %v2267, %v445
        %v2418 = vadd.f32 %v2272, %v446
        %v2419 = vadd.f32 %v2277, %v447
        %v2420 = vadd.f32 %v2282, %v448
        %v2421 = vadd.f32 %v2287, %v449
        %v2422 = vadd.f32 %v2292, %v450
        %v2423 = vadd.f32 %v2297, %v451
        %v2424 = vadd.f32 %v2302, %v452
        %v2425 = vadd.f32 %v2307, %v453
        %v2426 = vadd.f32 %v2312, %v454
        %v2427 = vadd.f32 %v2317, %v455
        %v2428 = vadd.f32 %v2322, %v456
        %v2429 = vadd.f32 %v2327, %v457
        %v2430 = vadd.f32 %v2332, %v458
        %v2431 = vadd.f32 %v2337, %v459
        %v2432 = vadd.f32 %v2342, %v460
        %v2433 = vadd.f32 %v2347, %v461
        %v2434 = vadd.f32 %v2352, %v462
        %v2435 = vadd.f32 %v2357, %v463
        %v2436 = vadd.f32 %v2362, %v464
        %v2437 = vadd.f32 %v2367, %v465
        %v2438 = vadd.f32 %v2372, %v466
        %v2439 = vadd.f32 %v2377, %v467
        %v2440 = vadd.f32 %v2382, %v468
        %v2441 = vadd.f32 %v2387, %v469
        %v2442 = vadd.f32 %v2392, %v470
        %v2443 = vadd.f32 %v2397, %v471
        %v2444 = vadd.f32 %v2402, %v472
        %v2445 = vadd.f32 %v2407, %v473
        %v2446 = vadd.f32 %v2412, %v474
        %2447 = vst.msk [vmem:[%s442] sm:$0xff] %vm492, %v2415
        %2448 = vst.msk [vmem:[%s442 + $0x8] sm:$0xff] %vm492, %v2416
        %2449 = vst.msk [vmem:[%s442 + $0x10] sm:$0xff] %vm492, %v2417
        %2450 = vst.msk [vmem:[%s442 + $0x18] sm:$0xff] %vm492, %v2418
        %2451 = vst.msk [vmem:[%s442 + $0x20] sm:$0xff] %vm492, %v2419
        %2452 = vst.msk [vmem:[%s442 + $0x28] sm:$0xff] %vm492, %v2420
        %2453 = vst.msk [vmem:[%s442 + $0x30] sm:$0xff] %vm492, %v2421
        %2454 = vst.msk [vmem:[%s442 + $0x38] sm:$0xff] %vm492, %v2422
        %2455 = vst.msk [vmem:[%s442 + $0x40] sm:$0xff] %vm492, %v2423
        %2456 = vst.msk [vmem:[%s442 + $0x48] sm:$0xff] %vm492, %v2424
        %2457 = vst.msk [vmem:[%s442 + $0x50] sm:$0xff] %vm492, %v2425
        %2458 = vst.msk [vmem:[%s442 + $0x58] sm:$0xff] %vm492, %v2426
        %2459 = vst.msk [vmem:[%s442 + $0x60] sm:$0xff] %vm492, %v2427
        %2460 = vst.msk [vmem:[%s442 + $0x68] sm:$0xff] %vm492, %v2428
        %2461 = vst.msk [vmem:[%s442 + $0x70] sm:$0xff] %vm492, %v2429
        %2462 = vst.msk [vmem:[%s442 + $0x78] sm:$0xff] %vm492, %v2430
        %2463 = vst.msk [vmem:[%s442 + $0x80] sm:$0xff] %vm492, %v2431
        %2464 = vst.msk [vmem:[%s442 + $0x88] sm:$0xff] %vm492, %v2432
        %2465 = vst.msk [vmem:[%s442 + $0x90] sm:$0xff] %vm492, %v2433
        %2466 = vst.msk [vmem:[%s442 + $0x98] sm:$0xff] %vm492, %v2434
        %2467 = vst.msk [vmem:[%s442 + $0xa0] sm:$0xff] %vm492, %v2435
        %2468 = vst.msk [vmem:[%s442 + $0xa8] sm:$0xff] %vm492, %v2436
        %2469 = vst.msk [vmem:[%s442 + $0xb0] sm:$0xff] %vm492, %v2437
        %2470 = vst.msk [vmem:[%s442 + $0xb8] sm:$0xff] %vm492, %v2438
        %2471 = vst.msk [vmem:[%s442 + $0xc0] sm:$0xff] %vm492, %v2439
        %2472 = vst.msk [vmem:[%s442 + $0xc8] sm:$0xff] %vm492, %v2440
        %2473 = vst.msk [vmem:[%s442 + $0xd0] sm:$0xff] %vm492, %v2441
        %2474 = vst.msk [vmem:[%s442 + $0xd8] sm:$0xff] %vm492, %v2442
        %2475 = vst.msk [vmem:[%s442 + $0xe0] sm:$0xff] %vm492, %v2443
        %2476 = vst.msk [vmem:[%s442 + $0xe8] sm:$0xff] %vm492, %v2444
        %2477 = vst.msk [vmem:[%s442 + $0xf0] sm:$0xff] %vm492, %v2445
        %2478 = vst.msk [vmem:[%s442 + $0xf8] sm:$0xff] %vm492, %v2446
        %p2479 = scmp.lt.s32.totalorder %s24, 1
        %s2480 = scalar_select %p2479, %s24, 1
        %s2481 = smul.addr %s2480, 32
        %s2482 = smul.addr %s2481, 8
        %s2483 = scalar_lea.vmem %s10, %s2482
        // Predicated region
        $region81: #{gcm_forward.2} parent=59 // pred_check
          %p2484 = pneg %p262
        $region82: #{gcm_forward.2} parent=59 // pred_check_branch
          %2486 = sbr.rel (%p2484) target = $region84
        $region83: #{gcm_forward.2} parent=59 // pred_region
          _
        $region84: #{gcm_forward.2} parent=59 // pred_fallthru
          _
      $region60: #{gcm_forward.2} parent=5 // pred_fallthru
        _
      %p2487 = scmp.le.s32.totalorder 2, %s19
      // Predicated region
      $region85: #{gcm_forward.2} parent=5 // pred_check
        %p2488 = pneg %p2487
      $region86: #{gcm_forward.2} parent=5 // pred_check_branch
        %2490 = sbr.rel (%p2488) target = $region88
      $region87: #{gcm_forward.2} parent=5 // pred_region
        %s2491 = ssub.s32 %s19, 2
        // Predicated region
        $region89: #{gcm_forward.2} parent=87 // pred_check
          %p2492 = pneg %p268
        $region90: #{gcm_forward.2} parent=87 // pred_check_branch
          %2494 = sbr.rel (%p2492) target = $region92
        $region91: #{gcm_forward.2} parent=87 // pred_region
          %p2495 = scmp.lt.s32.totalorder %s25, 1
          %s2496 = scalar_select %p2495, %s25, 1
          %s2497 = smul.addr %s2496, 32
          %s2498 = smul.addr %s2497, 8
          %s2499 = scalar_lea.vmem %s10, %s2498
        $region92: #{gcm_forward.2} parent=87 // pred_fallthru
          _
      $region88: #{gcm_forward.2} parent=5 // pred_fallthru
        _
    $region6: #{gcm_forward.2} parent=1 // loop_footer
      %s23 = sadd.s32 1, %s19
    $region7: #{gcm_forward.2} parent=1 // loop_footer_branch
      %18 = sbr.rel target = $region3
    $region8: #{gcm_forward.2} parent=1 // loop_exit
      _
    %2500 = vsyncpa [#allocation3], 1
    %s2501 = scalar_lea.sflag [#allocation3], 1
    %2502 = vsyncpa %s2501, 1
    %2503 = vsyncpa [#allocation5], 1
    %2504 = vsyncpa [#allocation8], 1

// kernel: gcm_forward.3
$region0: #{gcm_forward.3}
  #allocation0 [shape = 'u32[]', space=smem, size = 0x4, offset = 0x4, fixed_abs, tag = 'smem constant byte address 0x4 - core index']
  #allocation1 [shape = 'u32[144,128]{1,0:T(1,128)}', space=vmem, size = 0x12000, scoped, tag = 'internal scratch']
  %s0 = inlined_call_operand.vmem [shape: bf16[512,576], index: 0, kind: input, shape index: {}]
  %s1 = inlined_call_operand.vmem [shape: bf16[576,512], index: 1, kind: input, shape index: {}]
  %s2 = inlined_call_operand.vmem [shape: f32[1,512], index: 2, kind: input, shape index: {}]
  %s3 = inlined_call_operand.vmem [shape: f32[512,512], index: 3, kind: output, shape index: {}]
  %s4 = sld [smem:[#allocation0]]
  $region45: #{gcm_forward.3} parent=0
    _
  %s6 = ssub.s32 1, %s4
  %s7 = scalar_select 0, %s6, %s4
  loop: start=0, step=1, limit=4
  $region2: #{gcm_forward.3} parent=0 // loop_pre_header
    _
  $region3: #{gcm_forward.3} parent=0 // loop_header
    %s9 = sphi 0, %s13
    %p10 = scmp.ge.s32.totalorder %s9, 4
    %s19 = sphi 0, %s21
    %s22 = sphi 0, %s19
    %s23 = sphi 0, %s22
    %s39 = sphi 0, %s23
    %s43 = sphi 0, %s43
    %s45 = sphi 0, %s43
    %s46 = sphi 0, %s45
    %s60 = sphi 0, %s46
    %s64 = sphi 0, %s64
    %s66 = sphi 0, %s64
    %s67 = sphi 0, %s66
    %s81 = sphi 0, %s67
    %s87 = sphi 0, %s89
    %s90 = sphi 0, %s87
    %s91 = sphi 0, %s90
    %s107 = sphi 0, %s91
  $region4: #{gcm_forward.3} parent=0 // loop_header_branch
    %12 = sbr.rel (%p10) target = $region8
  $region5: #{gcm_forward.3} parent=0 // loop_body
    %s14 = ssub.s32 %s9, 1
    %s15 = ssub.s32 %s9, 2
    %s16 = sadd.s32 %s9, 1
    %s17 = ssub.s32 %s9, %s16
    %p18 = scmp.eq.s32.totalorder %s17, 0
    %s20 = sadd.s32 %s19, 1
    %s21 = scalar_select %p18, %s19, %s20
    %p24 = pneg %p18
    %p25 = scmp.eq.s32.totalorder %s9, 1
    %p26 = por %p24, %p25
    %p27 = scmp.ne.s32.totalorder %s19, %s22
    %p28 = scmp.eq.s32.totalorder %s9, 0
    %p29 = por %p27, %p28
    %p30 = scmp.ne.s32.totalorder %s19, %s22
    %p31 = scmp.eq.s32.totalorder %s14, 1
    %p32 = por %p30, %p31
    %p33 = scmp.ne.s32.totalorder %s22, %s23
    %p34 = scmp.eq.s32.totalorder %s14, 0
    %p35 = por %p33, %p34
    %p36 = scmp.ne.s32.totalorder %s22, %s23
    %p37 = scmp.eq.s32.totalorder %s15, 1
    %p38 = por %p36, %p37
    %p40 = scmp.ne.s32.totalorder %s23, %s39
    %p41 = scmp.eq.s32.totalorder %s15, 0
    %p42 = por %p40, %p41
    %s44 = sadd.s32 %s43, 1
    %p47 = scmp.eq.s32.totalorder %s9, 1
    %p48 = scmp.ne.s32.totalorder %s43, %s45
    %p49 = scmp.eq.s32.totalorder %s9, 0
    %p50 = por %p48, %p49
    %p51 = scmp.ne.s32.totalorder %s43, %s45
    %p52 = scmp.eq.s32.totalorder %s14, 1
    %p53 = por %p51, %p52
    %p54 = scmp.ne.s32.totalorder %s45, %s46
    %p55 = scmp.eq.s32.totalorder %s14, 0
    %p56 = por %p54, %p55
    %p57 = scmp.ne.s32.totalorder %s45, %s46
    %p58 = scmp.eq.s32.totalorder %s15, 1
    %p59 = por %p57, %p58
    %p61 = scmp.ne.s32.totalorder %s46, %s60
    %p62 = scmp.eq.s32.totalorder %s15, 0
    %p63 = por %p61, %p62
    %s65 = sadd.s32 %s64, 1
    %p68 = scmp.eq.s32.totalorder %s9, 1
    %p69 = scmp.ne.s32.totalorder %s64, %s66
    %p70 = scmp.eq.s32.totalorder %s9, 0
    %p71 = por %p69, %p70
    %p72 = scmp.ne.s32.totalorder %s64, %s66
    %p73 = scmp.eq.s32.totalorder %s14, 1
    %p74 = por %p72, %p73
    %p75 = scmp.ne.s32.totalorder %s66, %s67
    %p76 = scmp.eq.s32.totalorder %s14, 0
    %p77 = por %p75, %p76
    %p78 = scmp.ne.s32.totalorder %s66, %s67
    %p79 = scmp.eq.s32.totalorder %s15, 1
    %p80 = por %p78, %p79
    %p82 = scmp.ne.s32.totalorder %s67, %s81
    %p83 = scmp.eq.s32.totalorder %s15, 0
    %p84 = por %p82, %p83
    %s85 = ssub.s32 %s9, %s16
    %p86 = scmp.eq.s32.totalorder %s85, 0
    %s88 = sadd.s32 %s87, 1
    %s89 = scalar_select %p86, %s87, %s88
    %p92 = pneg %p86
    %p93 = scmp.eq.s32.totalorder %s9, 1
    %p94 = por %p92, %p93
    %p95 = scmp.ne.s32.totalorder %s87, %s90
    %p96 = scmp.eq.s32.totalorder %s9, 0
    %p97 = por %p95, %p96
    %p98 = scmp.ne.s32.totalorder %s87, %s90
    %p99 = scmp.eq.s32.totalorder %s14, 1
    %p100 = por %p98, %p99
    %p101 = scmp.ne.s32.totalorder %s90, %s91
    %p102 = scmp.eq.s32.totalorder %s14, 0
    %p103 = por %p101, %p102
    %p104 = scmp.ne.s32.totalorder %s90, %s91
    %p105 = scmp.eq.s32.totalorder %s15, 1
    %p106 = por %p104, %p105
    %p108 = scmp.ne.s32.totalorder %s91, %s107
    %p109 = scmp.eq.s32.totalorder %s15, 0
    %p110 = por %p108, %p109
    %p111 = scmp.le.s32.totalorder 1, %s9
    %p112 = scmp.lt.s32.totalorder %s9, 3
    %p113 = pnand %p111, %p112
    %p114 = pneg %p113
    // Predicated region
    $region9: #{gcm_forward.3} parent=5 // pred_check
      _
    $region10: #{gcm_forward.3} parent=5 // pred_check_branch
      %116 = sbr.rel (%p113) target = $region12
    $region11: #{gcm_forward.3} parent=5 // pred_region
      %s117 = ssub.s32 %s9, 1
      // Predicated region
      $region13: #{gcm_forward.3} parent=11 // pred_check
        %p118 = pneg %p56
      $region14: #{gcm_forward.3} parent=11 // pred_check_branch
        %120 = sbr.rel (%p118) target = $region16
      $region15: #{gcm_forward.3} parent=11 // pred_region
        _
      $region16: #{gcm_forward.3} parent=11 // pred_fallthru
        _
      // Predicated region
      $region17: #{gcm_forward.3} parent=11 // pred_check
        %p121 = pneg %p77
      $region18: #{gcm_forward.3} parent=11 // pred_check_branch
        %123 = sbr.rel (%p121) target = $region20
      $region19: #{gcm_forward.3} parent=11 // pred_region
        _
      $region20: #{gcm_forward.3} parent=11 // pred_fallthru
        _
    $region12: #{gcm_forward.3} parent=5 // pred_fallthru
      _
    %p124 = scmp.lt.s32.totalorder %s9, 2
    // Predicated region
    $region21: #{gcm_forward.3} parent=5 // pred_check
      %p125 = pneg %p124
    $region22: #{gcm_forward.3} parent=5 // pred_check_branch
      %127 = sbr.rel (%p125) target = $region24
    $region23: #{gcm_forward.3} parent=5 // pred_region
      // Predicated region
      $region25: #{gcm_forward.3} parent=23 // pred_check
        %p128 = pneg %p29
      $region26: #{gcm_forward.3} parent=23 // pred_check_branch
        %130 = sbr.rel (%p128) target = $region28
      $region27: #{gcm_forward.3} parent=23 // pred_region
        %s131 = smul.u32 32, %s9
        %p132 = scmp.lt.s32.totalorder %s131, 63
        %s133 = scalar_select %p132, %s131, 63
        %s134 = smul.addr %s133, 5
        %s135 = smul.addr %s134, 4
        %s136 = scalar_lea.vmem %s0, %s135
        %s137 = smul.u32 32, %s9
      $region28: #{gcm_forward.3} parent=23 // pred_fallthru
        _
    $region24: #{gcm_forward.3} parent=5 // pred_fallthru
      _
    %p138 = scmp.le.s32.totalorder 1, %s9
    %p139 = scmp.lt.s32.totalorder %s9, 3
    %p140 = pnand %p138, %p139
    %p141 = pneg %p140
    // Predicated region
    $region29: #{gcm_forward.3} parent=5 // pred_check
      _
    $region30: #{gcm_forward.3} parent=5 // pred_check_branch
      %143 = sbr.rel (%p140) target = $region32
    $region31: #{gcm_forward.3} parent=5 // pred_region
      %s144 = ssub.s32 %s9, 1
      %s145 = smul.u32 32, %s14
      %p146 = scmp.lt.s32.totalorder %s145, 63
      %s147 = scalar_select %p146, %s145, 63
      %s148 = smul.addr %s147, 5
      %s149 = smul.addr %s148, 4
      %s150 = scalar_lea.vmem %s0, %s149
      %p151 = pneg %p35
      %p152 = pneg %p32
      %p153 = pneg %p56
      %p154 = pneg %p53
      %p155 = pneg %p77
      %p156 = pneg %p74
      %p157 = pneg %p103
      %p158 = pneg %p100
      %s159 = smul.u32 32, %s14
      %p160 = scmp.lt.s32.totalorder %s159, 63
      %s161 = scalar_select %p160, %s159, 63
      %s162 = smul.addr %s161, 4
      %s163 = smul.addr %s162, 8
      %s164 = scalar_lea.vmem %s3, %s163
      %s165 = smul.u32 32, %s14
      %p166 = scmp.lt.s32.totalorder %s165, 63
      %s167 = scalar_select %p166, %s165, 63
      %s168 = smul.addr %s167, 5
      %s169 = smul.addr %s168, 4
      %s170 = scalar_lea.vmem %s0, %s169
      %s171 = smul.u32 32, %s14
      %s172 = smul.u32 32, %s14
      %p173 = scmp.lt.s32.totalorder %s172, 63
      %s174 = scalar_select %p173, %s172, 63
      %s175 = smul.addr %s174, 4
      %s176 = smul.addr %s175, 8
      %s177 = scalar_lea.vmem %s3, %s176
      %s178 = smul.u32 32, %s14
      %v180 = vld [vmem:[%s170] sm:$0xff]
      %v181 = vld [vmem:[%s170 + $0x8] sm:$0xff]
      %v182 = vld [vmem:[%s170 + $0x10] sm:$0xf]
      %v183 = vld [vmem:[%s170 + $0x14] sm:$0xff]
      %v184 = vld [vmem:[%s170 + $0x1c] sm:$0xff]
      %v185 = vld [vmem:[%s170 + $0x24] sm:$0xf]
      %v186 = vld [vmem:[%s170 + $0x28] sm:$0xff]
      %v187 = vld [vmem:[%s170 + $0x30] sm:$0xff]
      %v188 = vld [vmem:[%s170 + $0x38] sm:$0xf]
      %v189 = vld [vmem:[%s170 + $0x3c] sm:$0xff]
      %v190 = vld [vmem:[%s170 + $0x44] sm:$0xff]
      %v191 = vld [vmem:[%s170 + $0x4c] sm:$0xf]
      %v192 = vld [vmem:[%s170 + $0x50] sm:$0xff]
      %v193 = vld [vmem:[%s170 + $0x58] sm:$0xff]
      %v194 = vld [vmem:[%s170 + $0x60] sm:$0xf]
      %v195 = vld [vmem:[%s170 + $0x64] sm:$0xff]
      %v196 = vld [vmem:[%s170 + $0x6c] sm:$0xff]
      %v197 = vld [vmem:[%s170 + $0x74] sm:$0xf]
      %v198 = vld [vmem:[%s170 + $0x78] sm:$0xff]
      %v199 = vld [vmem:[%s170 + $0x80] sm:$0xff]
      %v200 = vld [vmem:[%s170 + $0x88] sm:$0xf]
      %v201 = vld [vmem:[%s170 + $0x8c] sm:$0xff]
      %v202 = vld [vmem:[%s170 + $0x94] sm:$0xff]
      %v203 = vld [vmem:[%s170 + $0x9c] sm:$0xf]
      %v204 = vld [vmem:[%s170 + $0xa0] sm:$0xff]
      %v205 = vld [vmem:[%s170 + $0xa8] sm:$0xff]
      %v206 = vld [vmem:[%s170 + $0xb0] sm:$0xf]
      %v207 = vld [vmem:[%s170 + $0xb4] sm:$0xff]
      %v208 = vld [vmem:[%s170 + $0xbc] sm:$0xff]
      %v209 = vld [vmem:[%s170 + $0xc4] sm:$0xf]
      %v210 = vld [vmem:[%s170 + $0xc8] sm:$0xff]
      %v211 = vld [vmem:[%s170 + $0xd0] sm:$0xff]
      %v212 = vld [vmem:[%s170 + $0xd8] sm:$0xf]
      %v213 = vld [vmem:[%s170 + $0xdc] sm:$0xff]
      %v214 = vld [vmem:[%s170 + $0xe4] sm:$0xff]
      %v215 = vld [vmem:[%s170 + $0xec] sm:$0xf]
      %v216 = vld [vmem:[%s170 + $0xf0] sm:$0xff]
      %v217 = vld [vmem:[%s170 + $0xf8] sm:$0xff]
      %v218 = vld [vmem:[%s170 + $0x100] sm:$0xf]
      %v219 = vld [vmem:[%s170 + $0x104] sm:$0xff]
      %v220 = vld [vmem:[%s170 + $0x10c] sm:$0xff]
      %v221 = vld [vmem:[%s170 + $0x114] sm:$0xf]
      %v222 = vld [vmem:[%s170 + $0x118] sm:$0xff]
      %v223 = vld [vmem:[%s170 + $0x120] sm:$0xff]
      %v224 = vld [vmem:[%s170 + $0x128] sm:$0xf]
      %v225 = vld [vmem:[%s170 + $0x12c] sm:$0xff]
      %v226 = vld [vmem:[%s170 + $0x134] sm:$0xff]
      %v227 = vld [vmem:[%s170 + $0x13c] sm:$0xf]
      %v228 = vld [vmem:[%s170 + $0x140] sm:$0xff]
      %v229 = vld [vmem:[%s170 + $0x148] sm:$0xff]
      %v230 = vld [vmem:[%s170 + $0x150] sm:$0xf]
      %v231 = vld [vmem:[%s170 + $0x154] sm:$0xff]
      %v232 = vld [vmem:[%s170 + $0x15c] sm:$0xff]
      %v233 = vld [vmem:[%s170 + $0x164] sm:$0xf]
      %v234 = vld [vmem:[%s170 + $0x168] sm:$0xff]
      %v235 = vld [vmem:[%s170 + $0x170] sm:$0xff]
      %v236 = vld [vmem:[%s170 + $0x178] sm:$0xf]
      %v237 = vld [vmem:[%s170 + $0x17c] sm:$0xff]
      %v238 = vld [vmem:[%s170 + $0x184] sm:$0xff]
      %v239 = vld [vmem:[%s170 + $0x18c] sm:$0xf]
      %v240 = vld [vmem:[%s170 + $0x190] sm:$0xff]
      %v241 = vld [vmem:[%s170 + $0x198] sm:$0xff]
      %v242 = vld [vmem:[%s170 + $0x1a0] sm:$0xf]
      %v243 = vld [vmem:[%s170 + $0x1a4] sm:$0xff]
      %v244 = vld [vmem:[%s170 + $0x1ac] sm:$0xff]
      %v245 = vld [vmem:[%s170 + $0x1b4] sm:$0xf]
      %v246 = vld [vmem:[%s170 + $0x1b8] sm:$0xff]
      %v247 = vld [vmem:[%s170 + $0x1c0] sm:$0xff]
      %v248 = vld [vmem:[%s170 + $0x1c8] sm:$0xf]
      %v249 = vld [vmem:[%s170 + $0x1cc] sm:$0xff]
      %v250 = vld [vmem:[%s170 + $0x1d4] sm:$0xff]
      %v251 = vld [vmem:[%s170 + $0x1dc] sm:$0xf]
      %v252 = vld [vmem:[%s170 + $0x1e0] sm:$0xff]
      %v253 = vld [vmem:[%s170 + $0x1e8] sm:$0xff]
      %v254 = vld [vmem:[%s170 + $0x1f0] sm:$0xf]
      %v255 = vld [vmem:[%s170 + $0x1f4] sm:$0xff]
      %v256 = vld [vmem:[%s170 + $0x1fc] sm:$0xff]
      %v257 = vld [vmem:[%s170 + $0x204] sm:$0xf]
      %v258 = vld [vmem:[%s170 + $0x208] sm:$0xff]
      %v259 = vld [vmem:[%s170 + $0x210] sm:$0xff]
      %v260 = vld [vmem:[%s170 + $0x218] sm:$0xf]
      %v261 = vld [vmem:[%s170 + $0x21c] sm:$0xff]
      %v262 = vld [vmem:[%s170 + $0x224] sm:$0xff]
      %v263 = vld [vmem:[%s170 + $0x22c] sm:$0xf]
      %v264 = vld [vmem:[%s170 + $0x230] sm:$0xff]
      %v265 = vld [vmem:[%s170 + $0x238] sm:$0xff]
      %v266 = vld [vmem:[%s170 + $0x240] sm:$0xf]
      %v267 = vld [vmem:[%s170 + $0x244] sm:$0xff]
      %v268 = vld [vmem:[%s170 + $0x24c] sm:$0xff]
      %v269 = vld [vmem:[%s170 + $0x254] sm:$0xf]
      %v270 = vld [vmem:[%s170 + $0x258] sm:$0xff]
      %v271 = vld [vmem:[%s170 + $0x260] sm:$0xff]
      %v272 = vld [vmem:[%s170 + $0x268] sm:$0xf]
      %v273 = vld [vmem:[%s170 + $0x26c] sm:$0xff]
      %v274 = vld [vmem:[%s170 + $0x274] sm:$0xff]
      %v275 = vld [vmem:[%s170 + $0x27c] sm:$0xf]
      %v276 = vld [vmem:[%s1] sm:$0xff]
      %v277 = vld [vmem:[%s1 + $0x8] sm:$0xff]
      %v278 = vld [vmem:[%s1 + $0x10] sm:$0xff]
      %v279 = vld [vmem:[%s1 + $0x18] sm:$0xff]
      %v280 = vld [vmem:[%s1 + $0x20] sm:$0xff]
      %v281 = vld [vmem:[%s1 + $0x28] sm:$0xff]
      %v282 = vld [vmem:[%s1 + $0x30] sm:$0xff]
      %v283 = vld [vmem:[%s1 + $0x38] sm:$0xff]
      %v284 = vld [vmem:[%s1 + $0x40] sm:$0xff]
      %v285 = vld [vmem:[%s1 + $0x48] sm:$0xff]
      %v286 = vld [vmem:[%s1 + $0x50] sm:$0xff]
      %v287 = vld [vmem:[%s1 + $0x58] sm:$0xff]
      %v288 = vld [vmem:[%s1 + $0x60] sm:$0xff]
      %v289 = vld [vmem:[%s1 + $0x68] sm:$0xff]
      %v290 = vld [vmem:[%s1 + $0x70] sm:$0xff]
      %v291 = vld [vmem:[%s1 + $0x78] sm:$0xff]
      %v292 = vld [vmem:[%s1 + $0x80] sm:$0xff]
      %v293 = vld [vmem:[%s1 + $0x88] sm:$0xff]
      %v294 = vld [vmem:[%s1 + $0x90] sm:$0xff]
      %v295 = vld [vmem:[%s1 + $0x98] sm:$0xff]
      %v296 = vld [vmem:[%s1 + $0xa0] sm:$0xff]
      %v297 = vld [vmem:[%s1 + $0xa8] sm:$0xff]
      %v298 = vld [vmem:[%s1 + $0xb0] sm:$0xff]
      %v299 = vld [vmem:[%s1 + $0xb8] sm:$0xff]
      %v300 = vld [vmem:[%s1 + $0xc0] sm:$0xff]
      %v301 = vld [vmem:[%s1 + $0xc8] sm:$0xff]
      %v302 = vld [vmem:[%s1 + $0xd0] sm:$0xff]
      %v303 = vld [vmem:[%s1 + $0xd8] sm:$0xff]
      %v304 = vld [vmem:[%s1 + $0xe0] sm:$0xff]
      %v305 = vld [vmem:[%s1 + $0xe8] sm:$0xff]
      %v306 = vld [vmem:[%s1 + $0xf0] sm:$0xff]
      %v307 = vld [vmem:[%s1 + $0xf8] sm:$0xff]
      %v308 = vld [vmem:[%s1 + $0x100] sm:$0xff]
      %v309 = vld [vmem:[%s1 + $0x108] sm:$0xff]
      %v310 = vld [vmem:[%s1 + $0x110] sm:$0xff]
      %v311 = vld [vmem:[%s1 + $0x118] sm:$0xff]
      %v312 = vld [vmem:[%s1 + $0x120] sm:$0xff]
      %v313 = vld [vmem:[%s1 + $0x128] sm:$0xff]
      %v314 = vld [vmem:[%s1 + $0x130] sm:$0xff]
      %v315 = vld [vmem:[%s1 + $0x138] sm:$0xff]
      %v316 = vld [vmem:[%s1 + $0x140] sm:$0xff]
      %v317 = vld [vmem:[%s1 + $0x148] sm:$0xff]
      %v318 = vld [vmem:[%s1 + $0x150] sm:$0xff]
      %v319 = vld [vmem:[%s1 + $0x158] sm:$0xff]
      %v320 = vld [vmem:[%s1 + $0x160] sm:$0xff]
      %v321 = vld [vmem:[%s1 + $0x168] sm:$0xff]
      %v322 = vld [vmem:[%s1 + $0x170] sm:$0xff]
      %v323 = vld [vmem:[%s1 + $0x178] sm:$0xff]
      %v324 = vld [vmem:[%s1 + $0x180] sm:$0xff]
      %v325 = vld [vmem:[%s1 + $0x188] sm:$0xff]
      %v326 = vld [vmem:[%s1 + $0x190] sm:$0xff]
      %v327 = vld [vmem:[%s1 + $0x198] sm:$0xff]
      %v328 = vld [vmem:[%s1 + $0x1a0] sm:$0xff]
      %v329 = vld [vmem:[%s1 + $0x1a8] sm:$0xff]
      %v330 = vld [vmem:[%s1 + $0x1b0] sm:$0xff]
      %v331 = vld [vmem:[%s1 + $0x1b8] sm:$0xff]
      %v332 = vld [vmem:[%s1 + $0x1c0] sm:$0xff]
      %v333 = vld [vmem:[%s1 + $0x1c8] sm:$0xff]
      %v334 = vld [vmem:[%s1 + $0x1d0] sm:$0xff]
      %v335 = vld [vmem:[%s1 + $0x1d8] sm:$0xff]
      %v336 = vld [vmem:[%s1 + $0x1e0] sm:$0xff]
      %v337 = vld [vmem:[%s1 + $0x1e8] sm:$0xff]
      %v338 = vld [vmem:[%s1 + $0x1f0] sm:$0xff]
      %v339 = vld [vmem:[%s1 + $0x1f8] sm:$0xff]
      %v340 = vld [vmem:[%s1 + $0x200] sm:$0xff]
      %v341 = vld [vmem:[%s1 + $0x208] sm:$0xff]
      %v342 = vld [vmem:[%s1 + $0x210] sm:$0xff]
      %v343 = vld [vmem:[%s1 + $0x218] sm:$0xff]
      %v344 = vld [vmem:[%s1 + $0x220] sm:$0xff]
      %v345 = vld [vmem:[%s1 + $0x228] sm:$0xff]
      %v346 = vld [vmem:[%s1 + $0x230] sm:$0xff]
      %v347 = vld [vmem:[%s1 + $0x238] sm:$0xff]
      %v348 = vld [vmem:[%s1 + $0x240] sm:$0xff]
      %v349 = vld [vmem:[%s1 + $0x248] sm:$0xff]
      %v350 = vld [vmem:[%s1 + $0x250] sm:$0xff]
      %v351 = vld [vmem:[%s1 + $0x258] sm:$0xff]
      %v352 = vld [vmem:[%s1 + $0x260] sm:$0xff]
      %v353 = vld [vmem:[%s1 + $0x268] sm:$0xff]
      %v354 = vld [vmem:[%s1 + $0x270] sm:$0xff]
      %v355 = vld [vmem:[%s1 + $0x278] sm:$0xff]
      %v356 = vld [vmem:[%s1 + $0x280] sm:$0xff]
      %v357 = vld [vmem:[%s1 + $0x288] sm:$0xff]
      %v358 = vld [vmem:[%s1 + $0x290] sm:$0xff]
      %v359 = vld [vmem:[%s1 + $0x298] sm:$0xff]
      %v360 = vld [vmem:[%s1 + $0x2a0] sm:$0xff]
      %v361 = vld [vmem:[%s1 + $0x2a8] sm:$0xff]
      %v362 = vld [vmem:[%s1 + $0x2b0] sm:$0xff]
      %v363 = vld [vmem:[%s1 + $0x2b8] sm:$0xff]
      %v364 = vld [vmem:[%s1 + $0x2c0] sm:$0xff]
      %v365 = vld [vmem:[%s1 + $0x2c8] sm:$0xff]
      %v366 = vld [vmem:[%s1 + $0x2d0] sm:$0xff]
      %v367 = vld [vmem:[%s1 + $0x2d8] sm:$0xff]
      %v368 = vld [vmem:[%s1 + $0x2e0] sm:$0xff]
      %v369 = vld [vmem:[%s1 + $0x2e8] sm:$0xff]
      %v370 = vld [vmem:[%s1 + $0x2f0] sm:$0xff]
      %v371 = vld [vmem:[%s1 + $0x2f8] sm:$0xff]
      %v372 = vld [vmem:[%s1 + $0x300] sm:$0xff]
      %v373 = vld [vmem:[%s1 + $0x308] sm:$0xff]
      %v374 = vld [vmem:[%s1 + $0x310] sm:$0xff]
      %v375 = vld [vmem:[%s1 + $0x318] sm:$0xff]
      %v376 = vld [vmem:[%s1 + $0x320] sm:$0xff]
      %v377 = vld [vmem:[%s1 + $0x328] sm:$0xff]
      %v378 = vld [vmem:[%s1 + $0x330] sm:$0xff]
      %v379 = vld [vmem:[%s1 + $0x338] sm:$0xff]
      %v380 = vld [vmem:[%s1 + $0x340] sm:$0xff]
      %v381 = vld [vmem:[%s1 + $0x348] sm:$0xff]
      %v382 = vld [vmem:[%s1 + $0x350] sm:$0xff]
      %v383 = vld [vmem:[%s1 + $0x358] sm:$0xff]
      %v384 = vld [vmem:[%s1 + $0x360] sm:$0xff]
      %v385 = vld [vmem:[%s1 + $0x368] sm:$0xff]
      %v386 = vld [vmem:[%s1 + $0x370] sm:$0xff]
      %v387 = vld [vmem:[%s1 + $0x378] sm:$0xff]
      %v388 = vld [vmem:[%s1 + $0x380] sm:$0xff]
      %v389 = vld [vmem:[%s1 + $0x388] sm:$0xff]
      %v390 = vld [vmem:[%s1 + $0x390] sm:$0xff]
      %v391 = vld [vmem:[%s1 + $0x398] sm:$0xff]
      %v392 = vld [vmem:[%s1 + $0x3a0] sm:$0xff]
      %v393 = vld [vmem:[%s1 + $0x3a8] sm:$0xff]
      %v394 = vld [vmem:[%s1 + $0x3b0] sm:$0xff]
      %v395 = vld [vmem:[%s1 + $0x3b8] sm:$0xff]
      %v396 = vld [vmem:[%s1 + $0x3c0] sm:$0xff]
      %v397 = vld [vmem:[%s1 + $0x3c8] sm:$0xff]
      %v398 = vld [vmem:[%s1 + $0x3d0] sm:$0xff]
      %v399 = vld [vmem:[%s1 + $0x3d8] sm:$0xff]
      %v400 = vld [vmem:[%s1 + $0x3e0] sm:$0xff]
      %v401 = vld [vmem:[%s1 + $0x3e8] sm:$0xff]
      %v402 = vld [vmem:[%s1 + $0x3f0] sm:$0xff]
      %v403 = vld [vmem:[%s1 + $0x3f8] sm:$0xff]
      %v404 = vld [vmem:[%s1 + $0x400] sm:$0xff]
      %v405 = vld [vmem:[%s1 + $0x408] sm:$0xff]
      %v406 = vld [vmem:[%s1 + $0x410] sm:$0xff]
      %v407 = vld [vmem:[%s1 + $0x418] sm:$0xff]
      %v408 = vld [vmem:[%s1 + $0x420] sm:$0xff]
      %v409 = vld [vmem:[%s1 + $0x428] sm:$0xff]
      %v410 = vld [vmem:[%s1 + $0x430] sm:$0xff]
      %v411 = vld [vmem:[%s1 + $0x438] sm:$0xff]
      %v412 = vld [vmem:[%s1 + $0x440] sm:$0xff]
      %v413 = vld [vmem:[%s1 + $0x448] sm:$0xff]
      %v414 = vld [vmem:[%s1 + $0x450] sm:$0xff]
      %v415 = vld [vmem:[%s1 + $0x458] sm:$0xff]
      %v416 = vld [vmem:[%s1 + $0x460] sm:$0xff]
      %v417 = vld [vmem:[%s1 + $0x468] sm:$0xff]
      %v418 = vld [vmem:[%s1 + $0x470] sm:$0xff]
      %v419 = vld [vmem:[%s1 + $0x478] sm:$0xff]
      %v420 = vld [vmem:[%s2] sm:$0xf]
      %v422 = vlaneseq
      %v423 = vshrl.u32 %v422, 7
      %v424 = vsub.s32 0, %v423
      %v425 = vrot.slane %v420, %v424
      %v426 = vlaneseq
      %v427 = vshrl.u32 %v426, 7
      %v428 = vsub.s32 1, %v427
      %v429 = vrot.slane %v420, %v428
      %v430 = vlaneseq
      %v431 = vshrl.u32 %v430, 7
      %v432 = vsub.s32 2, %v431
      %v433 = vrot.slane %v420, %v432
      %v434 = vlaneseq
      %v435 = vshrl.u32 %v434, 7
      %v436 = vsub.s32 3, %v435
      %v437 = vrot.slane %v420, %v436
      %v538 = vunpack.c.l.b16 %v180
      %v539 = vunpack.c.h.b16 %v180
      %v540 = vunpack.c.l.b16 %v181
      %v541 = vunpack.c.h.b16 %v181
      %v542 = vunpack.c.l.b16 %v182
      %v543 = vunpack.c.l.b16 %v183
      %v544 = vunpack.c.h.b16 %v183
      %v545 = vunpack.c.l.b16 %v184
      %v546 = vunpack.c.h.b16 %v184
      %v547 = vunpack.c.l.b16 %v185
      %v548 = vunpack.c.l.b16 %v186
      %v549 = vunpack.c.h.b16 %v186
      %v550 = vunpack.c.l.b16 %v187
      %v551 = vunpack.c.h.b16 %v187
      %v552 = vunpack.c.l.b16 %v188
      %v553 = vunpack.c.l.b16 %v189
      %v554 = vunpack.c.h.b16 %v189
      %v555 = vunpack.c.l.b16 %v190
      %v556 = vunpack.c.h.b16 %v190
      %v557 = vunpack.c.l.b16 %v191
      %v558 = vunpack.c.l.b16 %v192
      %v559 = vunpack.c.h.b16 %v192
      %v560 = vunpack.c.l.b16 %v193
      %v561 = vunpack.c.h.b16 %v193
      %v562 = vunpack.c.l.b16 %v194
      %v563 = vunpack.c.l.b16 %v195
      %v564 = vunpack.c.h.b16 %v195
      %v565 = vunpack.c.l.b16 %v196
      %v566 = vunpack.c.h.b16 %v196
      %v567 = vunpack.c.l.b16 %v197
      %v568 = vunpack.c.l.b16 %v198
      %v569 = vunpack.c.h.b16 %v198
      %v570 = vunpack.c.l.b16 %v199
      %v571 = vunpack.c.h.b16 %v199
      %v572 = vunpack.c.l.b16 %v200
      %v573 = vunpack.c.l.b16 %v201
      %v574 = vunpack.c.h.b16 %v201
      %v575 = vunpack.c.l.b16 %v202
      %v576 = vunpack.c.h.b16 %v202
      %v577 = vunpack.c.l.b16 %v203
      %v578 = vunpack.c.l.b16 %v204
      %v579 = vunpack.c.h.b16 %v204
      %v580 = vunpack.c.l.b16 %v205
      %v581 = vunpack.c.h.b16 %v205
      %v582 = vunpack.c.l.b16 %v206
      %v583 = vunpack.c.l.b16 %v207
      %v584 = vunpack.c.h.b16 %v207
      %v585 = vunpack.c.l.b16 %v208
      %v586 = vunpack.c.h.b16 %v208
      %v587 = vunpack.c.l.b16 %v209
      %v588 = vunpack.c.l.b16 %v210
      %v589 = vunpack.c.h.b16 %v210
      %v590 = vunpack.c.l.b16 %v211
      %v591 = vunpack.c.h.b16 %v211
      %v592 = vunpack.c.l.b16 %v212
      %v593 = vunpack.c.l.b16 %v213
      %v594 = vunpack.c.h.b16 %v213
      %v595 = vunpack.c.l.b16 %v214
      %v596 = vunpack.c.h.b16 %v214
      %v597 = vunpack.c.l.b16 %v215
      %v598 = vunpack.c.l.b16 %v216
      %v599 = vunpack.c.h.b16 %v216
      %v600 = vunpack.c.l.b16 %v217
      %v601 = vunpack.c.h.b16 %v217
      %v602 = vunpack.c.l.b16 %v218
      %v603 = vunpack.c.l.b16 %v219
      %v604 = vunpack.c.h.b16 %v219
      %v605 = vunpack.c.l.b16 %v220
      %v606 = vunpack.c.h.b16 %v220
      %v607 = vunpack.c.l.b16 %v221
      %v608 = vunpack.c.l.b16 %v222
      %v609 = vunpack.c.h.b16 %v222
      %v610 = vunpack.c.l.b16 %v223
      %v611 = vunpack.c.h.b16 %v223
      %v612 = vunpack.c.l.b16 %v224
      %v613 = vunpack.c.l.b16 %v225
      %v614 = vunpack.c.h.b16 %v225
      %v615 = vunpack.c.l.b16 %v226
      %v616 = vunpack.c.h.b16 %v226
      %v617 = vunpack.c.l.b16 %v227
      %v618 = vunpack.c.l.b16 %v228
      %v619 = vunpack.c.h.b16 %v228
      %v620 = vunpack.c.l.b16 %v229
      %v621 = vunpack.c.h.b16 %v229
      %v622 = vunpack.c.l.b16 %v230
      %v623 = vunpack.c.l.b16 %v231
      %v624 = vunpack.c.h.b16 %v231
      %v625 = vunpack.c.l.b16 %v232
      %v626 = vunpack.c.h.b16 %v232
      %v627 = vunpack.c.l.b16 %v233
      %v628 = vunpack.c.l.b16 %v234
      %v629 = vunpack.c.h.b16 %v234
      %v630 = vunpack.c.l.b16 %v235
      %v631 = vunpack.c.h.b16 %v235
      %v632 = vunpack.c.l.b16 %v236
      %v633 = vunpack.c.l.b16 %v237
      %v634 = vunpack.c.h.b16 %v237
      %v635 = vunpack.c.l.b16 %v238
      %v636 = vunpack.c.h.b16 %v238
      %v637 = vunpack.c.l.b16 %v239
      %v638 = vunpack.c.l.b16 %v240
      %v639 = vunpack.c.h.b16 %v240
      %v640 = vunpack.c.l.b16 %v241
      %v641 = vunpack.c.h.b16 %v241
      %v642 = vunpack.c.l.b16 %v242
      %v643 = vunpack.c.l.b16 %v243
      %v644 = vunpack.c.h.b16 %v243
      %v645 = vunpack.c.l.b16 %v244
      %v646 = vunpack.c.h.b16 %v244
      %v647 = vunpack.c.l.b16 %v245
      %v648 = vunpack.c.l.b16 %v246
      %v649 = vunpack.c.h.b16 %v246
      %v650 = vunpack.c.l.b16 %v247
      %v651 = vunpack.c.h.b16 %v247
      %v652 = vunpack.c.l.b16 %v248
      %v653 = vunpack.c.l.b16 %v249
      %v654 = vunpack.c.h.b16 %v249
      %v655 = vunpack.c.l.b16 %v250
      %v656 = vunpack.c.h.b16 %v250
      %v657 = vunpack.c.l.b16 %v251
      %v658 = vunpack.c.l.b16 %v252
      %v659 = vunpack.c.h.b16 %v252
      %v660 = vunpack.c.l.b16 %v253
      %v661 = vunpack.c.h.b16 %v253
      %v662 = vunpack.c.l.b16 %v254
      %v663 = vunpack.c.l.b16 %v255
      %v664 = vunpack.c.h.b16 %v255
      %v665 = vunpack.c.l.b16 %v256
      %v666 = vunpack.c.h.b16 %v256
      %v667 = vunpack.c.l.b16 %v257
      %v668 = vunpack.c.l.b16 %v258
      %v669 = vunpack.c.h.b16 %v258
      %v670 = vunpack.c.l.b16 %v259
      %v671 = vunpack.c.h.b16 %v259
      %v672 = vunpack.c.l.b16 %v260
      %v673 = vunpack.c.l.b16 %v261
      %v674 = vunpack.c.h.b16 %v261
      %v675 = vunpack.c.l.b16 %v262
      %v676 = vunpack.c.h.b16 %v262
      %v677 = vunpack.c.l.b16 %v263
      %v678 = vunpack.c.l.b16 %v264
      %v679 = vunpack.c.h.b16 %v264
      %v680 = vunpack.c.l.b16 %v265
      %v681 = vunpack.c.h.b16 %v265
      %v682 = vunpack.c.l.b16 %v266
      %v683 = vunpack.c.l.b16 %v267
      %v684 = vunpack.c.h.b16 %v267
      %v685 = vunpack.c.l.b16 %v268
      %v686 = vunpack.c.h.b16 %v268
      %v687 = vunpack.c.l.b16 %v269
      %v688 = vunpack.c.l.b16 %v270
      %v689 = vunpack.c.h.b16 %v270
      %v690 = vunpack.c.l.b16 %v271
      %v691 = vunpack.c.h.b16 %v271
      %v692 = vunpack.c.l.b16 %v272
      %v693 = vunpack.c.l.b16 %v273
      %v694 = vunpack.c.h.b16 %v273
      %v695 = vunpack.c.l.b16 %v274
      %v696 = vunpack.c.h.b16 %v274
      %v697 = vunpack.c.l.b16 %v275
      %v698 = vpack.c.b16 %v543, %v538
      %v699 = vpack.c.b16 %v544, %v539
      %v700 = vpack.c.b16 %v545, %v540
      %v701 = vpack.c.b16 %v546, %v541
      %v702 = vpack.c.b16 %v547, %v542
      %v703 = vpack.c.b16 %v553, %v548
      %v704 = vpack.c.b16 %v554, %v549
      %v705 = vpack.c.b16 %v555, %v550
      %v706 = vpack.c.b16 %v556, %v551
      %v707 = vpack.c.b16 %v557, %v552
      %v708 = vpack.c.b16 %v563, %v558
      %v709 = vpack.c.b16 %v564, %v559
      %v710 = vpack.c.b16 %v565, %v560
      %v711 = vpack.c.b16 %v566, %v561
      %v712 = vpack.c.b16 %v567, %v562
      %v713 = vpack.c.b16 %v573, %v568
      %v714 = vpack.c.b16 %v574, %v569
      %v715 = vpack.c.b16 %v575, %v570
      %v716 = vpack.c.b16 %v576, %v571
      %v717 = vpack.c.b16 %v577, %v572
      %v718 = vpack.c.b16 %v583, %v578
      %v719 = vpack.c.b16 %v584, %v579
      %v720 = vpack.c.b16 %v585, %v580
      %v721 = vpack.c.b16 %v586, %v581
      %v722 = vpack.c.b16 %v587, %v582
      %v723 = vpack.c.b16 %v593, %v588
      %v724 = vpack.c.b16 %v594, %v589
      %v725 = vpack.c.b16 %v595, %v590
      %v726 = vpack.c.b16 %v596, %v591
      %v727 = vpack.c.b16 %v597, %v592
      %v728 = vpack.c.b16 %v603, %v598
      %v729 = vpack.c.b16 %v604, %v599
      %v730 = vpack.c.b16 %v605, %v600
      %v731 = vpack.c.b16 %v606, %v601
      %v732 = vpack.c.b16 %v607, %v602
      %v733 = vpack.c.b16 %v613, %v608
      %v734 = vpack.c.b16 %v614, %v609
      %v735 = vpack.c.b16 %v615, %v610
      %v736 = vpack.c.b16 %v616, %v611
      %v737 = vpack.c.b16 %v617, %v612
      %v738 = vpack.c.b16 %v623, %v618
      %v739 = vpack.c.b16 %v624, %v619
      %v740 = vpack.c.b16 %v625, %v620
      %v741 = vpack.c.b16 %v626, %v621
      %v742 = vpack.c.b16 %v627, %v622
      %v743 = vpack.c.b16 %v633, %v628
      %v744 = vpack.c.b16 %v634, %v629
      %v745 = vpack.c.b16 %v635, %v630
      %v746 = vpack.c.b16 %v636, %v631
      %v747 = vpack.c.b16 %v637, %v632
      %v748 = vpack.c.b16 %v643, %v638
      %v749 = vpack.c.b16 %v644, %v639
      %v750 = vpack.c.b16 %v645, %v640
      %v751 = vpack.c.b16 %v646, %v641
      %v752 = vpack.c.b16 %v647, %v642
      %v753 = vpack.c.b16 %v653, %v648
      %v754 = vpack.c.b16 %v654, %v649
      %v755 = vpack.c.b16 %v655, %v650
      %v756 = vpack.c.b16 %v656, %v651
      %v757 = vpack.c.b16 %v657, %v652
      %v758 = vpack.c.b16 %v663, %v658
      %v759 = vpack.c.b16 %v664, %v659
      %v760 = vpack.c.b16 %v665, %v660
      %v761 = vpack.c.b16 %v666, %v661
      %v762 = vpack.c.b16 %v667, %v662
      %v763 = vpack.c.b16 %v673, %v668
      %v764 = vpack.c.b16 %v674, %v669
      %v765 = vpack.c.b16 %v675, %v670
      %v766 = vpack.c.b16 %v676, %v671
      %v767 = vpack.c.b16 %v677, %v672
      %v768 = vpack.c.b16 %v683, %v678
      %v769 = vpack.c.b16 %v684, %v679
      %v770 = vpack.c.b16 %v685, %v680
      %v771 = vpack.c.b16 %v686, %v681
      %v772 = vpack.c.b16 %v687, %v682
      %v773 = vpack.c.b16 %v693, %v688
      %v774 = vpack.c.b16 %v694, %v689
      %v775 = vpack.c.b16 %v695, %v690
      %v776 = vpack.c.b16 %v696, %v691
      %v777 = vpack.c.b16 %v697, %v692
      %v986 = vunpack.c.l.b16 %v276
      %v987 = vunpack.c.h.b16 %v276
      %v988 = vunpack.c.l.b16 %v277
      %v989 = vunpack.c.h.b16 %v277
      %v990 = vunpack.c.l.b16 %v278
      %v991 = vunpack.c.h.b16 %v278
      %v992 = vunpack.c.l.b16 %v279
      %v993 = vunpack.c.h.b16 %v279
      %v994 = vunpack.c.l.b16 %v280
      %v995 = vunpack.c.h.b16 %v280
      %v996 = vunpack.c.l.b16 %v281
      %v997 = vunpack.c.h.b16 %v281
      %v998 = vunpack.c.l.b16 %v282
      %v999 = vunpack.c.h.b16 %v282
      %v1000 = vunpack.c.l.b16 %v283
      %v1001 = vunpack.c.h.b16 %v283
      %v1002 = vunpack.c.l.b16 %v284
      %v1003 = vunpack.c.h.b16 %v284
      %v1004 = vunpack.c.l.b16 %v285
      %v1005 = vunpack.c.h.b16 %v285
      %v1006 = vunpack.c.l.b16 %v286
      %v1007 = vunpack.c.h.b16 %v286
      %v1008 = vunpack.c.l.b16 %v287
      %v1009 = vunpack.c.h.b16 %v287
      %v1010 = vunpack.c.l.b16 %v288
      %v1011 = vunpack.c.h.b16 %v288
      %v1012 = vunpack.c.l.b16 %v289
      %v1013 = vunpack.c.h.b16 %v289
      %v1014 = vunpack.c.l.b16 %v290
      %v1015 = vunpack.c.h.b16 %v290
      %v1016 = vunpack.c.l.b16 %v291
      %v1017 = vunpack.c.h.b16 %v291
      %v1018 = vunpack.c.l.b16 %v292
      %v1019 = vunpack.c.h.b16 %v292
      %v1020 = vunpack.c.l.b16 %v293
      %v1021 = vunpack.c.h.b16 %v293
      %v1022 = vunpack.c.l.b16 %v294
      %v1023 = vunpack.c.h.b16 %v294
      %v1024 = vunpack.c.l.b16 %v295
      %v1025 = vunpack.c.h.b16 %v295
      %v1026 = vunpack.c.l.b16 %v296
      %v1027 = vunpack.c.h.b16 %v296
      %v1028 = vunpack.c.l.b16 %v297
      %v1029 = vunpack.c.h.b16 %v297
      %v1030 = vunpack.c.l.b16 %v298
      %v1031 = vunpack.c.h.b16 %v298
      %v1032 = vunpack.c.l.b16 %v299
      %v1033 = vunpack.c.h.b16 %v299
      %v1034 = vunpack.c.l.b16 %v300
      %v1035 = vunpack.c.h.b16 %v300
      %v1036 = vunpack.c.l.b16 %v301
      %v1037 = vunpack.c.h.b16 %v301
      %v1038 = vunpack.c.l.b16 %v302
      %v1039 = vunpack.c.h.b16 %v302
      %v1040 = vunpack.c.l.b16 %v303
      %v1041 = vunpack.c.h.b16 %v303
      %v1042 = vunpack.c.l.b16 %v304
      %v1043 = vunpack.c.h.b16 %v304
      %v1044 = vunpack.c.l.b16 %v305
      %v1045 = vunpack.c.h.b16 %v305
      %v1046 = vunpack.c.l.b16 %v306
      %v1047 = vunpack.c.h.b16 %v306
      %v1048 = vunpack.c.l.b16 %v307
      %v1049 = vunpack.c.h.b16 %v307
      %v1050 = vunpack.c.l.b16 %v308
      %v1051 = vunpack.c.h.b16 %v308
      %v1052 = vunpack.c.l.b16 %v309
      %v1053 = vunpack.c.h.b16 %v309
      %v1054 = vunpack.c.l.b16 %v310
      %v1055 = vunpack.c.h.b16 %v310
      %v1056 = vunpack.c.l.b16 %v311
      %v1057 = vunpack.c.h.b16 %v311
      %v1058 = vunpack.c.l.b16 %v312
      %v1059 = vunpack.c.h.b16 %v312
      %v1060 = vunpack.c.l.b16 %v313
      %v1061 = vunpack.c.h.b16 %v313
      %v1062 = vunpack.c.l.b16 %v314
      %v1063 = vunpack.c.h.b16 %v314
      %v1064 = vunpack.c.l.b16 %v315
      %v1065 = vunpack.c.h.b16 %v315
      %v1066 = vunpack.c.l.b16 %v316
      %v1067 = vunpack.c.h.b16 %v316
      %v1068 = vunpack.c.l.b16 %v317
      %v1069 = vunpack.c.h.b16 %v317
      %v1070 = vunpack.c.l.b16 %v318
      %v1071 = vunpack.c.h.b16 %v318
      %v1072 = vunpack.c.l.b16 %v319
      %v1073 = vunpack.c.h.b16 %v319
      %v1074 = vunpack.c.l.b16 %v320
      %v1075 = vunpack.c.h.b16 %v320
      %v1076 = vunpack.c.l.b16 %v321
      %v1077 = vunpack.c.h.b16 %v321
      %v1078 = vunpack.c.l.b16 %v322
      %v1079 = vunpack.c.h.b16 %v322
      %v1080 = vunpack.c.l.b16 %v323
      %v1081 = vunpack.c.h.b16 %v323
      %v1082 = vunpack.c.l.b16 %v324
      %v1083 = vunpack.c.h.b16 %v324
      %v1084 = vunpack.c.l.b16 %v325
      %v1085 = vunpack.c.h.b16 %v325
      %v1086 = vunpack.c.l.b16 %v326
      %v1087 = vunpack.c.h.b16 %v326
      %v1088 = vunpack.c.l.b16 %v327
      %v1089 = vunpack.c.h.b16 %v327
      %v1090 = vunpack.c.l.b16 %v328
      %v1091 = vunpack.c.h.b16 %v328
      %v1092 = vunpack.c.l.b16 %v329
      %v1093 = vunpack.c.h.b16 %v329
      %v1094 = vunpack.c.l.b16 %v330
      %v1095 = vunpack.c.h.b16 %v330
      %v1096 = vunpack.c.l.b16 %v331
      %v1097 = vunpack.c.h.b16 %v331
      %v1098 = vunpack.c.l.b16 %v332
      %v1099 = vunpack.c.h.b16 %v332
      %v1100 = vunpack.c.l.b16 %v333
      %v1101 = vunpack.c.h.b16 %v333
      %v1102 = vunpack.c.l.b16 %v334
      %v1103 = vunpack.c.h.b16 %v334
      %v1104 = vunpack.c.l.b16 %v335
      %v1105 = vunpack.c.h.b16 %v335
      %v1106 = vunpack.c.l.b16 %v336
      %v1107 = vunpack.c.h.b16 %v336
      %v1108 = vunpack.c.l.b16 %v337
      %v1109 = vunpack.c.h.b16 %v337
      %v1110 = vunpack.c.l.b16 %v338
      %v1111 = vunpack.c.h.b16 %v338
      %v1112 = vunpack.c.l.b16 %v339
      %v1113 = vunpack.c.h.b16 %v339
      %v1114 = vunpack.c.l.b16 %v340
      %v1115 = vunpack.c.h.b16 %v340
      %v1116 = vunpack.c.l.b16 %v341
      %v1117 = vunpack.c.h.b16 %v341
      %v1118 = vunpack.c.l.b16 %v342
      %v1119 = vunpack.c.h.b16 %v342
      %v1120 = vunpack.c.l.b16 %v343
      %v1121 = vunpack.c.h.b16 %v343
      %v1122 = vunpack.c.l.b16 %v344
      %v1123 = vunpack.c.h.b16 %v344
      %v1124 = vunpack.c.l.b16 %v345
      %v1125 = vunpack.c.h.b16 %v345
      %v1126 = vunpack.c.l.b16 %v346
      %v1127 = vunpack.c.h.b16 %v346
      %v1128 = vunpack.c.l.b16 %v347
      %v1129 = vunpack.c.h.b16 %v347
      %v1130 = vunpack.c.l.b16 %v348
      %v1131 = vunpack.c.h.b16 %v348
      %v1132 = vunpack.c.l.b16 %v349
      %v1133 = vunpack.c.h.b16 %v349
      %v1134 = vunpack.c.l.b16 %v350
      %v1135 = vunpack.c.h.b16 %v350
      %v1136 = vunpack.c.l.b16 %v351
      %v1137 = vunpack.c.h.b16 %v351
      %v1138 = vunpack.c.l.b16 %v352
      %v1139 = vunpack.c.h.b16 %v352
      %v1140 = vunpack.c.l.b16 %v353
      %v1141 = vunpack.c.h.b16 %v353
      %v1142 = vunpack.c.l.b16 %v354
      %v1143 = vunpack.c.h.b16 %v354
      %v1144 = vunpack.c.l.b16 %v355
      %v1145 = vunpack.c.h.b16 %v355
      %v1146 = vunpack.c.l.b16 %v356
      %v1147 = vunpack.c.h.b16 %v356
      %v1148 = vunpack.c.l.b16 %v357
      %v1149 = vunpack.c.h.b16 %v357
      %v1150 = vunpack.c.l.b16 %v358
      %v1151 = vunpack.c.h.b16 %v358
      %v1152 = vunpack.c.l.b16 %v359
      %v1153 = vunpack.c.h.b16 %v359
      %v1154 = vunpack.c.l.b16 %v360
      %v1155 = vunpack.c.h.b16 %v360
      %v1156 = vunpack.c.l.b16 %v361
      %v1157 = vunpack.c.h.b16 %v361
      %v1158 = vunpack.c.l.b16 %v362
      %v1159 = vunpack.c.h.b16 %v362
      %v1160 = vunpack.c.l.b16 %v363
      %v1161 = vunpack.c.h.b16 %v363
      %v1162 = vunpack.c.l.b16 %v364
      %v1163 = vunpack.c.h.b16 %v364
      %v1164 = vunpack.c.l.b16 %v365
      %v1165 = vunpack.c.h.b16 %v365
      %v1166 = vunpack.c.l.b16 %v366
      %v1167 = vunpack.c.h.b16 %v366
      %v1168 = vunpack.c.l.b16 %v367
      %v1169 = vunpack.c.h.b16 %v367
      %v1170 = vunpack.c.l.b16 %v368
      %v1171 = vunpack.c.h.b16 %v368
      %v1172 = vunpack.c.l.b16 %v369
      %v1173 = vunpack.c.h.b16 %v369
      %v1174 = vunpack.c.l.b16 %v370
      %v1175 = vunpack.c.h.b16 %v370
      %v1176 = vunpack.c.l.b16 %v371
      %v1177 = vunpack.c.h.b16 %v371
      %v1178 = vunpack.c.l.b16 %v372
      %v1179 = vunpack.c.h.b16 %v372
      %v1180 = vunpack.c.l.b16 %v373
      %v1181 = vunpack.c.h.b16 %v373
      %v1182 = vunpack.c.l.b16 %v374
      %v1183 = vunpack.c.h.b16 %v374
      %v1184 = vunpack.c.l.b16 %v375
      %v1185 = vunpack.c.h.b16 %v375
      %v1186 = vunpack.c.l.b16 %v376
      %v1187 = vunpack.c.h.b16 %v376
      %v1188 = vunpack.c.l.b16 %v377
      %v1189 = vunpack.c.h.b16 %v377
      %v1190 = vunpack.c.l.b16 %v378
      %v1191 = vunpack.c.h.b16 %v378
      %v1192 = vunpack.c.l.b16 %v379
      %v1193 = vunpack.c.h.b16 %v379
      %v1194 = vunpack.c.l.b16 %v380
      %v1195 = vunpack.c.h.b16 %v380
      %v1196 = vunpack.c.l.b16 %v381
      %v1197 = vunpack.c.h.b16 %v381
      %v1198 = vunpack.c.l.b16 %v382
      %v1199 = vunpack.c.h.b16 %v382
      %v1200 = vunpack.c.l.b16 %v383
      %v1201 = vunpack.c.h.b16 %v383
      %v1202 = vunpack.c.l.b16 %v384
      %v1203 = vunpack.c.h.b16 %v384
      %v1204 = vunpack.c.l.b16 %v385
      %v1205 = vunpack.c.h.b16 %v385
      %v1206 = vunpack.c.l.b16 %v386
      %v1207 = vunpack.c.h.b16 %v386
      %v1208 = vunpack.c.l.b16 %v387
      %v1209 = vunpack.c.h.b16 %v387
      %v1210 = vunpack.c.l.b16 %v388
      %v1211 = vunpack.c.h.b16 %v388
      %v1212 = vunpack.c.l.b16 %v389
      %v1213 = vunpack.c.h.b16 %v389
      %v1214 = vunpack.c.l.b16 %v390
      %v1215 = vunpack.c.h.b16 %v390
      %v1216 = vunpack.c.l.b16 %v391
      %v1217 = vunpack.c.h.b16 %v391
      %v1218 = vunpack.c.l.b16 %v392
      %v1219 = vunpack.c.h.b16 %v392
      %v1220 = vunpack.c.l.b16 %v393
      %v1221 = vunpack.c.h.b16 %v393
      %v1222 = vunpack.c.l.b16 %v394
      %v1223 = vunpack.c.h.b16 %v394
      %v1224 = vunpack.c.l.b16 %v395
      %v1225 = vunpack.c.h.b16 %v395
      %v1226 = vunpack.c.l.b16 %v396
      %v1227 = vunpack.c.h.b16 %v396
      %v1228 = vunpack.c.l.b16 %v397
      %v1229 = vunpack.c.h.b16 %v397
      %v1230 = vunpack.c.l.b16 %v398
      %v1231 = vunpack.c.h.b16 %v398
      %v1232 = vunpack.c.l.b16 %v399
      %v1233 = vunpack.c.h.b16 %v399
      %v1234 = vunpack.c.l.b16 %v400
      %v1235 = vunpack.c.h.b16 %v400
      %v1236 = vunpack.c.l.b16 %v401
      %v1237 = vunpack.c.h.b16 %v401
      %v1238 = vunpack.c.l.b16 %v402
      %v1239 = vunpack.c.h.b16 %v402
      %v1240 = vunpack.c.l.b16 %v403
      %v1241 = vunpack.c.h.b16 %v403
      %v1242 = vunpack.c.l.b16 %v404
      %v1243 = vunpack.c.h.b16 %v404
      %v1244 = vunpack.c.l.b16 %v405
      %v1245 = vunpack.c.h.b16 %v405
      %v1246 = vunpack.c.l.b16 %v406
      %v1247 = vunpack.c.h.b16 %v406
      %v1248 = vunpack.c.l.b16 %v407
      %v1249 = vunpack.c.h.b16 %v407
      %v1250 = vunpack.c.l.b16 %v408
      %v1251 = vunpack.c.h.b16 %v408
      %v1252 = vunpack.c.l.b16 %v409
      %v1253 = vunpack.c.h.b16 %v409
      %v1254 = vunpack.c.l.b16 %v410
      %v1255 = vunpack.c.h.b16 %v410
      %v1256 = vunpack.c.l.b16 %v411
      %v1257 = vunpack.c.h.b16 %v411
      %v1258 = vunpack.c.l.b16 %v412
      %v1259 = vunpack.c.h.b16 %v412
      %v1260 = vunpack.c.l.b16 %v413
      %v1261 = vunpack.c.h.b16 %v413
      %v1262 = vunpack.c.l.b16 %v414
      %v1263 = vunpack.c.h.b16 %v414
      %v1264 = vunpack.c.l.b16 %v415
      %v1265 = vunpack.c.h.b16 %v415
      %v1266 = vunpack.c.l.b16 %v416
      %v1267 = vunpack.c.h.b16 %v416
      %v1268 = vunpack.c.l.b16 %v417
      %v1269 = vunpack.c.h.b16 %v417
      %v1270 = vunpack.c.l.b16 %v418
      %v1271 = vunpack.c.h.b16 %v418
      %v1272 = vunpack.c.l.b16 %v419
      %v1273 = vunpack.c.h.b16 %v419
      %v1274 = vpack.c.b16 %v990, %v986
      %v1275 = vpack.c.b16 %v991, %v987
      %v1276 = vpack.c.b16 %v992, %v988
      %v1277 = vpack.c.b16 %v993, %v989
      %v1278 = vpack.c.b16 %v998, %v994
      %v1279 = vpack.c.b16 %v999, %v995
      %v1280 = vpack.c.b16 %v1000, %v996
      %v1281 = vpack.c.b16 %v1001, %v997
      %v1282 = vpack.c.b16 %v1006, %v1002
      %v1283 = vpack.c.b16 %v1007, %v1003
      %v1284 = vpack.c.b16 %v1008, %v1004
      %v1285 = vpack.c.b16 %v1009, %v1005
      %v1286 = vpack.c.b16 %v1014, %v1010
      %v1287 = vpack.c.b16 %v1015, %v1011
      %v1288 = vpack.c.b16 %v1016, %v1012
      %v1289 = vpack.c.b16 %v1017, %v1013
      %v1290 = vpack.c.b16 %v1022, %v1018
      %v1291 = vpack.c.b16 %v1023, %v1019
      %v1292 = vpack.c.b16 %v1024, %v1020
      %v1293 = vpack.c.b16 %v1025, %v1021
      %v1294 = vpack.c.b16 %v1030, %v1026
      %v1295 = vpack.c.b16 %v1031, %v1027
      %v1296 = vpack.c.b16 %v1032, %v1028
      %v1297 = vpack.c.b16 %v1033, %v1029
      %v1298 = vpack.c.b16 %v1038, %v1034
      %v1299 = vpack.c.b16 %v1039, %v1035
      %v1300 = vpack.c.b16 %v1040, %v1036
      %v1301 = vpack.c.b16 %v1041, %v1037
      %v1302 = vpack.c.b16 %v1046, %v1042
      %v1303 = vpack.c.b16 %v1047, %v1043
      %v1304 = vpack.c.b16 %v1048, %v1044
      %v1305 = vpack.c.b16 %v1049, %v1045
      %v1306 = vpack.c.b16 %v1054, %v1050
      %v1307 = vpack.c.b16 %v1055, %v1051
      %v1308 = vpack.c.b16 %v1056, %v1052
      %v1309 = vpack.c.b16 %v1057, %v1053
      %v1310 = vpack.c.b16 %v1062, %v1058
      %v1311 = vpack.c.b16 %v1063, %v1059
      %v1312 = vpack.c.b16 %v1064, %v1060
      %v1313 = vpack.c.b16 %v1065, %v1061
      %v1314 = vpack.c.b16 %v1070, %v1066
      %v1315 = vpack.c.b16 %v1071, %v1067
      %v1316 = vpack.c.b16 %v1072, %v1068
      %v1317 = vpack.c.b16 %v1073, %v1069
      %v1318 = vpack.c.b16 %v1078, %v1074
      %v1319 = vpack.c.b16 %v1079, %v1075
      %v1320 = vpack.c.b16 %v1080, %v1076
      %v1321 = vpack.c.b16 %v1081, %v1077
      %v1322 = vpack.c.b16 %v1086, %v1082
      %v1323 = vpack.c.b16 %v1087, %v1083
      %v1324 = vpack.c.b16 %v1088, %v1084
      %v1325 = vpack.c.b16 %v1089, %v1085
      %v1326 = vpack.c.b16 %v1094, %v1090
      %v1327 = vpack.c.b16 %v1095, %v1091
      %v1328 = vpack.c.b16 %v1096, %v1092
      %v1329 = vpack.c.b16 %v1097, %v1093
      %v1330 = vpack.c.b16 %v1102, %v1098
      %v1331 = vpack.c.b16 %v1103, %v1099
      %v1332 = vpack.c.b16 %v1104, %v1100
      %v1333 = vpack.c.b16 %v1105, %v1101
      %v1334 = vpack.c.b16 %v1110, %v1106
      %v1335 = vpack.c.b16 %v1111, %v1107
      %v1336 = vpack.c.b16 %v1112, %v1108
      %v1337 = vpack.c.b16 %v1113, %v1109
      %v1338 = vpack.c.b16 %v1118, %v1114
      %v1339 = vpack.c.b16 %v1119, %v1115
      %v1340 = vpack.c.b16 %v1120, %v1116
      %v1341 = vpack.c.b16 %v1121, %v1117
      %v1342 = vpack.c.b16 %v1126, %v1122
      %v1343 = vpack.c.b16 %v1127, %v1123
      %v1344 = vpack.c.b16 %v1128, %v1124
      %v1345 = vpack.c.b16 %v1129, %v1125
      %v1346 = vpack.c.b16 %v1134, %v1130
      %v1347 = vpack.c.b16 %v1135, %v1131
      %v1348 = vpack.c.b16 %v1136, %v1132
      %v1349 = vpack.c.b16 %v1137, %v1133
      %v1350 = vpack.c.b16 %v1142, %v1138
      %v1351 = vpack.c.b16 %v1143, %v1139
      %v1352 = vpack.c.b16 %v1144, %v1140
      %v1353 = vpack.c.b16 %v1145, %v1141
      %v1354 = vpack.c.b16 %v1150, %v1146
      %v1355 = vpack.c.b16 %v1151, %v1147
      %v1356 = vpack.c.b16 %v1152, %v1148
      %v1357 = vpack.c.b16 %v1153, %v1149
      %v1358 = vpack.c.b16 %v1158, %v1154
      %v1359 = vpack.c.b16 %v1159, %v1155
      %v1360 = vpack.c.b16 %v1160, %v1156
      %v1361 = vpack.c.b16 %v1161, %v1157
      %v1362 = vpack.c.b16 %v1166, %v1162
      %v1363 = vpack.c.b16 %v1167, %v1163
      %v1364 = vpack.c.b16 %v1168, %v1164
      %v1365 = vpack.c.b16 %v1169, %v1165
      %v1366 = vpack.c.b16 %v1174, %v1170
      %v1367 = vpack.c.b16 %v1175, %v1171
      %v1368 = vpack.c.b16 %v1176, %v1172
      %v1369 = vpack.c.b16 %v1177, %v1173
      %v1370 = vpack.c.b16 %v1182, %v1178
      %v1371 = vpack.c.b16 %v1183, %v1179
      %v1372 = vpack.c.b16 %v1184, %v1180
      %v1373 = vpack.c.b16 %v1185, %v1181
      %v1374 = vpack.c.b16 %v1190, %v1186
      %v1375 = vpack.c.b16 %v1191, %v1187
      %v1376 = vpack.c.b16 %v1192, %v1188
      %v1377 = vpack.c.b16 %v1193, %v1189
      %v1378 = vpack.c.b16 %v1198, %v1194
      %v1379 = vpack.c.b16 %v1199, %v1195
      %v1380 = vpack.c.b16 %v1200, %v1196
      %v1381 = vpack.c.b16 %v1201, %v1197
      %v1382 = vpack.c.b16 %v1206, %v1202
      %v1383 = vpack.c.b16 %v1207, %v1203
      %v1384 = vpack.c.b16 %v1208, %v1204
      %v1385 = vpack.c.b16 %v1209, %v1205
      %v1386 = vpack.c.b16 %v1214, %v1210
      %v1387 = vpack.c.b16 %v1215, %v1211
      %v1388 = vpack.c.b16 %v1216, %v1212
      %v1389 = vpack.c.b16 %v1217, %v1213
      %v1390 = vpack.c.b16 %v1222, %v1218
      %v1391 = vpack.c.b16 %v1223, %v1219
      %v1392 = vpack.c.b16 %v1224, %v1220
      %v1393 = vpack.c.b16 %v1225, %v1221
      %v1394 = vpack.c.b16 %v1230, %v1226
      %v1395 = vpack.c.b16 %v1231, %v1227
      %v1396 = vpack.c.b16 %v1232, %v1228
      %v1397 = vpack.c.b16 %v1233, %v1229
      %v1398 = vpack.c.b16 %v1238, %v1234
      %v1399 = vpack.c.b16 %v1239, %v1235
      %v1400 = vpack.c.b16 %v1240, %v1236
      %v1401 = vpack.c.b16 %v1241, %v1237
      %v1402 = vpack.c.b16 %v1246, %v1242
      %v1403 = vpack.c.b16 %v1247, %v1243
      %v1404 = vpack.c.b16 %v1248, %v1244
      %v1405 = vpack.c.b16 %v1249, %v1245
      %v1406 = vpack.c.b16 %v1254, %v1250
      %v1407 = vpack.c.b16 %v1255, %v1251
      %v1408 = vpack.c.b16 %v1256, %v1252
      %v1409 = vpack.c.b16 %v1257, %v1253
      %v1410 = vpack.c.b16 %v1262, %v1258
      %v1411 = vpack.c.b16 %v1263, %v1259
      %v1412 = vpack.c.b16 %v1264, %v1260
      %v1413 = vpack.c.b16 %v1265, %v1261
      %v1414 = vpack.c.b16 %v1270, %v1266
      %v1415 = vpack.c.b16 %v1271, %v1267
      %v1416 = vpack.c.b16 %v1272, %v1268
      %v1417 = vpack.c.b16 %v1273, %v1269
      %vm1562 = vcmask 523264
      %v1564 = vsel %vm1562, %v702, 0
      %v1567 = vsel %vm1562, %v707, 0
      %v1570 = vsel %vm1562, %v712, 0
      %v1573 = vsel %vm1562, %v717, 0
      %v1576 = vsel %vm1562, %v722, 0
      %v1579 = vsel %vm1562, %v727, 0
      %v1582 = vsel %vm1562, %v732, 0
      %v1585 = vsel %vm1562, %v737, 0
      %v1588 = vsel %vm1562, %v742, 0
      %v1591 = vsel %vm1562, %v747, 0
      %v1594 = vsel %vm1562, %v752, 0
      %v1597 = vsel %vm1562, %v757, 0
      %v1600 = vsel %vm1562, %v762, 0
      %v1603 = vsel %vm1562, %v767, 0
      %v1606 = vsel %vm1562, %v772, 0
      %v1609 = vsel %vm1562, %v777, 0
      %1611 = vmatprep.subr.bf16.mxu0 %v1303
      %1612 = vmatpush1.bf16.msra.mxu0 %v1302
      %1613 = vmatprep.subr.bf16.mxu0 %v1299
      %1614 = vmatpush1.bf16.msra.mxu0 %v1298
      %1615 = vmatprep.subr.bf16.mxu0 %v1295
      %1616 = vmatpush1.bf16.msra.mxu0 %v1294
      %1617 = vmatprep.subr.bf16.mxu0 %v1291
      %1618 = vmatpush1.bf16.msra.mxu0 %v1290
      %1619 = vmatprep.subr.bf16.mxu0 %v1287
      %1620 = vmatpush1.bf16.msra.mxu0 %v1286
      %1621 = vmatprep.subr.bf16.mxu0 %v1283
      %1622 = vmatpush1.bf16.msra.mxu0 %v1282
      %1623 = vmatprep.subr.bf16.mxu0 %v1279
      %1624 = vmatpush1.bf16.msra.mxu0 %v1278
      %1625 = vmatprep.subr.bf16.mxu0 %v1275
      %1626 = vmatpush1.bf16.msra.mxu0 %v1274
      %1627 = vmatprep.subr.bf16.mxu0 %v1335
      %1628 = vmatpush2.bf16.msra.mxu0 %v1334
      %1629 = vmatprep.subr.bf16.mxu0 %v1331
      %1630 = vmatpush2.bf16.msra.mxu0 %v1330
      %1631 = vmatprep.subr.bf16.mxu0 %v1327
      %1632 = vmatpush2.bf16.msra.mxu0 %v1326
      %1633 = vmatprep.subr.bf16.mxu0 %v1323
      %1634 = vmatpush2.bf16.msra.mxu0 %v1322
      %1635 = vmatprep.subr.bf16.mxu0 %v1319
      %1636 = vmatpush2.bf16.msra.mxu0 %v1318
      %1637 = vmatprep.subr.bf16.mxu0 %v1315
      %1638 = vmatpush2.bf16.msra.mxu0 %v1314
      %1639 = vmatprep.subr.bf16.mxu0 %v1311
      %1640 = vmatpush2.bf16.msra.mxu0 %v1310
      %1641 = vmatprep.subr.bf16.mxu0 %v1307
      %1642 = vmatpush2.bf16.msra.mxu0 %v1306
      %1643 = vmatprep.mubr.bf16.mxu0 %v699
      %1644 = vmatmul.mubr.bf16.gmra.mxu0 %v698
      %v1645 = vpop.f32.mrf.mxu0
      %v1646 = vadd.f32 %v425, %v1645
      %v1647 = vpop.f32.mrf.mxu0
      %v1648 = vadd.f32 %v429, %v1647
      %v1649 = vpop.f32.mrf.mxu0
      %v1650 = vadd.f32 %v425, %v1649
      %v1651 = vpop.f32.mrf.mxu0
      %v1652 = vadd.f32 %v429, %v1651
      %1653 = vmatprep.mubr.bf16.mxu0 %v704
      %1654 = vmatmul.mubr.bf16.gmra.mxu0 %v703
      %v1655 = vpop.f32.mrf.mxu0
      %v1656 = vadd.f32 %v425, %v1655
      %v1657 = vpop.f32.mrf.mxu0
      %v1658 = vadd.f32 %v429, %v1657
      %v1659 = vpop.f32.mrf.mxu0
      %v1660 = vadd.f32 %v425, %v1659
      %v1661 = vpop.f32.mrf.mxu0
      %v1662 = vadd.f32 %v429, %v1661
      %1663 = vmatprep.mubr.bf16.mxu0 %v709
      %1664 = vmatmul.mubr.bf16.gmra.mxu0 %v708
      %v1665 = vpop.f32.mrf.mxu0
      %v1666 = vadd.f32 %v425, %v1665
      %v1667 = vpop.f32.mrf.mxu0
      %v1668 = vadd.f32 %v429, %v1667
      %v1669 = vpop.f32.mrf.mxu0
      %v1670 = vadd.f32 %v425, %v1669
      %v1671 = vpop.f32.mrf.mxu0
      %v1672 = vadd.f32 %v429, %v1671
      %1673 = vmatprep.mubr.bf16.mxu0 %v714
      %1674 = vmatmul.mubr.bf16.gmra.mxu0 %v713
      %v1675 = vpop.f32.mrf.mxu0
      %v1676 = vadd.f32 %v425, %v1675
      %v1677 = vpop.f32.mrf.mxu0
      %v1678 = vadd.f32 %v429, %v1677
      %v1679 = vpop.f32.mrf.mxu0
      %v1680 = vadd.f32 %v425, %v1679
      %v1681 = vpop.f32.mrf.mxu0
      %v1682 = vadd.f32 %v429, %v1681
      %1683 = vmatprep.mubr.bf16.mxu0 %v719
      %1684 = vmatmul.mubr.bf16.gmra.mxu0 %v718
      %v1685 = vpop.f32.mrf.mxu0
      %v1686 = vadd.f32 %v425, %v1685
      %v1687 = vpop.f32.mrf.mxu0
      %v1688 = vadd.f32 %v429, %v1687
      %v1689 = vpop.f32.mrf.mxu0
      %v1690 = vadd.f32 %v425, %v1689
      %v1691 = vpop.f32.mrf.mxu0
      %v1692 = vadd.f32 %v429, %v1691
      %1693 = vmatprep.mubr.bf16.mxu0 %v724
      %1694 = vmatmul.mubr.bf16.gmra.mxu0 %v723
      %v1695 = vpop.f32.mrf.mxu0
      %v1696 = vadd.f32 %v425, %v1695
      %v1697 = vpop.f32.mrf.mxu0
      %v1698 = vadd.f32 %v429, %v1697
      %v1699 = vpop.f32.mrf.mxu0
      %v1700 = vadd.f32 %v425, %v1699
      %v1701 = vpop.f32.mrf.mxu0
      %v1702 = vadd.f32 %v429, %v1701
      %1703 = vmatprep.mubr.bf16.mxu0 %v729
      %1704 = vmatmul.mubr.bf16.gmra.mxu0 %v728
      %v1705 = vpop.f32.mrf.mxu0
      %v1706 = vadd.f32 %v425, %v1705
      %v1707 = vpop.f32.mrf.mxu0
      %v1708 = vadd.f32 %v429, %v1707
      %v1709 = vpop.f32.mrf.mxu0
      %v1710 = vadd.f32 %v425, %v1709
      %v1711 = vpop.f32.mrf.mxu0
      %v1712 = vadd.f32 %v429, %v1711
      %1713 = vmatprep.mubr.bf16.mxu0 %v734
      %1714 = vmatmul.mubr.bf16.gmra.mxu0 %v733
      %v1715 = vpop.f32.mrf.mxu0
      %v1716 = vadd.f32 %v425, %v1715
      %v1717 = vpop.f32.mrf.mxu0
      %v1718 = vadd.f32 %v429, %v1717
      %v1719 = vpop.f32.mrf.mxu0
      %v1720 = vadd.f32 %v425, %v1719
      %v1721 = vpop.f32.mrf.mxu0
      %v1722 = vadd.f32 %v429, %v1721
      %1723 = vmatprep.mubr.bf16.mxu0 %v739
      %1724 = vmatmul.mubr.bf16.gmra.mxu0 %v738
      %v1725 = vpop.f32.mrf.mxu0
      %v1726 = vadd.f32 %v425, %v1725
      %v1727 = vpop.f32.mrf.mxu0
      %v1728 = vadd.f32 %v429, %v1727
      %v1729 = vpop.f32.mrf.mxu0
      %v1730 = vadd.f32 %v425, %v1729
      %v1731 = vpop.f32.mrf.mxu0
      %v1732 = vadd.f32 %v429, %v1731
      %1733 = vmatprep.mubr.bf16.mxu0 %v744
      %1734 = vmatmul.mubr.bf16.gmra.mxu0 %v743
      %v1735 = vpop.f32.mrf.mxu0
      %v1736 = vadd.f32 %v425, %v1735
      %v1737 = vpop.f32.mrf.mxu0
      %v1738 = vadd.f32 %v429, %v1737
      %v1739 = vpop.f32.mrf.mxu0
      %v1740 = vadd.f32 %v425, %v1739
      %v1741 = vpop.f32.mrf.mxu0
      %v1742 = vadd.f32 %v429, %v1741
      %1743 = vmatprep.mubr.bf16.mxu0 %v749
      %1744 = vmatmul.mubr.bf16.gmra.mxu0 %v748
      %v1745 = vpop.f32.mrf.mxu0
      %v1746 = vadd.f32 %v425, %v1745
      %v1747 = vpop.f32.mrf.mxu0
      %v1748 = vadd.f32 %v429, %v1747
      %v1749 = vpop.f32.mrf.mxu0
      %v1750 = vadd.f32 %v425, %v1749
      %v1751 = vpop.f32.mrf.mxu0
      %v1752 = vadd.f32 %v429, %v1751
      %1753 = vmatprep.mubr.bf16.mxu0 %v754
      %1754 = vmatmul.mubr.bf16.gmra.mxu0 %v753
      %v1755 = vpop.f32.mrf.mxu0
      %v1756 = vadd.f32 %v425, %v1755
      %v1757 = vpop.f32.mrf.mxu0
      %v1758 = vadd.f32 %v429, %v1757
      %v1759 = vpop.f32.mrf.mxu0
      %v1760 = vadd.f32 %v425, %v1759
      %v1761 = vpop.f32.mrf.mxu0
      %v1762 = vadd.f32 %v429, %v1761
      %1763 = vmatprep.mubr.bf16.mxu0 %v759
      %1764 = vmatmul.mubr.bf16.gmra.mxu0 %v758
      %v1765 = vpop.f32.mrf.mxu0
      %v1766 = vadd.f32 %v425, %v1765
      %v1767 = vpop.f32.mrf.mxu0
      %v1768 = vadd.f32 %v429, %v1767
      %v1769 = vpop.f32.mrf.mxu0
      %v1770 = vadd.f32 %v425, %v1769
      %v1771 = vpop.f32.mrf.mxu0
      %v1772 = vadd.f32 %v429, %v1771
      %1773 = vmatprep.mubr.bf16.mxu0 %v764
      %1774 = vmatmul.mubr.bf16.gmra.mxu0 %v763
      %v1775 = vpop.f32.mrf.mxu0
      %v1776 = vadd.f32 %v425, %v1775
      %v1777 = vpop.f32.mrf.mxu0
      %v1778 = vadd.f32 %v429, %v1777
      %v1779 = vpop.f32.mrf.mxu0
      %v1780 = vadd.f32 %v425, %v1779
      %v1781 = vpop.f32.mrf.mxu0
      %v1782 = vadd.f32 %v429, %v1781
      %1783 = vmatprep.mubr.bf16.mxu0 %v769
      %1784 = vmatmul.mubr.bf16.gmra.mxu0 %v768
      %v1785 = vpop.f32.mrf.mxu0
      %v1786 = vadd.f32 %v425, %v1785
      %v1787 = vpop.f32.mrf.mxu0
      %v1788 = vadd.f32 %v429, %v1787
      %v1789 = vpop.f32.mrf.mxu0
      %v1790 = vadd.f32 %v425, %v1789
      %v1791 = vpop.f32.mrf.mxu0
      %v1792 = vadd.f32 %v429, %v1791
      %1793 = vmatprep.mubr.bf16.mxu0 %v774
      %1794 = vmatmul.mubr.bf16.gmra.mxu0 %v773
      %v1795 = vpop.f32.mrf.mxu0
      %v1796 = vadd.f32 %v425, %v1795
      %v1797 = vpop.f32.mrf.mxu0
      %v1798 = vadd.f32 %v429, %v1797
      %v1799 = vpop.f32.mrf.mxu0
      %v1800 = vadd.f32 %v425, %v1799
      %v1801 = vpop.f32.mrf.mxu0
      %v1802 = vadd.f32 %v429, %v1801
      %1803 = vdwg.mxu0
      %1804 = vmatprep.subr.bf16.mxu0 %v1367
      %1805 = vmatpush1.bf16.msra.mxu0 %v1366
      %1806 = vmatprep.subr.bf16.mxu0 %v1363
      %1807 = vmatpush1.bf16.msra.mxu0 %v1362
      %1808 = vmatprep.subr.bf16.mxu0 %v1359
      %1809 = vmatpush1.bf16.msra.mxu0 %v1358
      %1810 = vmatprep.subr.bf16.mxu0 %v1355
      %1811 = vmatpush1.bf16.msra.mxu0 %v1354
      %1812 = vmatprep.subr.bf16.mxu0 %v1351
      %1813 = vmatpush1.bf16.msra.mxu0 %v1350
      %1814 = vmatprep.subr.bf16.mxu0 %v1347
      %1815 = vmatpush1.bf16.msra.mxu0 %v1346
      %1816 = vmatprep.subr.bf16.mxu0 %v1343
      %1817 = vmatpush1.bf16.msra.mxu0 %v1342
      %1818 = vmatprep.subr.bf16.mxu0 %v1339
      %1819 = vmatpush1.bf16.msra.mxu0 %v1338
      %1820 = vmatprep.subr.bf16.mxu0 %v1399
      %1821 = vmatpush2.bf16.msra.mxu0 %v1398
      %1822 = vmatprep.subr.bf16.mxu0 %v1395
      %1823 = vmatpush2.bf16.msra.mxu0 %v1394
      %1824 = vmatprep.subr.bf16.mxu0 %v1391
      %1825 = vmatpush2.bf16.msra.mxu0 %v1390
      %1826 = vmatprep.subr.bf16.mxu0 %v1387
      %1827 = vmatpush2.bf16.msra.mxu0 %v1386
      %1828 = vmatprep.subr.bf16.mxu0 %v1383
      %1829 = vmatpush2.bf16.msra.mxu0 %v1382
      %1830 = vmatprep.subr.bf16.mxu0 %v1379
      %1831 = vmatpush2.bf16.msra.mxu0 %v1378
      %1832 = vmatprep.subr.bf16.mxu0 %v1375
      %1833 = vmatpush2.bf16.msra.mxu0 %v1374
      %1834 = vmatprep.subr.bf16.mxu0 %v1371
      %1835 = vmatpush2.bf16.msra.mxu0 %v1370
      %1836 = vmatprep.mubr.bf16.mxu0 %v701
      %1837 = vmatmul.mubr.bf16.gmra.mxu0 %v700
      %v1838 = vpop.f32.mrf.mxu0
      %v1839 = vadd.f32 %v1646, %v1838
      %v1840 = vpop.f32.mrf.mxu0
      %v1841 = vadd.f32 %v1648, %v1840
      %v1842 = vpop.f32.mrf.mxu0
      %v1843 = vadd.f32 %v1650, %v1842
      %v1844 = vpop.f32.mrf.mxu0
      %v1845 = vadd.f32 %v1652, %v1844
      %1846 = vmatprep.mubr.bf16.mxu0 %v706
      %1847 = vmatmul.mubr.bf16.gmra.mxu0 %v705
      %v1848 = vpop.f32.mrf.mxu0
      %v1849 = vadd.f32 %v1656, %v1848
      %v1850 = vpop.f32.mrf.mxu0
      %v1851 = vadd.f32 %v1658, %v1850
      %v1852 = vpop.f32.mrf.mxu0
      %v1853 = vadd.f32 %v1660, %v1852
      %v1854 = vpop.f32.mrf.mxu0
      %v1855 = vadd.f32 %v1662, %v1854
      %1856 = vmatprep.mubr.bf16.mxu0 %v711
      %1857 = vmatmul.mubr.bf16.gmra.mxu0 %v710
      %v1858 = vpop.f32.mrf.mxu0
      %v1859 = vadd.f32 %v1666, %v1858
      %v1860 = vpop.f32.mrf.mxu0
      %v1861 = vadd.f32 %v1668, %v1860
      %v1862 = vpop.f32.mrf.mxu0
      %v1863 = vadd.f32 %v1670, %v1862
      %v1864 = vpop.f32.mrf.mxu0
      %v1865 = vadd.f32 %v1672, %v1864
      %1866 = vmatprep.mubr.bf16.mxu0 %v716
      %1867 = vmatmul.mubr.bf16.gmra.mxu0 %v715
      %v1868 = vpop.f32.mrf.mxu0
      %v1869 = vadd.f32 %v1676, %v1868
      %v1870 = vpop.f32.mrf.mxu0
      %v1871 = vadd.f32 %v1678, %v1870
      %v1872 = vpop.f32.mrf.mxu0
      %v1873 = vadd.f32 %v1680, %v1872
      %v1874 = vpop.f32.mrf.mxu0
      %v1875 = vadd.f32 %v1682, %v1874
      %1876 = vmatprep.mubr.bf16.mxu0 %v721
      %1877 = vmatmul.mubr.bf16.gmra.mxu0 %v720
      %v1878 = vpop.f32.mrf.mxu0
      %v1879 = vadd.f32 %v1686, %v1878
      %v1880 = vpop.f32.mrf.mxu0
      %v1881 = vadd.f32 %v1688, %v1880
      %v1882 = vpop.f32.mrf.mxu0
      %v1883 = vadd.f32 %v1690, %v1882
      %v1884 = vpop.f32.mrf.mxu0
      %v1885 = vadd.f32 %v1692, %v1884
      %1886 = vmatprep.mubr.bf16.mxu0 %v726
      %1887 = vmatmul.mubr.bf16.gmra.mxu0 %v725
      %v1888 = vpop.f32.mrf.mxu0
      %v1889 = vadd.f32 %v1696, %v1888
      %v1890 = vpop.f32.mrf.mxu0
      %v1891 = vadd.f32 %v1698, %v1890
      %v1892 = vpop.f32.mrf.mxu0
      %v1893 = vadd.f32 %v1700, %v1892
      %v1894 = vpop.f32.mrf.mxu0
      %v1895 = vadd.f32 %v1702, %v1894
      %1896 = vmatprep.mubr.bf16.mxu0 %v731
      %1897 = vmatmul.mubr.bf16.gmra.mxu0 %v730
      %v1898 = vpop.f32.mrf.mxu0
      %v1899 = vadd.f32 %v1706, %v1898
      %v1900 = vpop.f32.mrf.mxu0
      %v1901 = vadd.f32 %v1708, %v1900
      %v1902 = vpop.f32.mrf.mxu0
      %v1903 = vadd.f32 %v1710, %v1902
      %v1904 = vpop.f32.mrf.mxu0
      %v1905 = vadd.f32 %v1712, %v1904
      %1906 = vmatprep.mubr.bf16.mxu0 %v736
      %1907 = vmatmul.mubr.bf16.gmra.mxu0 %v735
      %v1908 = vpop.f32.mrf.mxu0
      %v1909 = vadd.f32 %v1716, %v1908
      %v1910 = vpop.f32.mrf.mxu0
      %v1911 = vadd.f32 %v1718, %v1910
      %v1912 = vpop.f32.mrf.mxu0
      %v1913 = vadd.f32 %v1720, %v1912
      %v1914 = vpop.f32.mrf.mxu0
      %v1915 = vadd.f32 %v1722, %v1914
      %1916 = vmatprep.mubr.bf16.mxu0 %v741
      %1917 = vmatmul.mubr.bf16.gmra.mxu0 %v740
      %v1918 = vpop.f32.mrf.mxu0
      %v1919 = vadd.f32 %v1726, %v1918
      %v1920 = vpop.f32.mrf.mxu0
      %v1921 = vadd.f32 %v1728, %v1920
      %v1922 = vpop.f32.mrf.mxu0
      %v1923 = vadd.f32 %v1730, %v1922
      %v1924 = vpop.f32.mrf.mxu0
      %v1925 = vadd.f32 %v1732, %v1924
      %1926 = vmatprep.mubr.bf16.mxu0 %v746
      %1927 = vmatmul.mubr.bf16.gmra.mxu0 %v745
      %v1928 = vpop.f32.mrf.mxu0
      %v1929 = vadd.f32 %v1736, %v1928
      %v1930 = vpop.f32.mrf.mxu0
      %v1931 = vadd.f32 %v1738, %v1930
      %v1932 = vpop.f32.mrf.mxu0
      %v1933 = vadd.f32 %v1740, %v1932
      %v1934 = vpop.f32.mrf.mxu0
      %v1935 = vadd.f32 %v1742, %v1934
      %1936 = vmatprep.mubr.bf16.mxu0 %v751
      %1937 = vmatmul.mubr.bf16.gmra.mxu0 %v750
      %v1938 = vpop.f32.mrf.mxu0
      %v1939 = vadd.f32 %v1746, %v1938
      %v1940 = vpop.f32.mrf.mxu0
      %v1941 = vadd.f32 %v1748, %v1940
      %v1942 = vpop.f32.mrf.mxu0
      %v1943 = vadd.f32 %v1750, %v1942
      %v1944 = vpop.f32.mrf.mxu0
      %v1945 = vadd.f32 %v1752, %v1944
      %1946 = vmatprep.mubr.bf16.mxu0 %v756
      %1947 = vmatmul.mubr.bf16.gmra.mxu0 %v755
      %v1948 = vpop.f32.mrf.mxu0
      %v1949 = vadd.f32 %v1756, %v1948
      %v1950 = vpop.f32.mrf.mxu0
      %v1951 = vadd.f32 %v1758, %v1950
      %v1952 = vpop.f32.mrf.mxu0
      %v1953 = vadd.f32 %v1760, %v1952
      %v1954 = vpop.f32.mrf.mxu0
      %v1955 = vadd.f32 %v1762, %v1954
      %1956 = vmatprep.mubr.bf16.mxu0 %v761
      %1957 = vmatmul.mubr.bf16.gmra.mxu0 %v760
      %v1958 = vpop.f32.mrf.mxu0
      %v1959 = vadd.f32 %v1766, %v1958
      %v1960 = vpop.f32.mrf.mxu0
      %v1961 = vadd.f32 %v1768, %v1960
      %v1962 = vpop.f32.mrf.mxu0
      %v1963 = vadd.f32 %v1770, %v1962
      %v1964 = vpop.f32.mrf.mxu0
      %v1965 = vadd.f32 %v1772, %v1964
      %1966 = vmatprep.mubr.bf16.mxu0 %v766
      %1967 = vmatmul.mubr.bf16.gmra.mxu0 %v765
      %v1968 = vpop.f32.mrf.mxu0
      %v1969 = vadd.f32 %v1776, %v1968
      %v1970 = vpop.f32.mrf.mxu0
      %v1971 = vadd.f32 %v1778, %v1970
      %v1972 = vpop.f32.mrf.mxu0
      %v1973 = vadd.f32 %v1780, %v1972
      %v1974 = vpop.f32.mrf.mxu0
      %v1975 = vadd.f32 %v1782, %v1974
      %1976 = vmatprep.mubr.bf16.mxu0 %v771
      %1977 = vmatmul.mubr.bf16.gmra.mxu0 %v770
      %v1978 = vpop.f32.mrf.mxu0
      %v1979 = vadd.f32 %v1786, %v1978
      %v1980 = vpop.f32.mrf.mxu0
      %v1981 = vadd.f32 %v1788, %v1980
      %v1982 = vpop.f32.mrf.mxu0
      %v1983 = vadd.f32 %v1790, %v1982
      %v1984 = vpop.f32.mrf.mxu0
      %v1985 = vadd.f32 %v1792, %v1984
      %1986 = vmatprep.mubr.bf16.mxu0 %v776
      %1987 = vmatmul.mubr.bf16.gmra.mxu0 %v775
      %v1988 = vpop.f32.mrf.mxu0
      %v1989 = vadd.f32 %v1796, %v1988
      %v1990 = vpop.f32.mrf.mxu0
      %v1991 = vadd.f32 %v1798, %v1990
      %v1992 = vpop.f32.mrf.mxu0
      %v1993 = vadd.f32 %v1800, %v1992
      %v1994 = vpop.f32.mrf.mxu0
      %v1995 = vadd.f32 %v1802, %v1994
      %1996 = vdwg.mxu0
      %1997 = vmatprep.subr.bf16.mxu0 0
      %1998 = vmatpush1.bf16.msra.mxu0 0
      %1999 = vmatprep.subr.bf16.mxu0 0
      %2000 = vmatpush1.bf16.msra.mxu0 0
      %2001 = vmatprep.subr.bf16.mxu0 0
      %2002 = vmatpush1.bf16.msra.mxu0 0
      %2003 = vmatprep.subr.bf16.mxu0 0
      %2004 = vmatpush1.bf16.msra.mxu0 0
      %2005 = vmatprep.subr.bf16.mxu0 %v1415
      %2006 = vmatpush1.bf16.msra.mxu0 %v1414
      %2007 = vmatprep.subr.bf16.mxu0 %v1411
      %2008 = vmatpush1.bf16.msra.mxu0 %v1410
      %2009 = vmatprep.subr.bf16.mxu0 %v1407
      %2010 = vmatpush1.bf16.msra.mxu0 %v1406
      %2011 = vmatprep.subr.bf16.mxu0 %v1403
      %2012 = vmatpush1.bf16.msra.mxu0 %v1402
      %2013 = vmatprep.subr.bf16.mxu0 0
      %2014 = vmatpush2.bf16.msra.mxu0 0
      %2015 = vmatprep.subr.bf16.mxu0 0
      %2016 = vmatpush2.bf16.msra.mxu0 0
      %2017 = vmatprep.subr.bf16.mxu0 0
      %2018 = vmatpush2.bf16.msra.mxu0 0
      %2019 = vmatprep.subr.bf16.mxu0 0
      %2020 = vmatpush2.bf16.msra.mxu0 0
      %2021 = vmatprep.subr.bf16.mxu0 0
      %2022 = vmatpush2.bf16.msra.mxu0 0
      %2023 = vmatprep.subr.bf16.mxu0 0
      %2024 = vmatpush2.bf16.msra.mxu0 0
      %2025 = vmatprep.subr.bf16.mxu0 0
      %2026 = vmatpush2.bf16.msra.mxu0 0
      %2027 = vmatprep.subr.bf16.mxu0 0
      %2028 = vmatpush2.bf16.msra.mxu0 0
      %2029 = vmatprep.mubr.bf16.mxu0 0
      %2030 = vmatmul.mubr.bf16.gmra.mxu0 %v1564
      %v2031 = vpop.f32.mrf.mxu0
      %v2032 = vadd.f32 %v1839, %v2031
      %v2033 = vpop.f32.mrf.mxu0
      %v2034 = vadd.f32 %v1841, %v2033
      %v2035 = vpop.f32.mrf.mxu0
      %v2036 = vadd.f32 %v1843, %v2035
      %v2037 = vpop.f32.mrf.mxu0
      %v2038 = vadd.f32 %v1845, %v2037
      %2039 = vmatprep.mubr.bf16.mxu0 0
      %2040 = vmatmul.mubr.bf16.gmra.mxu0 %v1567
      %v2041 = vpop.f32.mrf.mxu0
      %v2042 = vadd.f32 %v1849, %v2041
      %v2043 = vpop.f32.mrf.mxu0
      %v2044 = vadd.f32 %v1851, %v2043
      %v2045 = vpop.f32.mrf.mxu0
      %v2046 = vadd.f32 %v1853, %v2045
      %v2047 = vpop.f32.mrf.mxu0
      %v2048 = vadd.f32 %v1855, %v2047
      %2049 = vmatprep.mubr.bf16.mxu0 0
      %2050 = vmatmul.mubr.bf16.gmra.mxu0 %v1570
      %v2051 = vpop.f32.mrf.mxu0
      %v2052 = vadd.f32 %v1859, %v2051
      %v2053 = vpop.f32.mrf.mxu0
      %v2054 = vadd.f32 %v1861, %v2053
      %v2055 = vpop.f32.mrf.mxu0
      %v2056 = vadd.f32 %v1863, %v2055
      %v2057 = vpop.f32.mrf.mxu0
      %v2058 = vadd.f32 %v1865, %v2057
      %2059 = vmatprep.mubr.bf16.mxu0 0
      %2060 = vmatmul.mubr.bf16.gmra.mxu0 %v1573
      %v2061 = vpop.f32.mrf.mxu0
      %v2062 = vadd.f32 %v1869, %v2061
      %v2063 = vpop.f32.mrf.mxu0
      %v2064 = vadd.f32 %v1871, %v2063
      %v2065 = vpop.f32.mrf.mxu0
      %v2066 = vadd.f32 %v1873, %v2065
      %v2067 = vpop.f32.mrf.mxu0
      %v2068 = vadd.f32 %v1875, %v2067
      %2069 = vmatprep.mubr.bf16.mxu0 0
      %2070 = vmatmul.mubr.bf16.gmra.mxu0 %v1576
      %v2071 = vpop.f32.mrf.mxu0
      %v2072 = vadd.f32 %v1879, %v2071
      %v2073 = vpop.f32.mrf.mxu0
      %v2074 = vadd.f32 %v1881, %v2073
      %v2075 = vpop.f32.mrf.mxu0
      %v2076 = vadd.f32 %v1883, %v2075
      %v2077 = vpop.f32.mrf.mxu0
      %v2078 = vadd.f32 %v1885, %v2077
      %2079 = vmatprep.mubr.bf16.mxu0 0
      %2080 = vmatmul.mubr.bf16.gmra.mxu0 %v1579
      %v2081 = vpop.f32.mrf.mxu0
      %v2082 = vadd.f32 %v1889, %v2081
      %v2083 = vpop.f32.mrf.mxu0
      %v2084 = vadd.f32 %v1891, %v2083
      %v2085 = vpop.f32.mrf.mxu0
      %v2086 = vadd.f32 %v1893, %v2085
      %v2087 = vpop.f32.mrf.mxu0
      %v2088 = vadd.f32 %v1895, %v2087
      %2089 = vmatprep.mubr.bf16.mxu0 0
      %2090 = vmatmul.mubr.bf16.gmra.mxu0 %v1582
      %v2091 = vpop.f32.mrf.mxu0
      %v2092 = vadd.f32 %v1899, %v2091
      %v2093 = vpop.f32.mrf.mxu0
      %v2094 = vadd.f32 %v1901, %v2093
      %v2095 = vpop.f32.mrf.mxu0
      %v2096 = vadd.f32 %v1903, %v2095
      %v2097 = vpop.f32.mrf.mxu0
      %v2098 = vadd.f32 %v1905, %v2097
      %2099 = vmatprep.mubr.bf16.mxu0 0
      %2100 = vmatmul.mubr.bf16.gmra.mxu0 %v1585
      %v2101 = vpop.f32.mrf.mxu0
      %v2102 = vadd.f32 %v1909, %v2101
      %v2103 = vpop.f32.mrf.mxu0
      %v2104 = vadd.f32 %v1911, %v2103
      %v2105 = vpop.f32.mrf.mxu0
      %v2106 = vadd.f32 %v1913, %v2105
      %v2107 = vpop.f32.mrf.mxu0
      %v2108 = vadd.f32 %v1915, %v2107
      %2109 = vmatprep.mubr.bf16.mxu0 0
      %2110 = vmatmul.mubr.bf16.gmra.mxu0 %v1588
      %v2111 = vpop.f32.mrf.mxu0
      %v2112 = vadd.f32 %v1919, %v2111
      %v2113 = vpop.f32.mrf.mxu0
      %v2114 = vadd.f32 %v1921, %v2113
      %v2115 = vpop.f32.mrf.mxu0
      %v2116 = vadd.f32 %v1923, %v2115
      %v2117 = vpop.f32.mrf.mxu0
      %v2118 = vadd.f32 %v1925, %v2117
      %2119 = vmatprep.mubr.bf16.mxu0 0
      %2120 = vmatmul.mubr.bf16.gmra.mxu0 %v1591
      %v2121 = vpop.f32.mrf.mxu0
      %v2122 = vadd.f32 %v1929, %v2121
      %v2123 = vpop.f32.mrf.mxu0
      %v2124 = vadd.f32 %v1931, %v2123
      %v2125 = vpop.f32.mrf.mxu0
      %v2126 = vadd.f32 %v1933, %v2125
      %v2127 = vpop.f32.mrf.mxu0
      %v2128 = vadd.f32 %v1935, %v2127
      %2129 = vmatprep.mubr.bf16.mxu0 0
      %2130 = vmatmul.mubr.bf16.gmra.mxu0 %v1594
      %v2131 = vpop.f32.mrf.mxu0
      %v2132 = vadd.f32 %v1939, %v2131
      %v2133 = vpop.f32.mrf.mxu0
      %v2134 = vadd.f32 %v1941, %v2133
      %v2135 = vpop.f32.mrf.mxu0
      %v2136 = vadd.f32 %v1943, %v2135
      %v2137 = vpop.f32.mrf.mxu0
      %v2138 = vadd.f32 %v1945, %v2137
      %2139 = vmatprep.mubr.bf16.mxu0 0
      %2140 = vmatmul.mubr.bf16.gmra.mxu0 %v1597
      %v2141 = vpop.f32.mrf.mxu0
      %v2142 = vadd.f32 %v1949, %v2141
      %v2143 = vpop.f32.mrf.mxu0
      %v2144 = vadd.f32 %v1951, %v2143
      %v2145 = vpop.f32.mrf.mxu0
      %v2146 = vadd.f32 %v1953, %v2145
      %v2147 = vpop.f32.mrf.mxu0
      %v2148 = vadd.f32 %v1955, %v2147
      %2149 = vmatprep.mubr.bf16.mxu0 0
      %2150 = vmatmul.mubr.bf16.gmra.mxu0 %v1600
      %v2151 = vpop.f32.mrf.mxu0
      %v2152 = vadd.f32 %v1959, %v2151
      %v2153 = vpop.f32.mrf.mxu0
      %v2154 = vadd.f32 %v1961, %v2153
      %v2155 = vpop.f32.mrf.mxu0
      %v2156 = vadd.f32 %v1963, %v2155
      %v2157 = vpop.f32.mrf.mxu0
      %v2158 = vadd.f32 %v1965, %v2157
      %2159 = vmatprep.mubr.bf16.mxu0 0
      %2160 = vmatmul.mubr.bf16.gmra.mxu0 %v1603
      %v2161 = vpop.f32.mrf.mxu0
      %v2162 = vadd.f32 %v1969, %v2161
      %v2163 = vpop.f32.mrf.mxu0
      %v2164 = vadd.f32 %v1971, %v2163
      %v2165 = vpop.f32.mrf.mxu0
      %v2166 = vadd.f32 %v1973, %v2165
      %v2167 = vpop.f32.mrf.mxu0
      %v2168 = vadd.f32 %v1975, %v2167
      %2169 = vmatprep.mubr.bf16.mxu0 0
      %2170 = vmatmul.mubr.bf16.gmra.mxu0 %v1606
      %v2171 = vpop.f32.mrf.mxu0
      %v2172 = vadd.f32 %v1979, %v2171
      %v2173 = vpop.f32.mrf.mxu0
      %v2174 = vadd.f32 %v1981, %v2173
      %v2175 = vpop.f32.mrf.mxu0
      %v2176 = vadd.f32 %v1983, %v2175
      %v2177 = vpop.f32.mrf.mxu0
      %v2178 = vadd.f32 %v1985, %v2177
      %2179 = vmatprep.mubr.bf16.mxu0 0
      %2180 = vmatmul.mubr.bf16.gmra.mxu0 %v1609
      %v2181 = vpop.f32.mrf.mxu0
      %v2182 = vadd.f32 %v1989, %v2181
      %v2183 = vpop.f32.mrf.mxu0
      %v2184 = vadd.f32 %v1991, %v2183
      %v2185 = vpop.f32.mrf.mxu0
      %v2186 = vadd.f32 %v1993, %v2185
      %v2187 = vpop.f32.mrf.mxu0
      %v2188 = vadd.f32 %v1995, %v2187
      %2189 = vdwg.mxu0
      %2190 = vmatprep.subr.bf16.mxu0 %v1305
      %2191 = vmatpush1.bf16.msra.mxu0 %v1304
      %2192 = vmatprep.subr.bf16.mxu0 %v1301
      %2193 = vmatpush1.bf16.msra.mxu0 %v1300
      %2194 = vmatprep.subr.bf16.mxu0 %v1297
      %2195 = vmatpush1.bf16.msra.mxu0 %v1296
      %2196 = vmatprep.subr.bf16.mxu0 %v1293
      %2197 = vmatpush1.bf16.msra.mxu0 %v1292
      %2198 = vmatprep.subr.bf16.mxu0 %v1289
      %2199 = vmatpush1.bf16.msra.mxu0 %v1288
      %2200 = vmatprep.subr.bf16.mxu0 %v1285
      %2201 = vmatpush1.bf16.msra.mxu0 %v1284
      %2202 = vmatprep.subr.bf16.mxu0 %v1281
      %2203 = vmatpush1.bf16.msra.mxu0 %v1280
      %2204 = vmatprep.subr.bf16.mxu0 %v1277
      %2205 = vmatpush1.bf16.msra.mxu0 %v1276
      %2206 = vmatprep.subr.bf16.mxu0 %v1337
      %2207 = vmatpush2.bf16.msra.mxu0 %v1336
      %2208 = vmatprep.subr.bf16.mxu0 %v1333
      %2209 = vmatpush2.bf16.msra.mxu0 %v1332
      %2210 = vmatprep.subr.bf16.mxu0 %v1329
      %2211 = vmatpush2.bf16.msra.mxu0 %v1328
      %2212 = vmatprep.subr.bf16.mxu0 %v1325
      %2213 = vmatpush2.bf16.msra.mxu0 %v1324
      %2214 = vmatprep.subr.bf16.mxu0 %v1321
      %2215 = vmatpush2.bf16.msra.mxu0 %v1320
      %2216 = vmatprep.subr.bf16.mxu0 %v1317
      %2217 = vmatpush2.bf16.msra.mxu0 %v1316
      %2218 = vmatprep.subr.bf16.mxu0 %v1313
      %2219 = vmatpush2.bf16.msra.mxu0 %v1312
      %2220 = vmatprep.subr.bf16.mxu0 %v1309
      %2221 = vmatpush2.bf16.msra.mxu0 %v1308
      %2222 = vmatprep.mubr.bf16.mxu0 %v699
      %2223 = vmatmul.mubr.bf16.gmra.mxu0 %v698
      %v2224 = vpop.f32.mrf.mxu0
      %v2225 = vadd.f32 %v433, %v2224
      %v2226 = vpop.f32.mrf.mxu0
      %v2227 = vadd.f32 %v437, %v2226
      %v2228 = vpop.f32.mrf.mxu0
      %v2229 = vadd.f32 %v433, %v2228
      %v2230 = vpop.f32.mrf.mxu0
      %v2231 = vadd.f32 %v437, %v2230
      %2232 = vmatprep.mubr.bf16.mxu0 %v704
      %2233 = vmatmul.mubr.bf16.gmra.mxu0 %v703
      %v2234 = vpop.f32.mrf.mxu0
      %v2235 = vadd.f32 %v433, %v2234
      %v2236 = vpop.f32.mrf.mxu0
      %v2237 = vadd.f32 %v437, %v2236
      %v2238 = vpop.f32.mrf.mxu0
      %v2239 = vadd.f32 %v433, %v2238
      %v2240 = vpop.f32.mrf.mxu0
      %v2241 = vadd.f32 %v437, %v2240
      %2242 = vmatprep.mubr.bf16.mxu0 %v709
      %2243 = vmatmul.mubr.bf16.gmra.mxu0 %v708
      %v2244 = vpop.f32.mrf.mxu0
      %v2245 = vadd.f32 %v433, %v2244
      %v2246 = vpop.f32.mrf.mxu0
      %v2247 = vadd.f32 %v437, %v2246
      %v2248 = vpop.f32.mrf.mxu0
      %v2249 = vadd.f32 %v433, %v2248
      %v2250 = vpop.f32.mrf.mxu0
      %v2251 = vadd.f32 %v437, %v2250
      %2252 = vmatprep.mubr.bf16.mxu0 %v714
      %2253 = vmatmul.mubr.bf16.gmra.mxu0 %v713
      %v2254 = vpop.f32.mrf.mxu0
      %v2255 = vadd.f32 %v433, %v2254
      %v2256 = vpop.f32.mrf.mxu0
      %v2257 = vadd.f32 %v437, %v2256
      %v2258 = vpop.f32.mrf.mxu0
      %v2259 = vadd.f32 %v433, %v2258
      %v2260 = vpop.f32.mrf.mxu0
      %v2261 = vadd.f32 %v437, %v2260
      %2262 = vmatprep.mubr.bf16.mxu0 %v719
      %2263 = vmatmul.mubr.bf16.gmra.mxu0 %v718
      %v2264 = vpop.f32.mrf.mxu0
      %v2265 = vadd.f32 %v433, %v2264
      %v2266 = vpop.f32.mrf.mxu0
      %v2267 = vadd.f32 %v437, %v2266
      %v2268 = vpop.f32.mrf.mxu0
      %v2269 = vadd.f32 %v433, %v2268
      %v2270 = vpop.f32.mrf.mxu0
      %v2271 = vadd.f32 %v437, %v2270
      %2272 = vmatprep.mubr.bf16.mxu0 %v724
      %2273 = vmatmul.mubr.bf16.gmra.mxu0 %v723
      %v2274 = vpop.f32.mrf.mxu0
      %v2275 = vadd.f32 %v433, %v2274
      %v2276 = vpop.f32.mrf.mxu0
      %v2277 = vadd.f32 %v437, %v2276
      %v2278 = vpop.f32.mrf.mxu0
      %v2279 = vadd.f32 %v433, %v2278
      %v2280 = vpop.f32.mrf.mxu0
      %v2281 = vadd.f32 %v437, %v2280
      %2282 = vmatprep.mubr.bf16.mxu0 %v729
      %2283 = vmatmul.mubr.bf16.gmra.mxu0 %v728
      %v2284 = vpop.f32.mrf.mxu0
      %v2285 = vadd.f32 %v433, %v2284
      %v2286 = vpop.f32.mrf.mxu0
      %v2287 = vadd.f32 %v437, %v2286
      %v2288 = vpop.f32.mrf.mxu0
      %v2289 = vadd.f32 %v433, %v2288
      %v2290 = vpop.f32.mrf.mxu0
      %v2291 = vadd.f32 %v437, %v2290
      %2292 = vmatprep.mubr.bf16.mxu0 %v734
      %2293 = vmatmul.mubr.bf16.gmra.mxu0 %v733
      %v2294 = vpop.f32.mrf.mxu0
      %v2295 = vadd.f32 %v433, %v2294
      %v2296 = vpop.f32.mrf.mxu0
      %v2297 = vadd.f32 %v437, %v2296
      %v2298 = vpop.f32.mrf.mxu0
      %v2299 = vadd.f32 %v433, %v2298
      %v2300 = vpop.f32.mrf.mxu0
      %v2301 = vadd.f32 %v437, %v2300
      %2302 = vmatprep.mubr.bf16.mxu0 %v739
      %2303 = vmatmul.mubr.bf16.gmra.mxu0 %v738
      %v2304 = vpop.f32.mrf.mxu0
      %v2305 = vadd.f32 %v433, %v2304
      %v2306 = vpop.f32.mrf.mxu0
      %v2307 = vadd.f32 %v437, %v2306
      %v2308 = vpop.f32.mrf.mxu0
      %v2309 = vadd.f32 %v433, %v2308
      %v2310 = vpop.f32.mrf.mxu0
      %v2311 = vadd.f32 %v437, %v2310
      %2312 = vmatprep.mubr.bf16.mxu0 %v744
      %2313 = vmatmul.mubr.bf16.gmra.mxu0 %v743
      %v2314 = vpop.f32.mrf.mxu0
      %v2315 = vadd.f32 %v433, %v2314
      %v2316 = vpop.f32.mrf.mxu0
      %v2317 = vadd.f32 %v437, %v2316
      %v2318 = vpop.f32.mrf.mxu0
      %v2319 = vadd.f32 %v433, %v2318
      %v2320 = vpop.f32.mrf.mxu0
      %v2321 = vadd.f32 %v437, %v2320
      %2322 = vmatprep.mubr.bf16.mxu0 %v749
      %2323 = vmatmul.mubr.bf16.gmra.mxu0 %v748
      %v2324 = vpop.f32.mrf.mxu0
      %v2325 = vadd.f32 %v433, %v2324
      %v2326 = vpop.f32.mrf.mxu0
      %v2327 = vadd.f32 %v437, %v2326
      %v2328 = vpop.f32.mrf.mxu0
      %v2329 = vadd.f32 %v433, %v2328
      %v2330 = vpop.f32.mrf.mxu0
      %v2331 = vadd.f32 %v437, %v2330
      %2332 = vmatprep.mubr.bf16.mxu0 %v754
      %2333 = vmatmul.mubr.bf16.gmra.mxu0 %v753
      %v2334 = vpop.f32.mrf.mxu0
      %v2335 = vadd.f32 %v433, %v2334
      %v2336 = vpop.f32.mrf.mxu0
      %v2337 = vadd.f32 %v437, %v2336
      %v2338 = vpop.f32.mrf.mxu0
      %v2339 = vadd.f32 %v433, %v2338
      %v2340 = vpop.f32.mrf.mxu0
      %v2341 = vadd.f32 %v437, %v2340
      %2342 = vmatprep.mubr.bf16.mxu0 %v759
      %2343 = vmatmul.mubr.bf16.gmra.mxu0 %v758
      %v2344 = vpop.f32.mrf.mxu0
      %v2345 = vadd.f32 %v433, %v2344
      %v2346 = vpop.f32.mrf.mxu0
      %v2347 = vadd.f32 %v437, %v2346
      %v2348 = vpop.f32.mrf.mxu0
      %v2349 = vadd.f32 %v433, %v2348
      %v2350 = vpop.f32.mrf.mxu0
      %v2351 = vadd.f32 %v437, %v2350
      %2352 = vmatprep.mubr.bf16.mxu0 %v764
      %2353 = vmatmul.mubr.bf16.gmra.mxu0 %v763
      %v2354 = vpop.f32.mrf.mxu0
      %v2355 = vadd.f32 %v433, %v2354
      %v2356 = vpop.f32.mrf.mxu0
      %v2357 = vadd.f32 %v437, %v2356
      %v2358 = vpop.f32.mrf.mxu0
      %v2359 = vadd.f32 %v433, %v2358
      %v2360 = vpop.f32.mrf.mxu0
      %v2361 = vadd.f32 %v437, %v2360
      %2362 = vmatprep.mubr.bf16.mxu0 %v769
      %2363 = vmatmul.mubr.bf16.gmra.mxu0 %v768
      %v2364 = vpop.f32.mrf.mxu0
      %v2365 = vadd.f32 %v433, %v2364
      %v2366 = vpop.f32.mrf.mxu0
      %v2367 = vadd.f32 %v437, %v2366
      %v2368 = vpop.f32.mrf.mxu0
      %v2369 = vadd.f32 %v433, %v2368
      %v2370 = vpop.f32.mrf.mxu0
      %v2371 = vadd.f32 %v437, %v2370
      %2372 = vmatprep.mubr.bf16.mxu0 %v774
      %2373 = vmatmul.mubr.bf16.gmra.mxu0 %v773
      %v2374 = vpop.f32.mrf.mxu0
      %v2375 = vadd.f32 %v433, %v2374
      %v2376 = vpop.f32.mrf.mxu0
      %v2377 = vadd.f32 %v437, %v2376
      %v2378 = vpop.f32.mrf.mxu0
      %v2379 = vadd.f32 %v433, %v2378
      %v2380 = vpop.f32.mrf.mxu0
      %v2381 = vadd.f32 %v437, %v2380
      %2382 = vdwg.mxu0
      %2383 = vmatprep.subr.bf16.mxu0 %v1369
      %2384 = vmatpush1.bf16.msra.mxu0 %v1368
      %2385 = vmatprep.subr.bf16.mxu0 %v1365
      %2386 = vmatpush1.bf16.msra.mxu0 %v1364
      %2387 = vmatprep.subr.bf16.mxu0 %v1361
      %2388 = vmatpush1.bf16.msra.mxu0 %v1360
      %2389 = vmatprep.subr.bf16.mxu0 %v1357
      %2390 = vmatpush1.bf16.msra.mxu0 %v1356
      %2391 = vmatprep.subr.bf16.mxu0 %v1353
      %2392 = vmatpush1.bf16.msra.mxu0 %v1352
      %2393 = vmatprep.subr.bf16.mxu0 %v1349
      %2394 = vmatpush1.bf16.msra.mxu0 %v1348
      %2395 = vmatprep.subr.bf16.mxu0 %v1345
      %2396 = vmatpush1.bf16.msra.mxu0 %v1344
      %2397 = vmatprep.subr.bf16.mxu0 %v1341
      %2398 = vmatpush1.bf16.msra.mxu0 %v1340
      %2399 = vmatprep.subr.bf16.mxu0 %v1401
      %2400 = vmatpush2.bf16.msra.mxu0 %v1400
      %2401 = vmatprep.subr.bf16.mxu0 %v1397
      %2402 = vmatpush2.bf16.msra.mxu0 %v1396
      %2403 = vmatprep.subr.bf16.mxu0 %v1393
      %2404 = vmatpush2.bf16.msra.mxu0 %v1392
      %2405 = vmatprep.subr.bf16.mxu0 %v1389
      %2406 = vmatpush2.bf16.msra.mxu0 %v1388
      %2407 = vmatprep.subr.bf16.mxu0 %v1385
      %2408 = vmatpush2.bf16.msra.mxu0 %v1384
      %2409 = vmatprep.subr.bf16.mxu0 %v1381
      %2410 = vmatpush2.bf16.msra.mxu0 %v1380
      %2411 = vmatprep.subr.bf16.mxu0 %v1377
      %2412 = vmatpush2.bf16.msra.mxu0 %v1376
      %2413 = vmatprep.subr.bf16.mxu0 %v1373
      %2414 = vmatpush2.bf16.msra.mxu0 %v1372
      %2415 = vmatprep.mubr.bf16.mxu0 %v701
      %2416 = vmatmul.mubr.bf16.gmra.mxu0 %v700
      %v2417 = vpop.f32.mrf.mxu0
      %v2418 = vadd.f32 %v2225, %v2417
      %v2419 = vpop.f32.mrf.mxu0
      %v2420 = vadd.f32 %v2227, %v2419
      %v2421 = vpop.f32.mrf.mxu0
      %v2422 = vadd.f32 %v2229, %v2421
      %v2423 = vpop.f32.mrf.mxu0
      %v2424 = vadd.f32 %v2231, %v2423
      %2425 = vmatprep.mubr.bf16.mxu0 %v706
      %2426 = vmatmul.mubr.bf16.gmra.mxu0 %v705
      %v2427 = vpop.f32.mrf.mxu0
      %v2428 = vadd.f32 %v2235, %v2427
      %v2429 = vpop.f32.mrf.mxu0
      %v2430 = vadd.f32 %v2237, %v2429
      %v2431 = vpop.f32.mrf.mxu0
      %v2432 = vadd.f32 %v2239, %v2431
      %v2433 = vpop.f32.mrf.mxu0
      %v2434 = vadd.f32 %v2241, %v2433
      %2435 = vmatprep.mubr.bf16.mxu0 %v711
      %2436 = vmatmul.mubr.bf16.gmra.mxu0 %v710
      %v2437 = vpop.f32.mrf.mxu0
      %v2438 = vadd.f32 %v2245, %v2437
      %v2439 = vpop.f32.mrf.mxu0
      %v2440 = vadd.f32 %v2247, %v2439
      %v2441 = vpop.f32.mrf.mxu0
      %v2442 = vadd.f32 %v2249, %v2441
      %v2443 = vpop.f32.mrf.mxu0
      %v2444 = vadd.f32 %v2251, %v2443
      %2445 = vmatprep.mubr.bf16.mxu0 %v716
      %2446 = vmatmul.mubr.bf16.gmra.mxu0 %v715
      %v2447 = vpop.f32.mrf.mxu0
      %v2448 = vadd.f32 %v2255, %v2447
      %v2449 = vpop.f32.mrf.mxu0
      %v2450 = vadd.f32 %v2257, %v2449
      %v2451 = vpop.f32.mrf.mxu0
      %v2452 = vadd.f32 %v2259, %v2451
      %v2453 = vpop.f32.mrf.mxu0
      %v2454 = vadd.f32 %v2261, %v2453
      %2455 = vmatprep.mubr.bf16.mxu0 %v721
      %2456 = vmatmul.mubr.bf16.gmra.mxu0 %v720
      %v2457 = vpop.f32.mrf.mxu0
      %v2458 = vadd.f32 %v2265, %v2457
      %v2459 = vpop.f32.mrf.mxu0
      %v2460 = vadd.f32 %v2267, %v2459
      %v2461 = vpop.f32.mrf.mxu0
      %v2462 = vadd.f32 %v2269, %v2461
      %v2463 = vpop.f32.mrf.mxu0
      %v2464 = vadd.f32 %v2271, %v2463
      %2465 = vmatprep.mubr.bf16.mxu0 %v726
      %2466 = vmatmul.mubr.bf16.gmra.mxu0 %v725
      %v2467 = vpop.f32.mrf.mxu0
      %v2468 = vadd.f32 %v2275, %v2467
      %v2469 = vpop.f32.mrf.mxu0
      %v2470 = vadd.f32 %v2277, %v2469
      %v2471 = vpop.f32.mrf.mxu0
      %v2472 = vadd.f32 %v2279, %v2471
      %v2473 = vpop.f32.mrf.mxu0
      %v2474 = vadd.f32 %v2281, %v2473
      %2475 = vmatprep.mubr.bf16.mxu0 %v731
      %2476 = vmatmul.mubr.bf16.gmra.mxu0 %v730
      %v2477 = vpop.f32.mrf.mxu0
      %v2478 = vadd.f32 %v2285, %v2477
      %v2479 = vpop.f32.mrf.mxu0
      %v2480 = vadd.f32 %v2287, %v2479
      %v2481 = vpop.f32.mrf.mxu0
      %v2482 = vadd.f32 %v2289, %v2481
      %v2483 = vpop.f32.mrf.mxu0
      %v2484 = vadd.f32 %v2291, %v2483
      %2485 = vmatprep.mubr.bf16.mxu0 %v736
      %2486 = vmatmul.mubr.bf16.gmra.mxu0 %v735
      %v2487 = vpop.f32.mrf.mxu0
      %v2488 = vadd.f32 %v2295, %v2487
      %v2489 = vpop.f32.mrf.mxu0
      %v2490 = vadd.f32 %v2297, %v2489
      %v2491 = vpop.f32.mrf.mxu0
      %v2492 = vadd.f32 %v2299, %v2491
      %v2493 = vpop.f32.mrf.mxu0
      %v2494 = vadd.f32 %v2301, %v2493
      %2495 = vmatprep.mubr.bf16.mxu0 %v741
      %2496 = vmatmul.mubr.bf16.gmra.mxu0 %v740
      %v2497 = vpop.f32.mrf.mxu0
      %v2498 = vadd.f32 %v2305, %v2497
      %v2499 = vpop.f32.mrf.mxu0
      %v2500 = vadd.f32 %v2307, %v2499
      %v2501 = vpop.f32.mrf.mxu0
      %v2502 = vadd.f32 %v2309, %v2501
      %v2503 = vpop.f32.mrf.mxu0
      %v2504 = vadd.f32 %v2311, %v2503
      %2505 = vmatprep.mubr.bf16.mxu0 %v746
      %2506 = vmatmul.mubr.bf16.gmra.mxu0 %v745
      %v2507 = vpop.f32.mrf.mxu0
      %v2508 = vadd.f32 %v2315, %v2507
      %v2509 = vpop.f32.mrf.mxu0
      %v2510 = vadd.f32 %v2317, %v2509
      %v2511 = vpop.f32.mrf.mxu0
      %v2512 = vadd.f32 %v2319, %v2511
      %v2513 = vpop.f32.mrf.mxu0
      %v2514 = vadd.f32 %v2321, %v2513
      %2515 = vmatprep.mubr.bf16.mxu0 %v751
      %2516 = vmatmul.mubr.bf16.gmra.mxu0 %v750
      %v2517 = vpop.f32.mrf.mxu0
      %v2518 = vadd.f32 %v2325, %v2517
      %v2519 = vpop.f32.mrf.mxu0
      %v2520 = vadd.f32 %v2327, %v2519
      %v2521 = vpop.f32.mrf.mxu0
      %v2522 = vadd.f32 %v2329, %v2521
      %v2523 = vpop.f32.mrf.mxu0
      %v2524 = vadd.f32 %v2331, %v2523
      %2525 = vmatprep.mubr.bf16.mxu0 %v756
      %2526 = vmatmul.mubr.bf16.gmra.mxu0 %v755
      %v2527 = vpop.f32.mrf.mxu0
      %v2528 = vadd.f32 %v2335, %v2527
      %v2529 = vpop.f32.mrf.mxu0
      %v2530 = vadd.f32 %v2337, %v2529
      %v2531 = vpop.f32.mrf.mxu0
      %v2532 = vadd.f32 %v2339, %v2531
      %v2533 = vpop.f32.mrf.mxu0
      %v2534 = vadd.f32 %v2341, %v2533
      %2535 = vmatprep.mubr.bf16.mxu0 %v761
      %2536 = vmatmul.mubr.bf16.gmra.mxu0 %v760
      %v2537 = vpop.f32.mrf.mxu0
      %v2538 = vadd.f32 %v2345, %v2537
      %v2539 = vpop.f32.mrf.mxu0
      %v2540 = vadd.f32 %v2347, %v2539
      %v2541 = vpop.f32.mrf.mxu0
      %v2542 = vadd.f32 %v2349, %v2541
      %v2543 = vpop.f32.mrf.mxu0
      %v2544 = vadd.f32 %v2351, %v2543
      %2545 = vmatprep.mubr.bf16.mxu0 %v766
      %2546 = vmatmul.mubr.bf16.gmra.mxu0 %v765
      %v2547 = vpop.f32.mrf.mxu0
      %v2548 = vadd.f32 %v2355, %v2547
      %v2549 = vpop.f32.mrf.mxu0
      %v2550 = vadd.f32 %v2357, %v2549
      %v2551 = vpop.f32.mrf.mxu0
      %v2552 = vadd.f32 %v2359, %v2551
      %v2553 = vpop.f32.mrf.mxu0
      %v2554 = vadd.f32 %v2361, %v2553
      %2555 = vmatprep.mubr.bf16.mxu0 %v771
      %2556 = vmatmul.mubr.bf16.gmra.mxu0 %v770
      %v2557 = vpop.f32.mrf.mxu0
      %v2558 = vadd.f32 %v2365, %v2557
      %v2559 = vpop.f32.mrf.mxu0
      %v2560 = vadd.f32 %v2367, %v2559
      %v2561 = vpop.f32.mrf.mxu0
      %v2562 = vadd.f32 %v2369, %v2561
      %v2563 = vpop.f32.mrf.mxu0
      %v2564 = vadd.f32 %v2371, %v2563
      %2565 = vmatprep.mubr.bf16.mxu0 %v776
      %2566 = vmatmul.mubr.bf16.gmra.mxu0 %v775
      %v2567 = vpop.f32.mrf.mxu0
      %v2568 = vadd.f32 %v2375, %v2567
      %v2569 = vpop.f32.mrf.mxu0
      %v2570 = vadd.f32 %v2377, %v2569
      %v2571 = vpop.f32.mrf.mxu0
      %v2572 = vadd.f32 %v2379, %v2571
      %v2573 = vpop.f32.mrf.mxu0
      %v2574 = vadd.f32 %v2381, %v2573
      %2575 = vdwg.mxu0
      %2576 = vmatprep.subr.bf16.mxu0 0
      %2577 = vmatpush1.bf16.msra.mxu0 0
      %2578 = vmatprep.subr.bf16.mxu0 0
      %2579 = vmatpush1.bf16.msra.mxu0 0
      %2580 = vmatprep.subr.bf16.mxu0 0
      %2581 = vmatpush1.bf16.msra.mxu0 0
      %2582 = vmatprep.subr.bf16.mxu0 0
      %2583 = vmatpush1.bf16.msra.mxu0 0
      %2584 = vmatprep.subr.bf16.mxu0 %v1417
      %2585 = vmatpush1.bf16.msra.mxu0 %v1416
      %2586 = vmatprep.subr.bf16.mxu0 %v1413
      %2587 = vmatpush1.bf16.msra.mxu0 %v1412
      %2588 = vmatprep.subr.bf16.mxu0 %v1409
      %2589 = vmatpush1.bf16.msra.mxu0 %v1408
      %2590 = vmatprep.subr.bf16.mxu0 %v1405
      %2591 = vmatpush1.bf16.msra.mxu0 %v1404
      %2592 = vmatprep.subr.bf16.mxu0 0
      %2593 = vmatpush2.bf16.msra.mxu0 0
      %2594 = vmatprep.subr.bf16.mxu0 0
      %2595 = vmatpush2.bf16.msra.mxu0 0
      %2596 = vmatprep.subr.bf16.mxu0 0
      %2597 = vmatpush2.bf16.msra.mxu0 0
      %2598 = vmatprep.subr.bf16.mxu0 0
      %2599 = vmatpush2.bf16.msra.mxu0 0
      %2600 = vmatprep.subr.bf16.mxu0 0
      %2601 = vmatpush2.bf16.msra.mxu0 0
      %2602 = vmatprep.subr.bf16.mxu0 0
      %2603 = vmatpush2.bf16.msra.mxu0 0
      %2604 = vmatprep.subr.bf16.mxu0 0
      %2605 = vmatpush2.bf16.msra.mxu0 0
      %2606 = vmatprep.subr.bf16.mxu0 0
      %2607 = vmatpush2.bf16.msra.mxu0 0
      %2608 = vmatprep.mubr.bf16.mxu0 0
      %2609 = vmatmul.mubr.bf16.gmra.mxu0 %v1564
      %v2610 = vpop.f32.mrf.mxu0
      %v2611 = vadd.f32 %v2418, %v2610
      %v2612 = vpop.f32.mrf.mxu0
      %v2613 = vadd.f32 %v2420, %v2612
      %v2614 = vpop.f32.mrf.mxu0
      %v2615 = vadd.f32 %v2422, %v2614
      %v2616 = vpop.f32.mrf.mxu0
      %v2617 = vadd.f32 %v2424, %v2616
      %2618 = vmatprep.mubr.bf16.mxu0 0
      %2619 = vmatmul.mubr.bf16.gmra.mxu0 %v1567
      %v2620 = vpop.f32.mrf.mxu0
      %v2621 = vadd.f32 %v2428, %v2620
      %v2622 = vpop.f32.mrf.mxu0
      %v2623 = vadd.f32 %v2430, %v2622
      %v2624 = vpop.f32.mrf.mxu0
      %v2625 = vadd.f32 %v2432, %v2624
      %v2626 = vpop.f32.mrf.mxu0
      %v2627 = vadd.f32 %v2434, %v2626
      %2628 = vmatprep.mubr.bf16.mxu0 0
      %2629 = vmatmul.mubr.bf16.gmra.mxu0 %v1570
      %v2630 = vpop.f32.mrf.mxu0
      %v2631 = vadd.f32 %v2438, %v2630
      %v2632 = vpop.f32.mrf.mxu0
      %v2633 = vadd.f32 %v2440, %v2632
      %v2634 = vpop.f32.mrf.mxu0
      %v2635 = vadd.f32 %v2442, %v2634
      %v2636 = vpop.f32.mrf.mxu0
      %v2637 = vadd.f32 %v2444, %v2636
      %2638 = vmatprep.mubr.bf16.mxu0 0
      %2639 = vmatmul.mubr.bf16.gmra.mxu0 %v1573
      %v2640 = vpop.f32.mrf.mxu0
      %v2641 = vadd.f32 %v2448, %v2640
      %v2642 = vpop.f32.mrf.mxu0
      %v2643 = vadd.f32 %v2450, %v2642
      %v2644 = vpop.f32.mrf.mxu0
      %v2645 = vadd.f32 %v2452, %v2644
      %v2646 = vpop.f32.mrf.mxu0
      %v2647 = vadd.f32 %v2454, %v2646
      %2648 = vmatprep.mubr.bf16.mxu0 0
      %2649 = vmatmul.mubr.bf16.gmra.mxu0 %v1576
      %v2650 = vpop.f32.mrf.mxu0
      %v2651 = vadd.f32 %v2458, %v2650
      %v2652 = vpop.f32.mrf.mxu0
      %v2653 = vadd.f32 %v2460, %v2652
      %v2654 = vpop.f32.mrf.mxu0
      %v2655 = vadd.f32 %v2462, %v2654
      %v2656 = vpop.f32.mrf.mxu0
      %v2657 = vadd.f32 %v2464, %v2656
      %2658 = vmatprep.mubr.bf16.mxu0 0
      %2659 = vmatmul.mubr.bf16.gmra.mxu0 %v1579
      %v2660 = vpop.f32.mrf.mxu0
      %v2661 = vadd.f32 %v2468, %v2660
      %v2662 = vpop.f32.mrf.mxu0
      %v2663 = vadd.f32 %v2470, %v2662
      %v2664 = vpop.f32.mrf.mxu0
      %v2665 = vadd.f32 %v2472, %v2664
      %v2666 = vpop.f32.mrf.mxu0
      %v2667 = vadd.f32 %v2474, %v2666
      %2668 = vmatprep.mubr.bf16.mxu0 0
      %2669 = vmatmul.mubr.bf16.gmra.mxu0 %v1582
      %v2670 = vpop.f32.mrf.mxu0
      %v2671 = vadd.f32 %v2478, %v2670
      %v2672 = vpop.f32.mrf.mxu0
      %v2673 = vadd.f32 %v2480, %v2672
      %v2674 = vpop.f32.mrf.mxu0
      %v2675 = vadd.f32 %v2482, %v2674
      %v2676 = vpop.f32.mrf.mxu0
      %v2677 = vadd.f32 %v2484, %v2676
      %2678 = vmatprep.mubr.bf16.mxu0 0
      %2679 = vmatmul.mubr.bf16.gmra.mxu0 %v1585
      %v2680 = vpop.f32.mrf.mxu0
      %v2681 = vadd.f32 %v2488, %v2680
      %v2682 = vpop.f32.mrf.mxu0
      %v2683 = vadd.f32 %v2490, %v2682
      %v2684 = vpop.f32.mrf.mxu0
      %v2685 = vadd.f32 %v2492, %v2684
      %v2686 = vpop.f32.mrf.mxu0
      %v2687 = vadd.f32 %v2494, %v2686
      %2688 = vmatprep.mubr.bf16.mxu0 0
      %2689 = vmatmul.mubr.bf16.gmra.mxu0 %v1588
      %v2690 = vpop.f32.mrf.mxu0
      %v2691 = vadd.f32 %v2498, %v2690
      %v2692 = vpop.f32.mrf.mxu0
      %v2693 = vadd.f32 %v2500, %v2692
      %v2694 = vpop.f32.mrf.mxu0
      %v2695 = vadd.f32 %v2502, %v2694
      %v2696 = vpop.f32.mrf.mxu0
      %v2697 = vadd.f32 %v2504, %v2696
      %2698 = vmatprep.mubr.bf16.mxu0 0
      %2699 = vmatmul.mubr.bf16.gmra.mxu0 %v1591
      %v2700 = vpop.f32.mrf.mxu0
      %v2701 = vadd.f32 %v2508, %v2700
      %v2702 = vpop.f32.mrf.mxu0
      %v2703 = vadd.f32 %v2510, %v2702
      %v2704 = vpop.f32.mrf.mxu0
      %v2705 = vadd.f32 %v2512, %v2704
      %v2706 = vpop.f32.mrf.mxu0
      %v2707 = vadd.f32 %v2514, %v2706
      %2708 = vmatprep.mubr.bf16.mxu0 0
      %2709 = vmatmul.mubr.bf16.gmra.mxu0 %v1594
      %v2710 = vpop.f32.mrf.mxu0
      %v2711 = vadd.f32 %v2518, %v2710
      %v2712 = vpop.f32.mrf.mxu0
      %v2713 = vadd.f32 %v2520, %v2712
      %v2714 = vpop.f32.mrf.mxu0
      %v2715 = vadd.f32 %v2522, %v2714
      %v2716 = vpop.f32.mrf.mxu0
      %v2717 = vadd.f32 %v2524, %v2716
      %2718 = vmatprep.mubr.bf16.mxu0 0
      %2719 = vmatmul.mubr.bf16.gmra.mxu0 %v1597
      %v2720 = vpop.f32.mrf.mxu0
      %v2721 = vadd.f32 %v2528, %v2720
      %v2722 = vpop.f32.mrf.mxu0
      %v2723 = vadd.f32 %v2530, %v2722
      %v2724 = vpop.f32.mrf.mxu0
      %v2725 = vadd.f32 %v2532, %v2724
      %v2726 = vpop.f32.mrf.mxu0
      %v2727 = vadd.f32 %v2534, %v2726
      %2728 = vmatprep.mubr.bf16.mxu0 0
      %2729 = vmatmul.mubr.bf16.gmra.mxu0 %v1600
      %v2730 = vpop.f32.mrf.mxu0
      %v2731 = vadd.f32 %v2538, %v2730
      %v2732 = vpop.f32.mrf.mxu0
      %v2733 = vadd.f32 %v2540, %v2732
      %v2734 = vpop.f32.mrf.mxu0
      %v2735 = vadd.f32 %v2542, %v2734
      %v2736 = vpop.f32.mrf.mxu0
      %v2737 = vadd.f32 %v2544, %v2736
      %2738 = vmatprep.mubr.bf16.mxu0 0
      %2739 = vmatmul.mubr.bf16.gmra.mxu0 %v1603
      %v2740 = vpop.f32.mrf.mxu0
      %v2741 = vadd.f32 %v2548, %v2740
      %v2742 = vpop.f32.mrf.mxu0
      %v2743 = vadd.f32 %v2550, %v2742
      %v2744 = vpop.f32.mrf.mxu0
      %v2745 = vadd.f32 %v2552, %v2744
      %v2746 = vpop.f32.mrf.mxu0
      %v2747 = vadd.f32 %v2554, %v2746
      %2748 = vmatprep.mubr.bf16.mxu0 0
      %2749 = vmatmul.mubr.bf16.gmra.mxu0 %v1606
      %v2750 = vpop.f32.mrf.mxu0
      %v2751 = vadd.f32 %v2558, %v2750
      %v2752 = vpop.f32.mrf.mxu0
      %v2753 = vadd.f32 %v2560, %v2752
      %v2754 = vpop.f32.mrf.mxu0
      %v2755 = vadd.f32 %v2562, %v2754
      %v2756 = vpop.f32.mrf.mxu0
      %v2757 = vadd.f32 %v2564, %v2756
      %2758 = vmatprep.mubr.bf16.mxu0 0
      %2759 = vmatmul.mubr.bf16.gmra.mxu0 %v1609
      %v2760 = vpop.f32.mrf.mxu0
      %v2761 = vadd.f32 %v2568, %v2760
      %v2762 = vpop.f32.mrf.mxu0
      %v2763 = vadd.f32 %v2570, %v2762
      %v2764 = vpop.f32.mrf.mxu0
      %v2765 = vadd.f32 %v2572, %v2764
      %v2766 = vpop.f32.mrf.mxu0
      %v2767 = vadd.f32 %v2574, %v2766
      %2768 = vdwg.mxu0
      %v2769 = vmax.f32 %v2032, 0.0
      %v2770 = vmax.f32 %v2034, 0.0
      %v2771 = vmax.f32 %v2611, 0.0
      %v2772 = vmax.f32 %v2613, 0.0
      %v2773 = vmax.f32 %v2036, 0.0
      %v2774 = vmax.f32 %v2038, 0.0
      %v2775 = vmax.f32 %v2615, 0.0
      %v2776 = vmax.f32 %v2617, 0.0
      %v2777 = vmax.f32 %v2042, 0.0
      %v2778 = vmax.f32 %v2044, 0.0
      %v2779 = vmax.f32 %v2621, 0.0
      %v2780 = vmax.f32 %v2623, 0.0
      %v2781 = vmax.f32 %v2046, 0.0
      %v2782 = vmax.f32 %v2048, 0.0
      %v2783 = vmax.f32 %v2625, 0.0
      %v2784 = vmax.f32 %v2627, 0.0
      %v2785 = vmax.f32 %v2052, 0.0
      %v2786 = vmax.f32 %v2054, 0.0
      %v2787 = vmax.f32 %v2631, 0.0
      %v2788 = vmax.f32 %v2633, 0.0
      %v2789 = vmax.f32 %v2056, 0.0
      %v2790 = vmax.f32 %v2058, 0.0
      %v2791 = vmax.f32 %v2635, 0.0
      %v2792 = vmax.f32 %v2637, 0.0
      %v2793 = vmax.f32 %v2062, 0.0
      %v2794 = vmax.f32 %v2064, 0.0
      %v2795 = vmax.f32 %v2641, 0.0
      %v2796 = vmax.f32 %v2643, 0.0
      %v2797 = vmax.f32 %v2066, 0.0
      %v2798 = vmax.f32 %v2068, 0.0
      %v2799 = vmax.f32 %v2645, 0.0
      %v2800 = vmax.f32 %v2647, 0.0
      %v2801 = vmax.f32 %v2072, 0.0
      %v2802 = vmax.f32 %v2074, 0.0
      %v2803 = vmax.f32 %v2651, 0.0
      %v2804 = vmax.f32 %v2653, 0.0
      %v2805 = vmax.f32 %v2076, 0.0
      %v2806 = vmax.f32 %v2078, 0.0
      %v2807 = vmax.f32 %v2655, 0.0
      %v2808 = vmax.f32 %v2657, 0.0
      %v2809 = vmax.f32 %v2082, 0.0
      %v2810 = vmax.f32 %v2084, 0.0
      %v2811 = vmax.f32 %v2661, 0.0
      %v2812 = vmax.f32 %v2663, 0.0
      %v2813 = vmax.f32 %v2086, 0.0
      %v2814 = vmax.f32 %v2088, 0.0
      %v2815 = vmax.f32 %v2665, 0.0
      %v2816 = vmax.f32 %v2667, 0.0
      %v2817 = vmax.f32 %v2092, 0.0
      %v2818 = vmax.f32 %v2094, 0.0
      %v2819 = vmax.f32 %v2671, 0.0
      %v2820 = vmax.f32 %v2673, 0.0
      %v2821 = vmax.f32 %v2096, 0.0
      %v2822 = vmax.f32 %v2098, 0.0
      %v2823 = vmax.f32 %v2675, 0.0
      %v2824 = vmax.f32 %v2677, 0.0
      %v2825 = vmax.f32 %v2102, 0.0
      %v2826 = vmax.f32 %v2104, 0.0
      %v2827 = vmax.f32 %v2681, 0.0
      %v2828 = vmax.f32 %v2683, 0.0
      %v2829 = vmax.f32 %v2106, 0.0
      %v2830 = vmax.f32 %v2108, 0.0
      %v2831 = vmax.f32 %v2685, 0.0
      %v2832 = vmax.f32 %v2687, 0.0
      %v2833 = vmax.f32 %v2112, 0.0
      %v2834 = vmax.f32 %v2114, 0.0
      %v2835 = vmax.f32 %v2691, 0.0
      %v2836 = vmax.f32 %v2693, 0.0
      %v2837 = vmax.f32 %v2116, 0.0
      %v2838 = vmax.f32 %v2118, 0.0
      %v2839 = vmax.f32 %v2695, 0.0
      %v2840 = vmax.f32 %v2697, 0.0
      %v2841 = vmax.f32 %v2122, 0.0
      %v2842 = vmax.f32 %v2124, 0.0
      %v2843 = vmax.f32 %v2701, 0.0
      %v2844 = vmax.f32 %v2703, 0.0
      %v2845 = vmax.f32 %v2126, 0.0
      %v2846 = vmax.f32 %v2128, 0.0
      %v2847 = vmax.f32 %v2705, 0.0
      %v2848 = vmax.f32 %v2707, 0.0
      %v2849 = vmax.f32 %v2132, 0.0
      %v2850 = vmax.f32 %v2134, 0.0
      %v2851 = vmax.f32 %v2711, 0.0
      %v2852 = vmax.f32 %v2713, 0.0
      %v2853 = vmax.f32 %v2136, 0.0
      %v2854 = vmax.f32 %v2138, 0.0
      %v2855 = vmax.f32 %v2715, 0.0
      %v2856 = vmax.f32 %v2717, 0.0
      %v2857 = vmax.f32 %v2142, 0.0
      %v2858 = vmax.f32 %v2144, 0.0
      %v2859 = vmax.f32 %v2721, 0.0
      %v2860 = vmax.f32 %v2723, 0.0
      %v2861 = vmax.f32 %v2146, 0.0
      %v2862 = vmax.f32 %v2148, 0.0
      %v2863 = vmax.f32 %v2725, 0.0
      %v2864 = vmax.f32 %v2727, 0.0
      %v2865 = vmax.f32 %v2152, 0.0
      %v2866 = vmax.f32 %v2154, 0.0
      %v2867 = vmax.f32 %v2731, 0.0
      %v2868 = vmax.f32 %v2733, 0.0
      %v2869 = vmax.f32 %v2156, 0.0
      %v2870 = vmax.f32 %v2158, 0.0
      %v2871 = vmax.f32 %v2735, 0.0
      %v2872 = vmax.f32 %v2737, 0.0
      %v2873 = vmax.f32 %v2162, 0.0
      %v2874 = vmax.f32 %v2164, 0.0
      %v2875 = vmax.f32 %v2741, 0.0
      %v2876 = vmax.f32 %v2743, 0.0
      %v2877 = vmax.f32 %v2166, 0.0
      %v2878 = vmax.f32 %v2168, 0.0
      %v2879 = vmax.f32 %v2745, 0.0
      %v2880 = vmax.f32 %v2747, 0.0
      %v2881 = vmax.f32 %v2172, 0.0
      %v2882 = vmax.f32 %v2174, 0.0
      %v2883 = vmax.f32 %v2751, 0.0
      %v2884 = vmax.f32 %v2753, 0.0
      %v2885 = vmax.f32 %v2176, 0.0
      %v2886 = vmax.f32 %v2178, 0.0
      %v2887 = vmax.f32 %v2755, 0.0
      %v2888 = vmax.f32 %v2757, 0.0
      %v2889 = vmax.f32 %v2182, 0.0
      %v2890 = vmax.f32 %v2184, 0.0
      %v2891 = vmax.f32 %v2761, 0.0
      %v2892 = vmax.f32 %v2763, 0.0
      %v2893 = vmax.f32 %v2186, 0.0
      %v2894 = vmax.f32 %v2188, 0.0
      %v2895 = vmax.f32 %v2765, 0.0
      %v2896 = vmax.f32 %v2767, 0.0
      %2897 = vst [vmem:[%s177] sm:$0xff] %v2769
      %2898 = vst [vmem:[%s177 + $0x8] sm:$0xff] %v2770
      %2899 = vst [vmem:[%s177 + $0x10] sm:$0xff] %v2771
      %2900 = vst [vmem:[%s177 + $0x18] sm:$0xff] %v2772
      %2901 = vst [vmem:[%s177 + $0x20] sm:$0xff] %v2773
      %2902 = vst [vmem:[%s177 + $0x28] sm:$0xff] %v2774
      %2903 = vst [vmem:[%s177 + $0x30] sm:$0xff] %v2775
      %2904 = vst [vmem:[%s177 + $0x38] sm:$0xff] %v2776
      %2905 = vst [vmem:[%s177 + $0x40] sm:$0xff] %v2777
      %2906 = vst [vmem:[%s177 + $0x48] sm:$0xff] %v2778
      %2907 = vst [vmem:[%s177 + $0x50] sm:$0xff] %v2779
      %2908 = vst [vmem:[%s177 + $0x58] sm:$0xff] %v2780
      %2909 = vst [vmem:[%s177 + $0x60] sm:$0xff] %v2781
      %2910 = vst [vmem:[%s177 + $0x68] sm:$0xff] %v2782
      %2911 = vst [vmem:[%s177 + $0x70] sm:$0xff] %v2783
      %2912 = vst [vmem:[%s177 + $0x78] sm:$0xff] %v2784
      %2913 = vst [vmem:[%s177 + $0x80] sm:$0xff] %v2785
      %2914 = vst [vmem:[%s177 + $0x88] sm:$0xff] %v2786
      %2915 = vst [vmem:[%s177 + $0x90] sm:$0xff] %v2787
      %2916 = vst [vmem:[%s177 + $0x98] sm:$0xff] %v2788
      %2917 = vst [vmem:[%s177 + $0xa0] sm:$0xff] %v2789
      %2918 = vst [vmem:[%s177 + $0xa8] sm:$0xff] %v2790
      %2919 = vst [vmem:[%s177 + $0xb0] sm:$0xff] %v2791
      %2920 = vst [vmem:[%s177 + $0xb8] sm:$0xff] %v2792
      %2921 = vst [vmem:[%s177 + $0xc0] sm:$0xff] %v2793
      %2922 = vst [vmem:[%s177 + $0xc8] sm:$0xff] %v2794
      %2923 = vst [vmem:[%s177 + $0xd0] sm:$0xff] %v2795
      %2924 = vst [vmem:[%s177 + $0xd8] sm:$0xff] %v2796
      %2925 = vst [vmem:[%s177 + $0xe0] sm:$0xff] %v2797
      %2926 = vst [vmem:[%s177 + $0xe8] sm:$0xff] %v2798
      %2927 = vst [vmem:[%s177 + $0xf0] sm:$0xff] %v2799
      %2928 = vst [vmem:[%s177 + $0xf8] sm:$0xff] %v2800
      %2929 = vst [vmem:[%s177 + $0x100] sm:$0xff] %v2801
      %2930 = vst [vmem:[%s177 + $0x108] sm:$0xff] %v2802
      %2931 = vst [vmem:[%s177 + $0x110] sm:$0xff] %v2803
      %2932 = vst [vmem:[%s177 + $0x118] sm:$0xff] %v2804
      %2933 = vst [vmem:[%s177 + $0x120] sm:$0xff] %v2805
      %2934 = vst [vmem:[%s177 + $0x128] sm:$0xff] %v2806
      %2935 = vst [vmem:[%s177 + $0x130] sm:$0xff] %v2807
      %2936 = vst [vmem:[%s177 + $0x138] sm:$0xff] %v2808
      %2937 = vst [vmem:[%s177 + $0x140] sm:$0xff] %v2809
      %2938 = vst [vmem:[%s177 + $0x148] sm:$0xff] %v2810
      %2939 = vst [vmem:[%s177 + $0x150] sm:$0xff] %v2811
      %2940 = vst [vmem:[%s177 + $0x158] sm:$0xff] %v2812
      %2941 = vst [vmem:[%s177 + $0x160] sm:$0xff] %v2813
      %2942 = vst [vmem:[%s177 + $0x168] sm:$0xff] %v2814
      %2943 = vst [vmem:[%s177 + $0x170] sm:$0xff] %v2815
      %2944 = vst [vmem:[%s177 + $0x178] sm:$0xff] %v2816
      %2945 = vst [vmem:[%s177 + $0x180] sm:$0xff] %v2817
      %2946 = vst [vmem:[%s177 + $0x188] sm:$0xff] %v2818
      %2947 = vst [vmem:[%s177 + $0x190] sm:$0xff] %v2819
      %2948 = vst [vmem:[%s177 + $0x198] sm:$0xff] %v2820
      %2949 = vst [vmem:[%s177 + $0x1a0] sm:$0xff] %v2821
      %2950 = vst [vmem:[%s177 + $0x1a8] sm:$0xff] %v2822
      %2951 = vst [vmem:[%s177 + $0x1b0] sm:$0xff] %v2823
      %2952 = vst [vmem:[%s177 + $0x1b8] sm:$0xff] %v2824
      %2953 = vst [vmem:[%s177 + $0x1c0] sm:$0xff] %v2825
      %2954 = vst [vmem:[%s177 + $0x1c8] sm:$0xff] %v2826
      %2955 = vst [vmem:[%s177 + $0x1d0] sm:$0xff] %v2827
      %2956 = vst [vmem:[%s177 + $0x1d8] sm:$0xff] %v2828
      %2957 = vst [vmem:[%s177 + $0x1e0] sm:$0xff] %v2829
      %2958 = vst [vmem:[%s177 + $0x1e8] sm:$0xff] %v2830
      %2959 = vst [vmem:[%s177 + $0x1f0] sm:$0xff] %v2831
      %2960 = vst [vmem:[%s177 + $0x1f8] sm:$0xff] %v2832
      %2961 = vst [vmem:[%s177 + $0x200] sm:$0xff] %v2833
      %2962 = vst [vmem:[%s177 + $0x208] sm:$0xff] %v2834
      %2963 = vst [vmem:[%s177 + $0x210] sm:$0xff] %v2835
      %2964 = vst [vmem:[%s177 + $0x218] sm:$0xff] %v2836
      %2965 = vst [vmem:[%s177 + $0x220] sm:$0xff] %v2837
      %2966 = vst [vmem:[%s177 + $0x228] sm:$0xff] %v2838
      %2967 = vst [vmem:[%s177 + $0x230] sm:$0xff] %v2839
      %2968 = vst [vmem:[%s177 + $0x238] sm:$0xff] %v2840
      %2969 = vst [vmem:[%s177 + $0x240] sm:$0xff] %v2841
      %2970 = vst [vmem:[%s177 + $0x248] sm:$0xff] %v2842
      %2971 = vst [vmem:[%s177 + $0x250] sm:$0xff] %v2843
      %2972 = vst [vmem:[%s177 + $0x258] sm:$0xff] %v2844
      %2973 = vst [vmem:[%s177 + $0x260] sm:$0xff] %v2845
      %2974 = vst [vmem:[%s177 + $0x268] sm:$0xff] %v2846
      %2975 = vst [vmem:[%s177 + $0x270] sm:$0xff] %v2847
      %2976 = vst [vmem:[%s177 + $0x278] sm:$0xff] %v2848
      %2977 = vst [vmem:[%s177 + $0x280] sm:$0xff] %v2849
      %2978 = vst [vmem:[%s177 + $0x288] sm:$0xff] %v2850
      %2979 = vst [vmem:[%s177 + $0x290] sm:$0xff] %v2851
      %2980 = vst [vmem:[%s177 + $0x298] sm:$0xff] %v2852
      %2981 = vst [vmem:[%s177 + $0x2a0] sm:$0xff] %v2853
      %2982 = vst [vmem:[%s177 + $0x2a8] sm:$0xff] %v2854
      %2983 = vst [vmem:[%s177 + $0x2b0] sm:$0xff] %v2855
      %2984 = vst [vmem:[%s177 + $0x2b8] sm:$0xff] %v2856
      %2985 = vst [vmem:[%s177 + $0x2c0] sm:$0xff] %v2857
      %2986 = vst [vmem:[%s177 + $0x2c8] sm:$0xff] %v2858
      %2987 = vst [vmem:[%s177 + $0x2d0] sm:$0xff] %v2859
      %2988 = vst [vmem:[%s177 + $0x2d8] sm:$0xff] %v2860
      %2989 = vst [vmem:[%s177 + $0x2e0] sm:$0xff] %v2861
      %2990 = vst [vmem:[%s177 + $0x2e8] sm:$0xff] %v2862
      %2991 = vst [vmem:[%s177 + $0x2f0] sm:$0xff] %v2863
      %2992 = vst [vmem:[%s177 + $0x2f8] sm:$0xff] %v2864
      %2993 = vst [vmem:[%s177 + $0x300] sm:$0xff] %v2865
      %2994 = vst [vmem:[%s177 + $0x308] sm:$0xff] %v2866
      %2995 = vst [vmem:[%s177 + $0x310] sm:$0xff] %v2867
      %2996 = vst [vmem:[%s177 + $0x318] sm:$0xff] %v2868
      %2997 = vst [vmem:[%s177 + $0x320] sm:$0xff] %v2869
      %2998 = vst [vmem:[%s177 + $0x328] sm:$0xff] %v2870
      %2999 = vst [vmem:[%s177 + $0x330] sm:$0xff] %v2871
      %3000 = vst [vmem:[%s177 + $0x338] sm:$0xff] %v2872
      %3001 = vst [vmem:[%s177 + $0x340] sm:$0xff] %v2873
      %3002 = vst [vmem:[%s177 + $0x348] sm:$0xff] %v2874
      %3003 = vst [vmem:[%s177 + $0x350] sm:$0xff] %v2875
      %3004 = vst [vmem:[%s177 + $0x358] sm:$0xff] %v2876
      %3005 = vst [vmem:[%s177 + $0x360] sm:$0xff] %v2877
      %3006 = vst [vmem:[%s177 + $0x368] sm:$0xff] %v2878
      %3007 = vst [vmem:[%s177 + $0x370] sm:$0xff] %v2879
      %3008 = vst [vmem:[%s177 + $0x378] sm:$0xff] %v2880
      %3009 = vst [vmem:[%s177 + $0x380] sm:$0xff] %v2881
      %3010 = vst [vmem:[%s177 + $0x388] sm:$0xff] %v2882
      %3011 = vst [vmem:[%s177 + $0x390] sm:$0xff] %v2883
      %3012 = vst [vmem:[%s177 + $0x398] sm:$0xff] %v2884
      %3013 = vst [vmem:[%s177 + $0x3a0] sm:$0xff] %v2885
      %3014 = vst [vmem:[%s177 + $0x3a8] sm:$0xff] %v2886
      %3015 = vst [vmem:[%s177 + $0x3b0] sm:$0xff] %v2887
      %3016 = vst [vmem:[%s177 + $0x3b8] sm:$0xff] %v2888
      %3017 = vst [vmem:[%s177 + $0x3c0] sm:$0xff] %v2889
      %3018 = vst [vmem:[%s177 + $0x3c8] sm:$0xff] %v2890
      %3019 = vst [vmem:[%s177 + $0x3d0] sm:$0xff] %v2891
      %3020 = vst [vmem:[%s177 + $0x3d8] sm:$0xff] %v2892
      %3021 = vst [vmem:[%s177 + $0x3e0] sm:$0xff] %v2893
      %3022 = vst [vmem:[%s177 + $0x3e8] sm:$0xff] %v2894
      %3023 = vst [vmem:[%s177 + $0x3f0] sm:$0xff] %v2895
      %3024 = vst [vmem:[%s177 + $0x3f8] sm:$0xff] %v2896
      %s3025 = smul.u32 32, %s14
      %p3026 = scmp.lt.s32.totalorder %s3025, 63
      %s3027 = scalar_select %p3026, %s3025, 63
      %s3028 = smul.addr %s3027, 4
      %s3029 = smul.addr %s3028, 8
      %s3030 = scalar_lea.vmem %s3, %s3029
      // Predicated region
      $region33: #{gcm_forward.3} parent=31 // pred_check
        %p3031 = pneg %p100
      $region34: #{gcm_forward.3} parent=31 // pred_check_branch
        %3033 = sbr.rel (%p3031) target = $region36
      $region35: #{gcm_forward.3} parent=31 // pred_region
        %s3034 = smul.u32 32, %s14
      $region36: #{gcm_forward.3} parent=31 // pred_fallthru
        _
    $region32: #{gcm_forward.3} parent=5 // pred_fallthru
      _
    %p3035 = scmp.le.s32.totalorder 2, %s9
    // Predicated region
    $region37: #{gcm_forward.3} parent=5 // pred_check
      %p3036 = pneg %p3035
    $region38: #{gcm_forward.3} parent=5 // pred_check_branch
      %3038 = sbr.rel (%p3036) target = $region40
    $region39: #{gcm_forward.3} parent=5 // pred_region
      %s3039 = ssub.s32 %s9, 2
      // Predicated region
      $region41: #{gcm_forward.3} parent=39 // pred_check
        %p3040 = pneg %p106
      $region42: #{gcm_forward.3} parent=39 // pred_check_branch
        %3042 = sbr.rel (%p3040) target = $region44
      $region43: #{gcm_forward.3} parent=39 // pred_region
        %s3043 = smul.u32 32, %s15
        %p3044 = scmp.lt.s32.totalorder %s3043, 63
        %s3045 = scalar_select %p3044, %s3043, 63
        %s3046 = smul.addr %s3045, 4
        %s3047 = smul.addr %s3046, 8
        %s3048 = scalar_lea.vmem %s3, %s3047
      $region44: #{gcm_forward.3} parent=39 // pred_fallthru
        _
    $region40: #{gcm_forward.3} parent=5 // pred_fallthru
      _
  $region6: #{gcm_forward.3} parent=0 // loop_footer
    %s13 = sadd.s32 1, %s9
  $region7: #{gcm_forward.3} parent=0 // loop_footer_branch
    %8 = sbr.rel target = $region3
  $region8: #{gcm_forward.3} parent=0 // loop_exit
    _

</llo_original>
